<compile_context>
chip_gen: v5e
topology: v5e:2x2
jax: 0.10.0
libtpu: 0.0.40
codegen_flags: <defaults>
</compile_context>

<pallas_src>
import numpy as np

import jax
import jax.numpy as jnp
from jax.experimental import pallas as pl
from jax.experimental.pallas import tpu as pltpu

_BB = 16                 # images per grid step
_BF = jnp.bfloat16       # MXU operand dtype (f32 accumulation)


# ----------------------------------------------------------------------------
# Fused Pallas kernel: whole forward pass for one block of _BB images.
#   x_ref : (28*_BB, 28)  f32, in-block row = (r*7 + u)*_BB + b,  image row = 4u+r
#   o_ref : (_BB, 128)    f32, logits in lanes [0, 10)
# ----------------------------------------------------------------------------
def _convnet_kernel(x_ref, t1_ref, b1_ref, t2_ref, b2_ref,
                    wf1_ref, bf1_ref, wf2_ref, bf2_ref, wf3_ref, bf3_ref,
                    o_ref):
    def mm(a, b):
        return jnp.dot(a, b, preferred_element_type=jnp.float32)

    xb = x_ref[...].astype(_BF)                      # (28*_BB, 28)

    # ---------------- conv1 (1->6, 5x5) + ReLU + 2x2 max-pool ----------------
    # conv1 output row i = 4u + g.  Compute the four residue groups g
    # separately so the row half of the pool is an elementwise max.
    b1v = b1_ref[...]
    grp = []
    for g in range(4):
        acc = None
        for kh in range(5):
            m = g + kh                               # needed image row = 4u + m
            start = ((m % 4) * 7 + m // 4) * _BB     # contiguous, _BB-aligned
            d = mm(xb[start:start + 6 * _BB, :], t1_ref[kh])   # (6*_BB, 144)
            acc = d if acc is None else acc + d
        grp.append(jnp.maximum(acc + b1v, 0.0))
    pA = jnp.maximum(grp[0], grp[1])                 # pooled rows t = 2u
    pB = jnp.maximum(grp[2], grp[3])                 # pooled rows t = 2u + 1
    # conv1 lanes are parity-ordered (j%2)*72 + (j//2)*6 + co, so the column
    # half of the pool is a static lane-slice max; result lanes = s*6 + co.
    p1A = jnp.maximum(pA[:, :72], pA[:, 72:]).astype(_BF)      # (6*_BB, 72)
    p1B = jnp.maximum(pB[:, :72], pB[:, 72:]).astype(_BF)

    # ---------------- conv2 (6->16, 5x5) + ReLU + 2x2 max-pool ---------------
    b2v = b2_ref[...]
    grp2 = []
    for h in range(2):                               # conv2 output row i2 = 2v + h
        acc = None
        for kh in range(5):
            m = h + kh                               # needed pooled row t = 2v + m
            src = p1A if m % 2 == 0 else p1B
            start = (m // 2) * _BB
            d = mm(src[start:start + 4 * _BB, :], t2_ref[kh])  # (4*_BB, 128)
            acc = d if acc is None else acc + d
        grp2.append(jnp.maximum(acc + b2v, 0.0))
    rp = jnp.maximum(grp2[0], grp2[1])               # (4*_BB, 128), rows = (v, b)
    # conv2 lanes are parity-ordered (j2%2)*64 + (j2//2)*16 + co2.
    p2 = jnp.maximum(rp[:, :64], rp[:, 64:]).astype(_BF)       # (4*_BB, 64)

    # ---------------- fc1 / fc2 / fc3 ----------------------------------------
    # K-concatenate the four pooled rows -> (_BB, 256): single K=256 MXU matmul
    # (torch NCHW flatten permutation folded into WF1; fc lanes zero-padded).
    hcat = jnp.concatenate([p2[v * _BB:(v + 1) * _BB, :] for v in range(4)],
                           axis=1)                   # (_BB, 256)
    h = jnp.maximum(mm(hcat, wf1_ref[...]) + bf1_ref[...], 0.0)
    h = jnp.maximum(mm(h.astype(_BF), wf2_ref[...]) + bf2_ref[...], 0.0)
    o_ref[...] = (mm(h.astype(_BF), wf3_ref[...]) + bf3_ref[...]).astype(o_ref.dtype)


# ----------------------------------------------------------------------------
# Glue: fold the torch conv/fc weights into banded (Toeplitz) / padded slabs.
# Conv output lanes are parity-ordered so the kernel's lane pooling is a slice.
# ----------------------------------------------------------------------------
def _build_weight_operands(params):
    f32 = jnp.float32
    w1 = params["conv1_w"].astype(f32)          # (6, 1, 5, 5)
    b1 = params["conv1_b"].astype(f32)
    w2 = params["conv2_w"].astype(f32)          # (16, 6, 5, 5)
    b2 = params["conv2_b"].astype(f32)

    # conv1 banded weights: T1[kh][q, lane(j,co)] = w1[co,0,kh,q-j], 0<=q-j<5,
    # lane(j,co) = (j%2)*72 + (j//2)*6 + co.
    q = np.arange(28)[:, None]; j = np.arange(24)[None, :]
    d = q - j; mask = (d >= 0) & (d < 5); dc = np.clip(d, 0, 4)
    w1k = jnp.transpose(w1[:, 0], (1, 2, 0))                     # (kh, kw, co)
    T1 = jnp.where(jnp.asarray(mask)[None, :, :, None], w1k[:, dc, :], 0.0)
    jperm = np.concatenate([np.arange(0, 24, 2), np.arange(1, 24, 2)])
    T1 = T1[:, :, jperm, :].reshape(5, 28, 144).astype(_BF)
    B1 = jnp.tile(b1, 24)[None, :]                               # (1, 144) f32

    # conv2 banded weights: T2[kh][s*6+c, lane(j2,co)] = w2[co,c,kh,s-j2],
    # lane(j2,co) = (j2%2)*64 + (j2//2)*16 + co.
    s = np.arange(12)[:, None]; j2 = np.arange(8)[None, :]
    d = s - j2; mask = (d >= 0) & (d < 5); dc = np.clip(d, 0, 4)
    w2k = jnp.transpose(w2, (2, 3, 1, 0))                        # (kh, kw, c, co)
    T2 = jnp.where(jnp.asarray(mask)[None, :, :, None, None], w2k[:, dc, :, :], 0.0)
    T2 = jnp.transpose(T2, (0, 1, 3, 2, 4))                      # (kh, s, c, j2, co)
    j2perm = np.concatenate([np.arange(0, 8, 2), np.arange(1, 8, 2)])
    T2 = T2[:, :, :, j2perm, :].reshape(5, 72, 128).astype(_BF)
    B2 = jnp.tile(b2, 8)[None, :]                                # (1, 128) f32

    # fc1 with the torch NCHW flatten (f = co*16 + v*4 + s2) folded in, and the
    # four pooled rows v K-concatenated: WF1[(v*64)+(s2*16+co), n] = fc1_w[n, f].
    fw1 = params["fc1_w"].astype(f32)                            # (120, 256)
    l = np.arange(64); s2 = l // 16; co = l % 16
    blocks = []
    for v in range(4):
        f = co * 16 + v * 4 + s2
        blocks.append(jnp.pad(jnp.transpose(fw1[:, f]), ((0, 0), (0, 8))))
    WF1 = jnp.concatenate(blocks, axis=0).astype(_BF)            # (256, 128)
    BF1 = jnp.pad(params["fc1_b"].astype(f32), (0, 8))[None, :]

    WF2 = jnp.pad(jnp.transpose(params["fc2_w"].astype(f32)),
                  ((0, 8), (0, 44))).astype(_BF)                 # (128, 128)
    BF2 = jnp.pad(params["fc2_b"].astype(f32), (0, 44))[None, :]
    WF3 = jnp.pad(jnp.transpose(params["fc3_w"].astype(f32)),
                  ((0, 44), (0, 118))).astype(_BF)               # (128, 128)
    BF3 = jnp.pad(params["fc3_b"].astype(f32), (0, 118))[None, :]
    return T1, B1, T2, B2, WF1, BF1, WF2, BF2, WF3, BF3


def _const_spec(a):
    nd = np.ndim(a)
    return pl.BlockSpec(tuple(np.shape(a)), lambda g, _n=nd: (0,) * _n)


# ----------------------------------------------------------------------------
# ConvNet forward (single fused pallas_call, grid over batch blocks)
# ----------------------------------------------------------------------------
@jax.jit
def convnet_forward(x, params):
    x = x.reshape(-1, 28, 28).astype(jnp.float32)
    B = x.shape[0]
    Bp = ((B + _BB - 1) // _BB) * _BB
    if Bp != B:
        x = jnp.pad(x, ((0, Bp - B), (0, 0), (0, 0)))
    nb = Bp // _BB
    # spatial-major / row-residue-major layout: in-block row = (r*7+u)*_BB + b,
    # original image row = 4u + r.  (Pure XLA transpose in glue, outside kernel.)
    X = (x.reshape(nb, _BB, 7, 4, 28)
          .transpose(0, 3, 2, 1, 4)
          .reshape(nb * 28 * _BB, 28))

    ops = _build_weight_operands(params)

    out = pl.pallas_call(
        _convnet_kernel,
        out_shape=jax.ShapeDtypeStruct((Bp, 128), jnp.float32),
        grid=(nb,),
        in_specs=[pl.BlockSpec((28 * _BB, 28), lambda g: (g, 0))]
                 + [_const_spec(a) for a in ops],
        out_specs=pl.BlockSpec((_BB, 128), lambda g: (g, 0)),
        compiler_params=pltpu.CompilerParams(
            dimension_semantics=("parallel",)),
    )(X, *ops)
    return out[:B, :10]


# ----------------------------------------------------------------------------
# Plain-XLA reference (torch semantics) and parameter init
# ----------------------------------------------------------------------------
def convnet_reference(x, params):
    hi = jax.lax.Precision.HIGHEST
    dn = ("NCHW", "OIHW", "NCHW")
    x = x.reshape(-1, 1, 28, 28).astype(jnp.float32)
    y = jax.lax.conv_general_dilated(x, params["conv1_w"], (1, 1), "VALID",
                                     dimension_numbers=dn, precision=hi)
    y = jax.nn.relu(y + params["conv1_b"][None, :, None, None])
    y = jax.lax.reduce_window(y, -jnp.inf, jax.lax.max,
                              (1, 1, 2, 2), (1, 1, 2, 2), "VALID")
    y = jax.lax.conv_general_dilated(y, params["conv2_w"], (1, 1), "VALID",
                                     dimension_numbers=dn, precision=hi)
    y = jax.nn.relu(y + params["conv2_b"][None, :, None, None])
    y = jax.lax.reduce_window(y, -jnp.inf, jax.lax.max,
                              (1, 1, 2, 2), (1, 1, 2, 2), "VALID")
    y = y.reshape(y.shape[0], 16 * 4 * 4)
    y = jax.nn.relu(jnp.dot(y, params["fc1_w"].T, precision=hi) + params["fc1_b"])
    y = jax.nn.relu(jnp.dot(y, params["fc2_w"].T, precision=hi) + params["fc2_b"])
    return jnp.dot(y, params["fc3_w"].T, precision=hi) + params["fc3_b"]


def init_params(key):
    ks = jax.random.split(key, 10)
    def w(k, shape, fan_in):
        return (jax.random.normal(k, shape, jnp.float32) / jnp.sqrt(fan_in)).astype(jnp.float32)
    return {
        "conv1_w": w(ks[0], (6, 1, 5, 5), 25.0),
        "conv1_b": w(ks[1], (6,), 25.0),
        "conv2_w": w(ks[2], (16, 6, 5, 5), 150.0),
        "conv2_b": w(ks[3], (16,), 150.0),
        "fc1_w":   w(ks[4], (120, 256), 256.0),
        "fc1_b":   w(ks[5], (120,), 256.0),
        "fc2_w":   w(ks[6], (84, 120), 120.0),
        "fc2_b":   w(ks[7], (84,), 120.0),
        "fc3_w":   w(ks[8], (10, 84), 84.0),
        "fc3_b":   w(ks[9], (10,), 84.0),
    }


if __name__ == "__main__":
    key = jax.random.PRNGKey(0)
    k_x, k_p = jax.random.split(key)
    x = jax.random.normal(k_x, (2, 1, 28, 28), jnp.float32)   # batch=2, MNIST shape
    params = init_params(k_p)

    out = convnet_forward(x, params)
    out = jax.block_until_ready(out)
    assert out.shape == (2, 10) and out.dtype == jnp.float32

    ref = convnet_reference(x, params)
    err = float(jnp.max(jnp.abs(out - ref)))
    # bf16 MXU operands with f32 accumulation => ~1e-2-level absolute error
    # vs the full-f32 XLA reference (logits are O(1) at this init).
    assert err < 5e-2, f"mismatch vs XLA reference, max abs err = {err}"

    print("KERNEL_OK")
</pallas_src>

<mosaic_0001>
module attributes {stable_mosaic.version = 11 : i64} {
  func.func @_convnet_kernel(%arg0: i32, %arg1: memref<448x28xf32, #tpu.memory_space<vmem>>, %arg2: memref<5x28x144xbf16, #tpu.memory_space<vmem>>, %arg3: memref<1x144xf32, #tpu.memory_space<vmem>>, %arg4: memref<5x72x128xbf16, #tpu.memory_space<vmem>>, %arg5: memref<1x128xf32, #tpu.memory_space<vmem>>, %arg6: memref<256x128xbf16, #tpu.memory_space<vmem>>, %arg7: memref<1x128xf32, #tpu.memory_space<vmem>>, %arg8: memref<128x128xbf16, #tpu.memory_space<vmem>>, %arg9: memref<1x128xf32, #tpu.memory_space<vmem>>, %arg10: memref<128x128xbf16, #tpu.memory_space<vmem>>, %arg11: memref<1x128xf32, #tpu.memory_space<vmem>>, %arg12: memref<16x128xf32, #tpu.memory_space<vmem>>) attributes {dimension_semantics = [#tpu.dimension_semantics<parallel>], iteration_bounds = array<i64: 1>, scalar_prefetch = 0 : i64, scratch_operands = 0 : i64, tpu.core_type = #tpu.core_type<tc>, window_params = [{transform_indices = @transform_0, window_bounds = array<i64: 448, 28>}, {pipeline_mode = #tpu.pipeline_mode<synchronous>, transform_indices = @transform_1, window_bounds = array<i64: 5, 28, 144>}, {pipeline_mode = #tpu.pipeline_mode<synchronous>, transform_indices = @transform_2, window_bounds = array<i64: 1, 144>}, {pipeline_mode = #tpu.pipeline_mode<synchronous>, transform_indices = @transform_3, window_bounds = array<i64: 5, 72, 128>}, {pipeline_mode = #tpu.pipeline_mode<synchronous>, transform_indices = @transform_4, window_bounds = array<i64: 1, 128>}, {pipeline_mode = #tpu.pipeline_mode<synchronous>, transform_indices = @transform_5, window_bounds = array<i64: 256, 128>}, {pipeline_mode = #tpu.pipeline_mode<synchronous>, transform_indices = @transform_6, window_bounds = array<i64: 1, 128>}, {pipeline_mode = #tpu.pipeline_mode<synchronous>, transform_indices = @transform_7, window_bounds = array<i64: 128, 128>}, {pipeline_mode = #tpu.pipeline_mode<synchronous>, transform_indices = @transform_8, window_bounds = array<i64: 1, 128>}, {pipeline_mode = #tpu.pipeline_mode<synchronous>, transform_indices = @transform_9, window_bounds = array<i64: 128, 128>}, {pipeline_mode = #tpu.pipeline_mode<synchronous>, transform_indices = @transform_10, window_bounds = array<i64: 1, 128>}, {transform_indices = @transform_11, window_bounds = array<i64: 16, 128>}]} {
    %c0 = arith.constant 0 : index
    %c0_0 = arith.constant 0 : index
    %0 = vector.load %arg1[%c0, %c0_0] : memref<448x28xf32, #tpu.memory_space<vmem>>, vector<448x28xf32>
    %1 = arith.truncf %0 : vector<448x28xf32> to vector<448x28xbf16>
    %c0_1 = arith.constant 0 : index
    %c0_2 = arith.constant 0 : index
    %2 = vector.load %arg3[%c0_1, %c0_2] : memref<1x144xf32, #tpu.memory_space<vmem>>, vector<1x144xf32>
    %3 = vector.extract_strided_slice %1 {offsets = [0, 0], sizes = [96, 28], strides = [1, 1]} : vector<448x28xbf16> to vector<96x28xbf16>
    %c0_3 = arith.constant 0 : index
    %c0_4 = arith.constant 0 : index
    %c0_5 = arith.constant 0 : index
    %4 = vector.load %arg2[%c0_3, %c0_4, %c0_5] : memref<5x28x144xbf16, #tpu.memory_space<vmem>>, vector<1x28x144xbf16>
    %5 = vector.shape_cast %4 : vector<1x28x144xbf16> to vector<28x144xbf16>
    %cst = arith.constant dense<0.000000e+00> : vector<96x144xf32>
    %6 = tpu.matmul %3, %5, %cst {dimension_numbers = #tpu.dot_dimension_numbers<[1], [0], [0], [1], [0, 0, 1, 1], [], []>} : vector<96x28xbf16>, vector<28x144xbf16>, vector<96x144xf32> -> vector<96x144xf32>
    %7 = vector.extract_strided_slice %1 {offsets = [112, 0], sizes = [96, 28], strides = [1, 1]} : vector<448x28xbf16> to vector<96x28xbf16>
    %c1 = arith.constant 1 : index
    %c0_6 = arith.constant 0 : index
    %c0_7 = arith.constant 0 : index
    %8 = vector.load %arg2[%c1, %c0_6, %c0_7] : memref<5x28x144xbf16, #tpu.memory_space<vmem>>, vector<1x28x144xbf16>
    %9 = vector.shape_cast %8 : vector<1x28x144xbf16> to vector<28x144xbf16>
    %cst_8 = arith.constant dense<0.000000e+00> : vector<96x144xf32>
    %10 = tpu.matmul %7, %9, %cst_8 {dimension_numbers = #tpu.dot_dimension_numbers<[1], [0], [0], [1], [0, 0, 1, 1], [], []>} : vector<96x28xbf16>, vector<28x144xbf16>, vector<96x144xf32> -> vector<96x144xf32>
    %11 = arith.addf %6, %10 : vector<96x144xf32>
    %12 = vector.extract_strided_slice %1 {offsets = [224, 0], sizes = [96, 28], strides = [1, 1]} : vector<448x28xbf16> to vector<96x28xbf16>
    %c2 = arith.constant 2 : index
    %c0_9 = arith.constant 0 : index
    %c0_10 = arith.constant 0 : index
    %13 = vector.load %arg2[%c2, %c0_9, %c0_10] : memref<5x28x144xbf16, #tpu.memory_space<vmem>>, vector<1x28x144xbf16>
    %14 = vector.shape_cast %13 : vector<1x28x144xbf16> to vector<28x144xbf16>
    %cst_11 = arith.constant dense<0.000000e+00> : vector<96x144xf32>
    %15 = tpu.matmul %12, %14, %cst_11 {dimension_numbers = #tpu.dot_dimension_numbers<[1], [0], [0], [1], [0, 0, 1, 1], [], []>} : vector<96x28xbf16>, vector<28x144xbf16>, vector<96x144xf32> -> vector<96x144xf32>
    %16 = arith.addf %11, %15 : vector<96x144xf32>
    %17 = vector.extract_strided_slice %1 {offsets = [336, 0], sizes = [96, 28], strides = [1, 1]} : vector<448x28xbf16> to vector<96x28xbf16>
    %c3 = arith.constant 3 : index
    %c0_12 = arith.constant 0 : index
    %c0_13 = arith.constant 0 : index
    %18 = vector.load %arg2[%c3, %c0_12, %c0_13] : memref<5x28x144xbf16, #tpu.memory_space<vmem>>, vector<1x28x144xbf16>
    %19 = vector.shape_cast %18 : vector<1x28x144xbf16> to vector<28x144xbf16>
    %cst_14 = arith.constant dense<0.000000e+00> : vector<96x144xf32>
    %20 = tpu.matmul %17, %19, %cst_14 {dimension_numbers = #tpu.dot_dimension_numbers<[1], [0], [0], [1], [0, 0, 1, 1], [], []>} : vector<96x28xbf16>, vector<28x144xbf16>, vector<96x144xf32> -> vector<96x144xf32>
    %21 = arith.addf %16, %20 : vector<96x144xf32>
    %22 = vector.extract_strided_slice %1 {offsets = [16, 0], sizes = [96, 28], strides = [1, 1]} : vector<448x28xbf16> to vector<96x28xbf16>
    %c4 = arith.constant 4 : index
    %c0_15 = arith.constant 0 : index
    %c0_16 = arith.constant 0 : index
    %23 = vector.load %arg2[%c4, %c0_15, %c0_16] : memref<5x28x144xbf16, #tpu.memory_space<vmem>>, vector<1x28x144xbf16>
    %24 = vector.shape_cast %23 : vector<1x28x144xbf16> to vector<28x144xbf16>
    %cst_17 = arith.constant dense<0.000000e+00> : vector<96x144xf32>
    %25 = tpu.matmul %22, %24, %cst_17 {dimension_numbers = #tpu.dot_dimension_numbers<[1], [0], [0], [1], [0, 0, 1, 1], [], []>} : vector<96x28xbf16>, vector<28x144xbf16>, vector<96x144xf32> -> vector<96x144xf32>
    %26 = arith.addf %21, %25 : vector<96x144xf32>
    %27 = vector.broadcast %2 : vector<1x144xf32> to vector<96x144xf32>
    %28 = arith.addf %26, %27 : vector<96x144xf32>
    %cst_18 = arith.constant 0.000000e+00 : f32
    %29 = vector.broadcast %cst_18 : f32 to vector<96x144xf32>
    %30 = arith.maximumf %28, %29 : vector<96x144xf32>
    %31 = vector.extract_strided_slice %1 {offsets = [112, 0], sizes = [96, 28], strides = [1, 1]} : vector<448x28xbf16> to vector<96x28xbf16>
    %c0_19 = arith.constant 0 : index
    %c0_20 = arith.constant 0 : index
    %c0_21 = arith.constant 0 : index
    %32 = vector.load %arg2[%c0_19, %c0_20, %c0_21] : memref<5x28x144xbf16, #tpu.memory_space<vmem>>, vector<1x28x144xbf16>
    %33 = vector.shape_cast %32 : vector<1x28x144xbf16> to vector<28x144xbf16>
    %cst_22 = arith.constant dense<0.000000e+00> : vector<96x144xf32>
    %34 = tpu.matmul %31, %33, %cst_22 {dimension_numbers = #tpu.dot_dimension_numbers<[1], [0], [0], [1], [0, 0, 1, 1], [], []>} : vector<96x28xbf16>, vector<28x144xbf16>, vector<96x144xf32> -> vector<96x144xf32>
    %35 = vector.extract_strided_slice %1 {offsets = [224, 0], sizes = [96, 28], strides = [1, 1]} : vector<448x28xbf16> to vector<96x28xbf16>
    %c1_23 = arith.constant 1 : index
    %c0_24 = arith.constant 0 : index
    %c0_25 = arith.constant 0 : index
    %36 = vector.load %arg2[%c1_23, %c0_24, %c0_25] : memref<5x28x144xbf16, #tpu.memory_space<vmem>>, vector<1x28x144xbf16>
    %37 = vector.shape_cast %36 : vector<1x28x144xbf16> to vector<28x144xbf16>
    %cst_26 = arith.constant dense<0.000000e+00> : vector<96x144xf32>
    %38 = tpu.matmul %35, %37, %cst_26 {dimension_numbers = #tpu.dot_dimension_numbers<[1], [0], [0], [1], [0, 0, 1, 1], [], []>} : vector<96x28xbf16>, vector<28x144xbf16>, vector<96x144xf32> -> vector<96x144xf32>
    %39 = arith.addf %34, %38 : vector<96x144xf32>
    %40 = vector.extract_strided_slice %1 {offsets = [336, 0], sizes = [96, 28], strides = [1, 1]} : vector<448x28xbf16> to vector<96x28xbf16>
    %c2_27 = arith.constant 2 : index
    %c0_28 = arith.constant 0 : index
    %c0_29 = arith.constant 0 : index
    %41 = vector.load %arg2[%c2_27, %c0_28, %c0_29] : memref<5x28x144xbf16, #tpu.memory_space<vmem>>, vector<1x28x144xbf16>
    %42 = vector.shape_cast %41 : vector<1x28x144xbf16> to vector<28x144xbf16>
    %cst_30 = arith.constant dense<0.000000e+00> : vector<96x144xf32>
    %43 = tpu.matmul %40, %42, %cst_30 {dimension_numbers = #tpu.dot_dimension_numbers<[1], [0], [0], [1], [0, 0, 1, 1], [], []>} : vector<96x28xbf16>, vector<28x144xbf16>, vector<96x144xf32> -> vector<96x144xf32>
    %44 = arith.addf %39, %43 : vector<96x144xf32>
    %45 = vector.extract_strided_slice %1 {offsets = [16, 0], sizes = [96, 28], strides = [1, 1]} : vector<448x28xbf16> to vector<96x28xbf16>
    %c3_31 = arith.constant 3 : index
    %c0_32 = arith.constant 0 : index
    %c0_33 = arith.constant 0 : index
    %46 = vector.load %arg2[%c3_31, %c0_32, %c0_33] : memref<5x28x144xbf16, #tpu.memory_space<vmem>>, vector<1x28x144xbf16>
    %47 = vector.shape_cast %46 : vector<1x28x144xbf16> to vector<28x144xbf16>
    %cst_34 = arith.constant dense<0.000000e+00> : vector<96x144xf32>
    %48 = tpu.matmul %45, %47, %cst_34 {dimension_numbers = #tpu.dot_dimension_numbers<[1], [0], [0], [1], [0, 0, 1, 1], [], []>} : vector<96x28xbf16>, vector<28x144xbf16>, vector<96x144xf32> -> vector<96x144xf32>
    %49 = arith.addf %44, %48 : vector<96x144xf32>
    %50 = vector.extract_strided_slice %1 {offsets = [128, 0], sizes = [96, 28], strides = [1, 1]} : vector<448x28xbf16> to vector<96x28xbf16>
    %c4_35 = arith.constant 4 : index
    %c0_36 = arith.constant 0 : index
    %c0_37 = arith.constant 0 : index
    %51 = vector.load %arg2[%c4_35, %c0_36, %c0_37] : memref<5x28x144xbf16, #tpu.memory_space<vmem>>, vector<1x28x144xbf16>
    %52 = vector.shape_cast %51 : vector<1x28x144xbf16> to vector<28x144xbf16>
    %cst_38 = arith.constant dense<0.000000e+00> : vector<96x144xf32>
    %53 = tpu.matmul %50, %52, %cst_38 {dimension_numbers = #tpu.dot_dimension_numbers<[1], [0], [0], [1], [0, 0, 1, 1], [], []>} : vector<96x28xbf16>, vector<28x144xbf16>, vector<96x144xf32> -> vector<96x144xf32>
    %54 = arith.addf %49, %53 : vector<96x144xf32>
    %55 = vector.broadcast %2 : vector<1x144xf32> to vector<96x144xf32>
    %56 = arith.addf %54, %55 : vector<96x144xf32>
    %cst_39 = arith.constant 0.000000e+00 : f32
    %57 = vector.broadcast %cst_39 : f32 to vector<96x144xf32>
    %58 = arith.maximumf %56, %57 : vector<96x144xf32>
    %59 = vector.extract_strided_slice %1 {offsets = [224, 0], sizes = [96, 28], strides = [1, 1]} : vector<448x28xbf16> to vector<96x28xbf16>
    %c0_40 = arith.constant 0 : index
    %c0_41 = arith.constant 0 : index
    %c0_42 = arith.constant 0 : index
    %60 = vector.load %arg2[%c0_40, %c0_41, %c0_42] : memref<5x28x144xbf16, #tpu.memory_space<vmem>>, vector<1x28x144xbf16>
    %61 = vector.shape_cast %60 : vector<1x28x144xbf16> to vector<28x144xbf16>
    %cst_43 = arith.constant dense<0.000000e+00> : vector<96x144xf32>
    %62 = tpu.matmul %59, %61, %cst_43 {dimension_numbers = #tpu.dot_dimension_numbers<[1], [0], [0], [1], [0, 0, 1, 1], [], []>} : vector<96x28xbf16>, vector<28x144xbf16>, vector<96x144xf32> -> vector<96x144xf32>
    %63 = vector.extract_strided_slice %1 {offsets = [336, 0], sizes = [96, 28], strides = [1, 1]} : vector<448x28xbf16> to vector<96x28xbf16>
    %c1_44 = arith.constant 1 : index
    %c0_45 = arith.constant 0 : index
    %c0_46 = arith.constant 0 : index
    %64 = vector.load %arg2[%c1_44, %c0_45, %c0_46] : memref<5x28x144xbf16, #tpu.memory_space<vmem>>, vector<1x28x144xbf16>
    %65 = vector.shape_cast %64 : vector<1x28x144xbf16> to vector<28x144xbf16>
    %cst_47 = arith.constant dense<0.000000e+00> : vector<96x144xf32>
    %66 = tpu.matmul %63, %65, %cst_47 {dimension_numbers = #tpu.dot_dimension_numbers<[1], [0], [0], [1], [0, 0, 1, 1], [], []>} : vector<96x28xbf16>, vector<28x144xbf16>, vector<96x144xf32> -> vector<96x144xf32>
    %67 = arith.addf %62, %66 : vector<96x144xf32>
    %68 = vector.extract_strided_slice %1 {offsets = [16, 0], sizes = [96, 28], strides = [1, 1]} : vector<448x28xbf16> to vector<96x28xbf16>
    %c2_48 = arith.constant 2 : index
    %c0_49 = arith.constant 0 : index
    %c0_50 = arith.constant 0 : index
    %69 = vector.load %arg2[%c2_48, %c0_49, %c0_50] : memref<5x28x144xbf16, #tpu.memory_space<vmem>>, vector<1x28x144xbf16>
    %70 = vector.shape_cast %69 : vector<1x28x144xbf16> to vector<28x144xbf16>
    %cst_51 = arith.constant dense<0.000000e+00> : vector<96x144xf32>
    %71 = tpu.matmul %68, %70, %cst_51 {dimension_numbers = #tpu.dot_dimension_numbers<[1], [0], [0], [1], [0, 0, 1, 1], [], []>} : vector<96x28xbf16>, vector<28x144xbf16>, vector<96x144xf32> -> vector<96x144xf32>
    %72 = arith.addf %67, %71 : vector<96x144xf32>
    %73 = vector.extract_strided_slice %1 {offsets = [128, 0], sizes = [96, 28], strides = [1, 1]} : vector<448x28xbf16> to vector<96x28xbf16>
    %c3_52 = arith.constant 3 : index
    %c0_53 = arith.constant 0 : index
    %c0_54 = arith.constant 0 : index
    %74 = vector.load %arg2[%c3_52, %c0_53, %c0_54] : memref<5x28x144xbf16, #tpu.memory_space<vmem>>, vector<1x28x144xbf16>
    %75 = vector.shape_cast %74 : vector<1x28x144xbf16> to vector<28x144xbf16>
    %cst_55 = arith.constant dense<0.000000e+00> : vector<96x144xf32>
    %76 = tpu.matmul %73, %75, %cst_55 {dimension_numbers = #tpu.dot_dimension_numbers<[1], [0], [0], [1], [0, 0, 1, 1], [], []>} : vector<96x28xbf16>, vector<28x144xbf16>, vector<96x144xf32> -> vector<96x144xf32>
    %77 = arith.addf %72, %76 : vector<96x144xf32>
    %78 = vector.extract_strided_slice %1 {offsets = [240, 0], sizes = [96, 28], strides = [1, 1]} : vector<448x28xbf16> to vector<96x28xbf16>
    %c4_56 = arith.constant 4 : index
    %c0_57 = arith.constant 0 : index
    %c0_58 = arith.constant 0 : index
    %79 = vector.load %arg2[%c4_56, %c0_57, %c0_58] : memref<5x28x144xbf16, #tpu.memory_space<vmem>>, vector<1x28x144xbf16>
    %80 = vector.shape_cast %79 : vector<1x28x144xbf16> to vector<28x144xbf16>
    %cst_59 = arith.constant dense<0.000000e+00> : vector<96x144xf32>
    %81 = tpu.matmul %78, %80, %cst_59 {dimension_numbers = #tpu.dot_dimension_numbers<[1], [0], [0], [1], [0, 0, 1, 1], [], []>} : vector<96x28xbf16>, vector<28x144xbf16>, vector<96x144xf32> -> vector<96x144xf32>
    %82 = arith.addf %77, %81 : vector<96x144xf32>
    %83 = vector.broadcast %2 : vector<1x144xf32> to vector<96x144xf32>
    %84 = arith.addf %82, %83 : vector<96x144xf32>
    %cst_60 = arith.constant 0.000000e+00 : f32
    %85 = vector.broadcast %cst_60 : f32 to vector<96x144xf32>
    %86 = arith.maximumf %84, %85 : vector<96x144xf32>
    %87 = vector.extract_strided_slice %1 {offsets = [336, 0], sizes = [96, 28], strides = [1, 1]} : vector<448x28xbf16> to vector<96x28xbf16>
    %c0_61 = arith.constant 0 : index
    %c0_62 = arith.constant 0 : index
    %c0_63 = arith.constant 0 : index
    %88 = vector.load %arg2[%c0_61, %c0_62, %c0_63] : memref<5x28x144xbf16, #tpu.memory_space<vmem>>, vector<1x28x144xbf16>
    %89 = vector.shape_cast %88 : vector<1x28x144xbf16> to vector<28x144xbf16>
    %cst_64 = arith.constant dense<0.000000e+00> : vector<96x144xf32>
    %90 = tpu.matmul %87, %89, %cst_64 {dimension_numbers = #tpu.dot_dimension_numbers<[1], [0], [0], [1], [0, 0, 1, 1], [], []>} : vector<96x28xbf16>, vector<28x144xbf16>, vector<96x144xf32> -> vector<96x144xf32>
    %91 = vector.extract_strided_slice %1 {offsets = [16, 0], sizes = [96, 28], strides = [1, 1]} : vector<448x28xbf16> to vector<96x28xbf16>
    %c1_65 = arith.constant 1 : index
    %c0_66 = arith.constant 0 : index
    %c0_67 = arith.constant 0 : index
    %92 = vector.load %arg2[%c1_65, %c0_66, %c0_67] : memref<5x28x144xbf16, #tpu.memory_space<vmem>>, vector<1x28x144xbf16>
    %93 = vector.shape_cast %92 : vector<1x28x144xbf16> to vector<28x144xbf16>
    %cst_68 = arith.constant dense<0.000000e+00> : vector<96x144xf32>
    %94 = tpu.matmul %91, %93, %cst_68 {dimension_numbers = #tpu.dot_dimension_numbers<[1], [0], [0], [1], [0, 0, 1, 1], [], []>} : vector<96x28xbf16>, vector<28x144xbf16>, vector<96x144xf32> -> vector<96x144xf32>
    %95 = arith.addf %90, %94 : vector<96x144xf32>
    %96 = vector.extract_strided_slice %1 {offsets = [128, 0], sizes = [96, 28], strides = [1, 1]} : vector<448x28xbf16> to vector<96x28xbf16>
    %c2_69 = arith.constant 2 : index
    %c0_70 = arith.constant 0 : index
    %c0_71 = arith.constant 0 : index
    %97 = vector.load %arg2[%c2_69, %c0_70, %c0_71] : memref<5x28x144xbf16, #tpu.memory_space<vmem>>, vector<1x28x144xbf16>
    %98 = vector.shape_cast %97 : vector<1x28x144xbf16> to vector<28x144xbf16>
    %cst_72 = arith.constant dense<0.000000e+00> : vector<96x144xf32>
    %99 = tpu.matmul %96, %98, %cst_72 {dimension_numbers = #tpu.dot_dimension_numbers<[1], [0], [0], [1], [0, 0, 1, 1], [], []>} : vector<96x28xbf16>, vector<28x144xbf16>, vector<96x144xf32> -> vector<96x144xf32>
    %100 = arith.addf %95, %99 : vector<96x144xf32>
    %101 = vector.extract_strided_slice %1 {offsets = [240, 0], sizes = [96, 28], strides = [1, 1]} : vector<448x28xbf16> to vector<96x28xbf16>
    %c3_73 = arith.constant 3 : index
    %c0_74 = arith.constant 0 : index
    %c0_75 = arith.constant 0 : index
    %102 = vector.load %arg2[%c3_73, %c0_74, %c0_75] : memref<5x28x144xbf16, #tpu.memory_space<vmem>>, vector<1x28x144xbf16>
    %103 = vector.shape_cast %102 : vector<1x28x144xbf16> to vector<28x144xbf16>
    %cst_76 = arith.constant dense<0.000000e+00> : vector<96x144xf32>
    %104 = tpu.matmul %101, %103, %cst_76 {dimension_numbers = #tpu.dot_dimension_numbers<[1], [0], [0], [1], [0, 0, 1, 1], [], []>} : vector<96x28xbf16>, vector<28x144xbf16>, vector<96x144xf32> -> vector<96x144xf32>
    %105 = arith.addf %100, %104 : vector<96x144xf32>
    %106 = vector.extract_strided_slice %1 {offsets = [352, 0], sizes = [96, 28], strides = [1, 1]} : vector<448x28xbf16> to vector<96x28xbf16>
    %c4_77 = arith.constant 4 : index
    %c0_78 = arith.constant 0 : index
    %c0_79 = arith.constant 0 : index
    %107 = vector.load %arg2[%c4_77, %c0_78, %c0_79] : memref<5x28x144xbf16, #tpu.memory_space<vmem>>, vector<1x28x144xbf16>
    %108 = vector.shape_cast %107 : vector<1x28x144xbf16> to vector<28x144xbf16>
    %cst_80 = arith.constant dense<0.000000e+00> : vector<96x144xf32>
    %109 = tpu.matmul %106, %108, %cst_80 {dimension_numbers = #tpu.dot_dimension_numbers<[1], [0], [0], [1], [0, 0, 1, 1], [], []>} : vector<96x28xbf16>, vector<28x144xbf16>, vector<96x144xf32> -> vector<96x144xf32>
    %110 = arith.addf %105, %109 : vector<96x144xf32>
    %111 = vector.broadcast %2 : vector<1x144xf32> to vector<96x144xf32>
    %112 = arith.addf %110, %111 : vector<96x144xf32>
    %cst_81 = arith.constant 0.000000e+00 : f32
    %113 = vector.broadcast %cst_81 : f32 to vector<96x144xf32>
    %114 = arith.maximumf %112, %113 : vector<96x144xf32>
    %115 = arith.maximumf %30, %58 : vector<96x144xf32>
    %116 = arith.maximumf %86, %114 : vector<96x144xf32>
    %117 = vector.extract_strided_slice %115 {offsets = [0, 0], sizes = [96, 72], strides = [1, 1]} : vector<96x144xf32> to vector<96x72xf32>
    %118 = vector.extract_strided_slice %115 {offsets = [0, 72], sizes = [96, 72], strides = [1, 1]} : vector<96x144xf32> to vector<96x72xf32>
    %119 = arith.maximumf %117, %118 : vector<96x72xf32>
    %120 = arith.truncf %119 : vector<96x72xf32> to vector<96x72xbf16>
    %121 = vector.extract_strided_slice %116 {offsets = [0, 0], sizes = [96, 72], strides = [1, 1]} : vector<96x144xf32> to vector<96x72xf32>
    %122 = vector.extract_strided_slice %116 {offsets = [0, 72], sizes = [96, 72], strides = [1, 1]} : vector<96x144xf32> to vector<96x72xf32>
    %123 = arith.maximumf %121, %122 : vector<96x72xf32>
    %124 = arith.truncf %123 : vector<96x72xf32> to vector<96x72xbf16>
    %c0_82 = arith.constant 0 : index
    %c0_83 = arith.constant 0 : index
    %125 = vector.load %arg5[%c0_82, %c0_83] : memref<1x128xf32, #tpu.memory_space<vmem>>, vector<1x128xf32>
    %126 = vector.extract_strided_slice %120 {offsets = [0, 0], sizes = [64, 72], strides = [1, 1]} : vector<96x72xbf16> to vector<64x72xbf16>
    %c0_84 = arith.constant 0 : index
    %c0_85 = arith.constant 0 : index
    %c0_86 = arith.constant 0 : index
    %127 = vector.load %arg4[%c0_84, %c0_85, %c0_86] : memref<5x72x128xbf16, #tpu.memory_space<vmem>>, vector<1x72x128xbf16>
    %128 = vector.shape_cast %127 : vector<1x72x128xbf16> to vector<72x128xbf16>
    %cst_87 = arith.constant dense<0.000000e+00> : vector<64x128xf32>
    %129 = tpu.matmul %126, %128, %cst_87 {dimension_numbers = #tpu.dot_dimension_numbers<[1], [0], [0], [1], [0, 0, 1, 1], [], []>} : vector<64x72xbf16>, vector<72x128xbf16>, vector<64x128xf32> -> vector<64x128xf32>
    %130 = vector.extract_strided_slice %124 {offsets = [0, 0], sizes = [64, 72], strides = [1, 1]} : vector<96x72xbf16> to vector<64x72xbf16>
    %c1_88 = arith.constant 1 : index
    %c0_89 = arith.constant 0 : index
    %c0_90 = arith.constant 0 : index
    %131 = vector.load %arg4[%c1_88, %c0_89, %c0_90] : memref<5x72x128xbf16, #tpu.memory_space<vmem>>, vector<1x72x128xbf16>
    %132 = vector.shape_cast %131 : vector<1x72x128xbf16> to vector<72x128xbf16>
    %cst_91 = arith.constant dense<0.000000e+00> : vector<64x128xf32>
    %133 = tpu.matmul %130, %132, %cst_91 {dimension_numbers = #tpu.dot_dimension_numbers<[1], [0], [0], [1], [0, 0, 1, 1], [], []>} : vector<64x72xbf16>, vector<72x128xbf16>, vector<64x128xf32> -> vector<64x128xf32>
    %134 = arith.addf %129, %133 : vector<64x128xf32>
    %135 = vector.extract_strided_slice %120 {offsets = [16, 0], sizes = [64, 72], strides = [1, 1]} : vector<96x72xbf16> to vector<64x72xbf16>
    %c2_92 = arith.constant 2 : index
    %c0_93 = arith.constant 0 : index
    %c0_94 = arith.constant 0 : index
    %136 = vector.load %arg4[%c2_92, %c0_93, %c0_94] : memref<5x72x128xbf16, #tpu.memory_space<vmem>>, vector<1x72x128xbf16>
    %137 = vector.shape_cast %136 : vector<1x72x128xbf16> to vector<72x128xbf16>
    %cst_95 = arith.constant dense<0.000000e+00> : vector<64x128xf32>
    %138 = tpu.matmul %135, %137, %cst_95 {dimension_numbers = #tpu.dot_dimension_numbers<[1], [0], [0], [1], [0, 0, 1, 1], [], []>} : vector<64x72xbf16>, vector<72x128xbf16>, vector<64x128xf32> -> vector<64x128xf32>
    %139 = arith.addf %134, %138 : vector<64x128xf32>
    %140 = vector.extract_strided_slice %124 {offsets = [16, 0], sizes = [64, 72], strides = [1, 1]} : vector<96x72xbf16> to vector<64x72xbf16>
    %c3_96 = arith.constant 3 : index
    %c0_97 = arith.constant 0 : index
    %c0_98 = arith.constant 0 : index
    %141 = vector.load %arg4[%c3_96, %c0_97, %c0_98] : memref<5x72x128xbf16, #tpu.memory_space<vmem>>, vector<1x72x128xbf16>
    %142 = vector.shape_cast %141 : vector<1x72x128xbf16> to vector<72x128xbf16>
    %cst_99 = arith.constant dense<0.000000e+00> : vector<64x128xf32>
    %143 = tpu.matmul %140, %142, %cst_99 {dimension_numbers = #tpu.dot_dimension_numbers<[1], [0], [0], [1], [0, 0, 1, 1], [], []>} : vector<64x72xbf16>, vector<72x128xbf16>, vector<64x128xf32> -> vector<64x128xf32>
    %144 = arith.addf %139, %143 : vector<64x128xf32>
    %145 = vector.extract_strided_slice %120 {offsets = [32, 0], sizes = [64, 72], strides = [1, 1]} : vector<96x72xbf16> to vector<64x72xbf16>
    %c4_100 = arith.constant 4 : index
    %c0_101 = arith.constant 0 : index
    %c0_102 = arith.constant 0 : index
    %146 = vector.load %arg4[%c4_100, %c0_101, %c0_102] : memref<5x72x128xbf16, #tpu.memory_space<vmem>>, vector<1x72x128xbf16>
    %147 = vector.shape_cast %146 : vector<1x72x128xbf16> to vector<72x128xbf16>
    %cst_103 = arith.constant dense<0.000000e+00> : vector<64x128xf32>
    %148 = tpu.matmul %145, %147, %cst_103 {dimension_numbers = #tpu.dot_dimension_numbers<[1], [0], [0], [1], [0, 0, 1, 1], [], []>} : vector<64x72xbf16>, vector<72x128xbf16>, vector<64x128xf32> -> vector<64x128xf32>
    %149 = arith.addf %144, %148 : vector<64x128xf32>
    %150 = vector.broadcast %125 : vector<1x128xf32> to vector<64x128xf32>
    %151 = arith.addf %149, %150 : vector<64x128xf32>
    %cst_104 = arith.constant 0.000000e+00 : f32
    %152 = vector.broadcast %cst_104 : f32 to vector<64x128xf32>
    %153 = arith.maximumf %151, %152 : vector<64x128xf32>
    %154 = vector.extract_strided_slice %124 {offsets = [0, 0], sizes = [64, 72], strides = [1, 1]} : vector<96x72xbf16> to vector<64x72xbf16>
    %c0_105 = arith.constant 0 : index
    %c0_106 = arith.constant 0 : index
    %c0_107 = arith.constant 0 : index
    %155 = vector.load %arg4[%c0_105, %c0_106, %c0_107] : memref<5x72x128xbf16, #tpu.memory_space<vmem>>, vector<1x72x128xbf16>
    %156 = vector.shape_cast %155 : vector<1x72x128xbf16> to vector<72x128xbf16>
    %cst_108 = arith.constant dense<0.000000e+00> : vector<64x128xf32>
    %157 = tpu.matmul %154, %156, %cst_108 {dimension_numbers = #tpu.dot_dimension_numbers<[1], [0], [0], [1], [0, 0, 1, 1], [], []>} : vector<64x72xbf16>, vector<72x128xbf16>, vector<64x128xf32> -> vector<64x128xf32>
    %158 = vector.extract_strided_slice %120 {offsets = [16, 0], sizes = [64, 72], strides = [1, 1]} : vector<96x72xbf16> to vector<64x72xbf16>
    %c1_109 = arith.constant 1 : index
    %c0_110 = arith.constant 0 : index
    %c0_111 = arith.constant 0 : index
    %159 = vector.load %arg4[%c1_109, %c0_110, %c0_111] : memref<5x72x128xbf16, #tpu.memory_space<vmem>>, vector<1x72x128xbf16>
    %160 = vector.shape_cast %159 : vector<1x72x128xbf16> to vector<72x128xbf16>
    %cst_112 = arith.constant dense<0.000000e+00> : vector<64x128xf32>
    %161 = tpu.matmul %158, %160, %cst_112 {dimension_numbers = #tpu.dot_dimension_numbers<[1], [0], [0], [1], [0, 0, 1, 1], [], []>} : vector<64x72xbf16>, vector<72x128xbf16>, vector<64x128xf32> -> vector<64x128xf32>
    %162 = arith.addf %157, %161 : vector<64x128xf32>
    %163 = vector.extract_strided_slice %124 {offsets = [16, 0], sizes = [64, 72], strides = [1, 1]} : vector<96x72xbf16> to vector<64x72xbf16>
    %c2_113 = arith.constant 2 : index
    %c0_114 = arith.constant 0 : index
    %c0_115 = arith.constant 0 : index
    %164 = vector.load %arg4[%c2_113, %c0_114, %c0_115] : memref<5x72x128xbf16, #tpu.memory_space<vmem>>, vector<1x72x128xbf16>
    %165 = vector.shape_cast %164 : vector<1x72x128xbf16> to vector<72x128xbf16>
    %cst_116 = arith.constant dense<0.000000e+00> : vector<64x128xf32>
    %166 = tpu.matmul %163, %165, %cst_116 {dimension_numbers = #tpu.dot_dimension_numbers<[1], [0], [0], [1], [0, 0, 1, 1], [], []>} : vector<64x72xbf16>, vector<72x128xbf16>, vector<64x128xf32> -> vector<64x128xf32>
    %167 = arith.addf %162, %166 : vector<64x128xf32>
    %168 = vector.extract_strided_slice %120 {offsets = [32, 0], sizes = [64, 72], strides = [1, 1]} : vector<96x72xbf16> to vector<64x72xbf16>
    %c3_117 = arith.constant 3 : index
    %c0_118 = arith.constant 0 : index
    %c0_119 = arith.constant 0 : index
    %169 = vector.load %arg4[%c3_117, %c0_118, %c0_119] : memref<5x72x128xbf16, #tpu.memory_space<vmem>>, vector<1x72x128xbf16>
    %170 = vector.shape_cast %169 : vector<1x72x128xbf16> to vector<72x128xbf16>
    %cst_120 = arith.constant dense<0.000000e+00> : vector<64x128xf32>
    %171 = tpu.matmul %168, %170, %cst_120 {dimension_numbers = #tpu.dot_dimension_numbers<[1], [0], [0], [1], [0, 0, 1, 1], [], []>} : vector<64x72xbf16>, vector<72x128xbf16>, vector<64x128xf32> -> vector<64x128xf32>
    %172 = arith.addf %167, %171 : vector<64x128xf32>
    %173 = vector.extract_strided_slice %124 {offsets = [32, 0], sizes = [64, 72], strides = [1, 1]} : vector<96x72xbf16> to vector<64x72xbf16>
    %c4_121 = arith.constant 4 : index
    %c0_122 = arith.constant 0 : index
    %c0_123 = arith.constant 0 : index
    %174 = vector.load %arg4[%c4_121, %c0_122, %c0_123] : memref<5x72x128xbf16, #tpu.memory_space<vmem>>, vector<1x72x128xbf16>
    %175 = vector.shape_cast %174 : vector<1x72x128xbf16> to vector<72x128xbf16>
    %cst_124 = arith.constant dense<0.000000e+00> : vector<64x128xf32>
    %176 = tpu.matmul %173, %175, %cst_124 {dimension_numbers = #tpu.dot_dimension_numbers<[1], [0], [0], [1], [0, 0, 1, 1], [], []>} : vector<64x72xbf16>, vector<72x128xbf16>, vector<64x128xf32> -> vector<64x128xf32>
    %177 = arith.addf %172, %176 : vector<64x128xf32>
    %178 = vector.broadcast %125 : vector<1x128xf32> to vector<64x128xf32>
    %179 = arith.addf %177, %178 : vector<64x128xf32>
    %cst_125 = arith.constant 0.000000e+00 : f32
    %180 = vector.broadcast %cst_125 : f32 to vector<64x128xf32>
    %181 = arith.maximumf %179, %180 : vector<64x128xf32>
    %182 = arith.maximumf %153, %181 : vector<64x128xf32>
    %183 = vector.extract_strided_slice %182 {offsets = [0, 0], sizes = [64, 64], strides = [1, 1]} : vector<64x128xf32> to vector<64x64xf32>
    %184 = vector.extract_strided_slice %182 {offsets = [0, 64], sizes = [64, 64], strides = [1, 1]} : vector<64x128xf32> to vector<64x64xf32>
    %185 = arith.maximumf %183, %184 : vector<64x64xf32>
    %186 = arith.truncf %185 : vector<64x64xf32> to vector<64x64xbf16>
    %187 = vector.extract_strided_slice %186 {offsets = [0, 0], sizes = [16, 64], strides = [1, 1]} : vector<64x64xbf16> to vector<16x64xbf16>
    %188 = vector.extract_strided_slice %186 {offsets = [16, 0], sizes = [16, 64], strides = [1, 1]} : vector<64x64xbf16> to vector<16x64xbf16>
    %189 = vector.extract_strided_slice %186 {offsets = [32, 0], sizes = [16, 64], strides = [1, 1]} : vector<64x64xbf16> to vector<16x64xbf16>
    %190 = vector.extract_strided_slice %186 {offsets = [48, 0], sizes = [16, 64], strides = [1, 1]} : vector<64x64xbf16> to vector<16x64xbf16>
    %191 = tpu.concatenate %187, %188, %189, %190 in 1 : vector<16x64xbf16>, vector<16x64xbf16>, vector<16x64xbf16>, vector<16x64xbf16> -> vector<16x256xbf16>
    %c0_126 = arith.constant 0 : index
    %c0_127 = arith.constant 0 : index
    %192 = vector.load %arg6[%c0_126, %c0_127] : memref<256x128xbf16, #tpu.memory_space<vmem>>, vector<256x128xbf16>
    %cst_128 = arith.constant dense<0.000000e+00> : vector<16x128xf32>
    %193 = tpu.matmul %191, %192, %cst_128 {dimension_numbers = #tpu.dot_dimension_numbers<[1], [0], [0], [1], [0, 0, 1, 1], [], []>} : vector<16x256xbf16>, vector<256x128xbf16>, vector<16x128xf32> -> vector<16x128xf32>
    %c0_129 = arith.constant 0 : index
    %c0_130 = arith.constant 0 : index
    %194 = vector.load %arg7[%c0_129, %c0_130] : memref<1x128xf32, #tpu.memory_space<vmem>>, vector<1x128xf32>
    %195 = vector.broadcast %194 : vector<1x128xf32> to vector<16x128xf32>
    %196 = arith.addf %193, %195 : vector<16x128xf32>
    %cst_131 = arith.constant 0.000000e+00 : f32
    %197 = vector.broadcast %cst_131 : f32 to vector<16x128xf32>
    %198 = arith.maximumf %196, %197 : vector<16x128xf32>
    %199 = arith.truncf %198 : vector<16x128xf32> to vector<16x128xbf16>
    %c0_132 = arith.constant 0 : index
    %c0_133 = arith.constant 0 : index
    %200 = vector.load %arg8[%c0_132, %c0_133] : memref<128x128xbf16, #tpu.memory_space<vmem>>, vector<128x128xbf16>
    %cst_134 = arith.constant dense<0.000000e+00> : vector<16x128xf32>
    %201 = tpu.matmul %199, %200, %cst_134 {dimension_numbers = #tpu.dot_dimension_numbers<[1], [0], [0], [1], [0, 0, 1, 1], [], []>} : vector<16x128xbf16>, vector<128x128xbf16>, vector<16x128xf32> -> vector<16x128xf32>
    %c0_135 = arith.constant 0 : index
    %c0_136 = arith.constant 0 : index
    %202 = vector.load %arg9[%c0_135, %c0_136] : memref<1x128xf32, #tpu.memory_space<vmem>>, vector<1x128xf32>
    %203 = vector.broadcast %202 : vector<1x128xf32> to vector<16x128xf32>
    %204 = arith.addf %201, %203 : vector<16x128xf32>
    %cst_137 = arith.constant 0.000000e+00 : f32
    %205 = vector.broadcast %cst_137 : f32 to vector<16x128xf32>
    %206 = arith.maximumf %204, %205 : vector<16x128xf32>
    %207 = arith.truncf %206 : vector<16x128xf32> to vector<16x128xbf16>
    %c0_138 = arith.constant 0 : index
    %c0_139 = arith.constant 0 : index
    %208 = vector.load %arg10[%c0_138, %c0_139] : memref<128x128xbf16, #tpu.memory_space<vmem>>, vector<128x128xbf16>
    %cst_140 = arith.constant dense<0.000000e+00> : vector<16x128xf32>
    %209 = tpu.matmul %207, %208, %cst_140 {dimension_numbers = #tpu.dot_dimension_numbers<[1], [0], [0], [1], [0, 0, 1, 1], [], []>} : vector<16x128xbf16>, vector<128x128xbf16>, vector<16x128xf32> -> vector<16x128xf32>
    %c0_141 = arith.constant 0 : index
    %c0_142 = arith.constant 0 : index
    %210 = vector.load %arg11[%c0_141, %c0_142] : memref<1x128xf32, #tpu.memory_space<vmem>>, vector<1x128xf32>
    %211 = vector.broadcast %210 : vector<1x128xf32> to vector<16x128xf32>
    %212 = arith.addf %209, %211 : vector<16x128xf32>
    %c0_143 = arith.constant 0 : index
    %c0_144 = arith.constant 0 : index
    %213 = vector.load %arg12[%c0_143, %c0_144] : memref<16x128xf32, #tpu.memory_space<vmem>>, vector<16x128xf32>
    tpu.vector_store %arg12[%c0_143, %c0_144], %212 {strides = array<i32>} : memref<16x128xf32, #tpu.memory_space<vmem>>, vector<16x128xf32>,
    return
  }
  func.func @transform_0(%arg0: i32) -> (i32, i32) {
    %c0_i32 = arith.constant 0 : i32
    %c0_i32_0 = arith.constant 0 : i32
    return %arg0, %c0_i32 : i32, i32
  }
  func.func @transform_1(%arg0: i32) -> (i32, i32, i32) {
    %c0_i32 = arith.constant 0 : i32
    %c0_i32_0 = arith.constant 0 : i32
    %c0_i32_1 = arith.constant 0 : i32
    %c0_i32_2 = arith.constant 0 : i32
    return %c0_i32, %c0_i32_0, %c0_i32_1 : i32, i32, i32
  }
  func.func @transform_2(%arg0: i32) -> (i32, i32) {
    %c0_i32 = arith.constant 0 : i32
    %c0_i32_0 = arith.constant 0 : i32
    %c0_i32_1 = arith.constant 0 : i32
    return %c0_i32, %c0_i32_0 : i32, i32
  }
  func.func @transform_3(%arg0: i32) -> (i32, i32, i32) {
    %c0_i32 = arith.constant 0 : i32
    %c0_i32_0 = arith.constant 0 : i32
    %c0_i32_1 = arith.constant 0 : i32
    %c0_i32_2 = arith.constant 0 : i32
    return %c0_i32, %c0_i32_0, %c0_i32_1 : i32, i32, i32
  }
  func.func @transform_4(%arg0: i32) -> (i32, i32) {
    %c0_i32 = arith.constant 0 : i32
    %c0_i32_0 = arith.constant 0 : i32
    %c0_i32_1 = arith.constant 0 : i32
    return %c0_i32, %c0_i32_0 : i32, i32
  }
  func.func @transform_5(%arg0: i32) -> (i32, i32) {
    %c0_i32 = arith.constant 0 : i32
    %c0_i32_0 = arith.constant 0 : i32
    %c0_i32_1 = arith.constant 0 : i32
    return %c0_i32, %c0_i32_0 : i32, i32
  }
  func.func @transform_6(%arg0: i32) -> (i32, i32) {
    %c0_i32 = arith.constant 0 : i32
    %c0_i32_0 = arith.constant 0 : i32
    %c0_i32_1 = arith.constant 0 : i32
    return %c0_i32, %c0_i32_0 : i32, i32
  }
  func.func @transform_7(%arg0: i32) -> (i32, i32) {
    %c0_i32 = arith.constant 0 : i32
    %c0_i32_0 = arith.constant 0 : i32
    %c0_i32_1 = arith.constant 0 : i32
    return %c0_i32, %c0_i32_0 : i32, i32
  }
  func.func @transform_8(%arg0: i32) -> (i32, i32) {
    %c0_i32 = arith.constant 0 : i32
    %c0_i32_0 = arith.constant 0 : i32
    %c0_i32_1 = arith.constant 0 : i32
    return %c0_i32, %c0_i32_0 : i32, i32
  }
  func.func @transform_9(%arg0: i32) -> (i32, i32) {
    %c0_i32 = arith.constant 0 : i32
    %c0_i32_0 = arith.constant 0 : i32
    %c0_i32_1 = arith.constant 0 : i32
    return %c0_i32, %c0_i32_0 : i32, i32
  }
  func.func @transform_10(%arg0: i32) -> (i32, i32) {
    %c0_i32 = arith.constant 0 : i32
    %c0_i32_0 = arith.constant 0 : i32
    %c0_i32_1 = arith.constant 0 : i32
    return %c0_i32, %c0_i32_0 : i32, i32
  }
  func.func @transform_11(%arg0: i32) -> (i32, i32) {
    %c0_i32 = arith.constant 0 : i32
    %c0_i32_0 = arith.constant 0 : i32
    return %arg0, %c0_i32 : i32, i32
  }
}

</mosaic_0001>

<llo_original>
// kernel: tile.13
$region0: #{tile.13}
  #allocation0 [shape = 's32[1]{0}', space=sflag, size = 0x4, scoped, tag = 'scoped memory for tile.13']
  %s0 = inlined_call_operand.vmem [shape: f32[6], index: 0, kind: input, shape index: {}]
  %s1 = inlined_call_operand.vmem [shape: f32[24,6], index: 1, kind: output, shape index: {}]
  // Predicated region
  $region2: #{tile.13} parent=0 // pred_check
    _
  $region3: #{tile.13} parent=0 // pred_check_branch
    %3 = sbr.rel (0) target = $region5
  $region4: #{tile.13} parent=0 // pred_region
    _
  $region5: #{tile.13} parent=0 // pred_fallthru
    _
  %v4 = vld [vmem:[%s0] ss:$0 sm:$0xff]
  %5 = vst [vmem:[%s1] sm:$0xff] %v4
  %s6 = scalar_lea.vmem %s1, 8
  %7 = vst [vmem:[%s6] sm:$0xff] %v4
  %s8 = scalar_lea.vmem %s1, 16
  %9 = vst [vmem:[%s8] sm:$0xff] %v4

// kernel: tile.14
$region0: #{tile.14}
  %s0 = inlined_call_operand.vmem [shape: f32[24,6], index: 0, kind: input, shape index: {}]
  %s1 = inlined_call_operand.vmem [shape: f32[1,144], index: 1, kind: output, shape index: {}]
  $region1: #{tile.14} parent=0
    #allocation0 [shape = 'u8[8192]{0}', space=vmem, size = 0x2000, scoped, tag = 'scoped mem for output reshape']
    %v2 = vld [vmem:[%s0] sm:$0x1]
    %vm3 = vcmask 48128
    %4 = vst.msk [vmem:[#allocation0] sm:$0x1] %vm3, %v2
    %s5 = scalar_lea.vmem %s0, 21
    %v6 = vld [vmem:[%s5] sm:$0x1]
    %s7 = scalar_lea.vmem %s0, 21
    %v8 = vld [vmem:[%s7] sm:$0x1]
    %vm9 = vcmask 15360
    %v10 = vsel %vm9, %v8, %v6
    %11 = vrot.lane.b32.xlu0 %v10, 126
    %v12 = vpop.permute.xlu0 %11
    %vm13 = vcmask 31744
    %s14 = scalar_lea.vmem [#allocation0], 8
    %15 = vst.msk [vmem:[%s14] sm:$0x1] %vm13, %v12
    %vm16 = vcmask 1048560
    %17 = vst.msk [vmem:[#allocation0] sm:$0x1] %vm16, %v12
    %s18 = scalar_lea.vmem %s0, 20
    %v19 = vld [vmem:[%s18] sm:$0x1]
    %20 = vrot.lane.b32.xlu0 %v19, 120
    %v21 = vpop.permute.xlu0 %20
    %vm22 = vcmask 1032128
    %23 = vst.msk [vmem:[#allocation0] sm:$0x1] %vm22, %v21
    %s24 = scalar_lea.vmem %s0, 19
    %v25 = vld [vmem:[%s24] sm:$0x1]
    %26 = vrot.lane.b32.xlu0 %v25, 114
    %v27 = vpop.permute.xlu0 %26
    %vm28 = vcmask 982928
    %29 = vst.msk [vmem:[#allocation0] sm:$0x1] %vm28, %v27
    %s30 = scalar_lea.vmem %s0, 18
    %v31 = vld [vmem:[%s30] sm:$0x1]
    %32 = vrot.lane.b32.xlu0 %v31, 108
    %v33 = vpop.permute.xlu0 %32
    %vm34 = vcmask 933728
    %35 = vst.msk [vmem:[#allocation0] sm:$0x1] %vm34, %v33
    %s36 = scalar_lea.vmem %s0, 17
    %v37 = vld [vmem:[%s36] sm:$0x1]
    %38 = vrot.lane.b32.xlu0 %v37, 102
    %v39 = vpop.permute.xlu0 %38
    %vm40 = vcmask 884528
    %41 = vst.msk [vmem:[#allocation0] sm:$0x1] %vm40, %v39
    %s42 = scalar_lea.vmem %s0, 16
    %v43 = vld [vmem:[%s42] sm:$0x1]
    %44 = vrot.lane.b32.xlu0 %v43, 96
    %v45 = vpop.permute.xlu0 %44
    %vm46 = vcmask 835328
    %47 = vst.msk [vmem:[#allocation0] sm:$0x1] %vm46, %v45
    %s48 = scalar_lea.vmem %s0, 15
    %v49 = vld [vmem:[%s48] sm:$0x1]
    %50 = vrot.lane.b32.xlu0 %v49, 90
    %v51 = vpop.permute.xlu0 %50
    %vm52 = vcmask 786128
    %53 = vst.msk [vmem:[#allocation0] sm:$0x1] %vm52, %v51
    %s54 = scalar_lea.vmem %s0, 14
    %v55 = vld [vmem:[%s54] sm:$0x1]
    %56 = vrot.lane.b32.xlu0 %v55, 84
    %v57 = vpop.permute.xlu0 %56
    %vm58 = vcmask 736928
    %59 = vst.msk [vmem:[#allocation0] sm:$0x1] %vm58, %v57
    %s60 = scalar_lea.vmem %s0, 13
    %v61 = vld [vmem:[%s60] sm:$0x1]
    %62 = vrot.lane.b32.xlu0 %v61, 78
    %v63 = vpop.permute.xlu0 %62
    %vm64 = vcmask 687728
    %65 = vst.msk [vmem:[#allocation0] sm:$0x1] %vm64, %v63
    %s66 = scalar_lea.vmem %s0, 12
    %v67 = vld [vmem:[%s66] sm:$0x1]
    %68 = vrot.lane.b32.xlu0 %v67, 72
    %v69 = vpop.permute.xlu0 %68
    %vm70 = vcmask 638528
    %71 = vst.msk [vmem:[#allocation0] sm:$0x1] %vm70, %v69
    %s72 = scalar_lea.vmem %s0, 11
    %v73 = vld [vmem:[%s72] sm:$0x1]
    %74 = vrot.lane.b32.xlu0 %v73, 66
    %v75 = vpop.permute.xlu0 %74
    %vm76 = vcmask 589328
    %77 = vst.msk [vmem:[#allocation0] sm:$0x1] %vm76, %v75
    %s78 = scalar_lea.vmem %s0, 10
    %v79 = vld [vmem:[%s78] sm:$0x1]
    %80 = vrot.lane.b32.xlu0 %v79, 60
    %v81 = vpop.permute.xlu0 %80
    %vm82 = vcmask 540128
    %83 = vst.msk [vmem:[#allocation0] sm:$0x1] %vm82, %v81
    %s84 = scalar_lea.vmem %s0, 9
    %v85 = vld [vmem:[%s84] sm:$0x1]
    %86 = vrot.lane.b32.xlu0 %v85, 54
    %v87 = vpop.permute.xlu0 %86
    %vm88 = vcmask 490928
    %89 = vst.msk [vmem:[#allocation0] sm:$0x1] %vm88, %v87
    %s90 = scalar_lea.vmem %s0, 8
    %v91 = vld [vmem:[%s90] sm:$0x1]
    %92 = vrot.lane.b32.xlu0 %v91, 48
    %v93 = vpop.permute.xlu0 %92
    %vm94 = vcmask 441728
    %95 = vst.msk [vmem:[#allocation0] sm:$0x1] %vm94, %v93
    %s96 = scalar_lea.vmem %s0, 7
    %v97 = vld [vmem:[%s96] sm:$0x1]
    %98 = vrot.lane.b32.xlu0 %v97, 42
    %v99 = vpop.permute.xlu0 %98
    %vm100 = vcmask 392528
    %101 = vst.msk [vmem:[#allocation0] sm:$0x1] %vm100, %v99
    %s102 = scalar_lea.vmem %s0, 6
    %v103 = vld [vmem:[%s102] sm:$0x1]
    %104 = vrot.lane.b32.xlu0 %v103, 36
    %v105 = vpop.permute.xlu0 %104
    %vm106 = vcmask 343328
    %107 = vst.msk [vmem:[#allocation0] sm:$0x1] %vm106, %v105
    %s108 = scalar_lea.vmem %s0, 5
    %v109 = vld [vmem:[%s108] sm:$0x1]
    %110 = vrot.lane.b32.xlu0 %v109, 30
    %v111 = vpop.permute.xlu0 %110
    %vm112 = vcmask 294128
    %113 = vst.msk [vmem:[#allocation0] sm:$0x1] %vm112, %v111
    %s114 = scalar_lea.vmem %s0, 4
    %v115 = vld [vmem:[%s114] sm:$0x1]
    %116 = vrot.lane.b32.xlu0 %v115, 24
    %v117 = vpop.permute.xlu0 %116
    %vm118 = vcmask 244928
    %119 = vst.msk [vmem:[#allocation0] sm:$0x1] %vm118, %v117
    %s120 = scalar_lea.vmem %s0, 3
    %v121 = vld [vmem:[%s120] sm:$0x1]
    %122 = vrot.lane.b32.xlu0 %v121, 18
    %v123 = vpop.permute.xlu0 %122
    %vm124 = vcmask 195728
    %125 = vst.msk [vmem:[#allocation0] sm:$0x1] %vm124, %v123
    %s126 = scalar_lea.vmem %s0, 2
    %v127 = vld [vmem:[%s126] sm:$0x1]
    %128 = vrot.lane.b32.xlu0 %v127, 12
    %v129 = vpop.permute.xlu0 %128
    %vm130 = vcmask 146528
    %131 = vst.msk [vmem:[#allocation0] sm:$0x1] %vm130, %v129
    %s132 = scalar_lea.vmem %s0, 23
    %v133 = vld [vmem:[%s132] sm:$0x1]
    %134 = vrot.lane.b32.xlu0 %v133, 10
    %v135 = vpop.permute.xlu0 %134
    %vm136 = vcmask 130128
    %s137 = scalar_lea.vmem [#allocation0], 8
    %138 = vst.msk [vmem:[%s137] sm:$0x1] %vm136, %v135
    %s139 = scalar_lea.vmem %s0, 1
    %v140 = vld [vmem:[%s139] sm:$0x1]
    %141 = vrot.lane.b32.xlu0 %v140, 6
    %v142 = vpop.permute.xlu0 %141
    %vm143 = vcmask 97328
    %144 = vst.msk [vmem:[#allocation0] sm:$0x1] %vm143, %v142
    %s145 = scalar_lea.vmem %s0, 22
    %v146 = vld [vmem:[%s145] sm:$0x1]
    %147 = vrot.lane.b32.xlu0 %v146, 4
    %v148 = vpop.permute.xlu0 %147
    %vm149 = vcmask 80928
    %s150 = scalar_lea.vmem [#allocation0], 8
    %151 = vst.msk [vmem:[%s150] sm:$0x1] %vm149, %v148
    %s153 = ssub.s32 2, 1
    %v154 = vld [vmem:[#allocation0] sm:%s153]
    %s156 = ssub.s32 2, 1
    %157 = vst [vmem:[%s1] sm:%s156] %v154
    %s158 = scalar_lea.vmem [#allocation0], 8
    %v159 = vld [vmem:[%s158] sm:%s153]
    %s161 = ssub.s32 2, 1
    %s162 = scalar_lea.vmem %s1, 1
    %163 = vst [vmem:[%s162] sm:%s161] %v159

// kernel: tile.18
$region0: #{tile.18}
  #allocation0 [shape = 's32[1]{0}', space=sflag, size = 0x4, scoped, tag = 'scoped memory for tile.18']
  %s0 = inlined_call_operand.vmem [shape: f32[16], index: 0, kind: input, shape index: {}]
  %s1 = inlined_call_operand.vmem [shape: f32[8,16], index: 1, kind: output, shape index: {}]
  // Predicated region
  $region2: #{tile.18} parent=0 // pred_check
    _
  $region3: #{tile.18} parent=0 // pred_check_branch
    %3 = sbr.rel (0) target = $region5
  $region4: #{tile.18} parent=0 // pred_region
    _
  $region5: #{tile.18} parent=0 // pred_fallthru
    _
  %v4 = vld [vmem:[%s0] ss:$0 sm:$0xff]
  %5 = vst [vmem:[%s1] sm:$0xff] %v4

// kernel: tile.19
$region0: #{tile.19}
  %s0 = inlined_call_operand.vmem [shape: f32[8,16], index: 0, kind: input, shape index: {}]
  %s1 = inlined_call_operand.vmem [shape: f32[1,128], index: 1, kind: output, shape index: {}]
  $region1: #{tile.19} parent=0
    #allocation0 [shape = 'u8[4096]{0}', space=vmem, size = 0x1000, scoped, tag = 'scoped mem for output reshape']
    %v2 = vld [vmem:[%s0] sm:$0x1]
    %vm3 = vcmask 130048
    %4 = vst.msk [vmem:[#allocation0] sm:$0x1] %vm3, %v2
    %s5 = scalar_lea.vmem %s0, 7
    %v6 = vld [vmem:[%s5] sm:$0x1]
    %7 = vrot.lane.b32.xlu0 %v6, 112
    %v8 = vpop.permute.xlu0 %7
    %vm9 = vcmask 1048448
    %10 = vst.msk [vmem:[#allocation0] sm:$0x1] %vm9, %v8
    %s11 = scalar_lea.vmem %s0, 6
    %v12 = vld [vmem:[%s11] sm:$0x1]
    %13 = vrot.lane.b32.xlu0 %v12, 96
    %v14 = vpop.permute.xlu0 %13
    %vm15 = vcmask 917248
    %16 = vst.msk [vmem:[#allocation0] sm:$0x1] %vm15, %v14
    %s17 = scalar_lea.vmem %s0, 5
    %v18 = vld [vmem:[%s17] sm:$0x1]
    %19 = vrot.lane.b32.xlu0 %v18, 80
    %v20 = vpop.permute.xlu0 %19
    %vm21 = vcmask 786048
    %22 = vst.msk [vmem:[#allocation0] sm:$0x1] %vm21, %v20
    %s23 = scalar_lea.vmem %s0, 4
    %v24 = vld [vmem:[%s23] sm:$0x1]
    %25 = vrot.lane.b32.xlu0 %v24, 64
    %v26 = vpop.permute.xlu0 %25
    %vm27 = vcmask 654848
    %28 = vst.msk [vmem:[#allocation0] sm:$0x1] %vm27, %v26
    %s29 = scalar_lea.vmem %s0, 3
    %v30 = vld [vmem:[%s29] sm:$0x1]
    %31 = vrot.lane.b32.xlu0 %v30, 48
    %v32 = vpop.permute.xlu0 %31
    %vm33 = vcmask 523648
    %34 = vst.msk [vmem:[#allocation0] sm:$0x1] %vm33, %v32
    %s35 = scalar_lea.vmem %s0, 2
    %v36 = vld [vmem:[%s35] sm:$0x1]
    %37 = vrot.lane.b32.xlu0 %v36, 32
    %v38 = vpop.permute.xlu0 %37
    %vm39 = vcmask 392448
    %40 = vst.msk [vmem:[#allocation0] sm:$0x1] %vm39, %v38
    %s41 = scalar_lea.vmem %s0, 1
    %v42 = vld [vmem:[%s41] sm:$0x1]
    %43 = vrot.lane.b32.xlu0 %v42, 16
    %v44 = vpop.permute.xlu0 %43
    %vm45 = vcmask 261248
    %46 = vst.msk [vmem:[#allocation0] sm:$0x1] %vm45, %v44
    %s48 = ssub.s32 2, 1
    %v49 = vld [vmem:[#allocation0] sm:%s48]
    %s51 = ssub.s32 2, 1
    %52 = vst [vmem:[%s1] sm:%s51] %v49

// kernel: convnet_forward.1
$region0: #{convnet_forward.1}
  #allocation0 [shape = 'u32[]', space=smem, size = 0x4, offset = 0x4, fixed_abs, tag = 'smem constant byte address 0x4 - core index']
  #allocation1 [shape = 'u32[72,128]{1,0:T(1,128)}', space=vmem, size = 0x9000, scoped, tag = 'internal scratch']
  %s0 = inlined_call_operand.vmem [shape: f32[448,28], index: 0, kind: input, shape index: {}]
  %s1 = inlined_call_operand.vmem [shape: bf16[5,28,144], index: 1, kind: input, shape index: {}]
  %s2 = inlined_call_operand.vmem [shape: f32[1,144], index: 2, kind: input, shape index: {}]
  %s3 = inlined_call_operand.vmem [shape: bf16[5,72,128], index: 3, kind: input, shape index: {}]
  %s4 = inlined_call_operand.vmem [shape: f32[1,128], index: 4, kind: input, shape index: {}]
  %s5 = inlined_call_operand.vmem [shape: bf16[256,128], index: 5, kind: input, shape index: {}]
  %s6 = inlined_call_operand.vmem [shape: f32[1,128], index: 6, kind: input, shape index: {}]
  %s7 = inlined_call_operand.vmem [shape: bf16[128,128], index: 7, kind: input, shape index: {}]
  %s8 = inlined_call_operand.vmem [shape: f32[1,128], index: 8, kind: input, shape index: {}]
  %s9 = inlined_call_operand.vmem [shape: bf16[128,128], index: 9, kind: input, shape index: {}]
  %s10 = inlined_call_operand.vmem [shape: f32[1,128], index: 10, kind: input, shape index: {}]
  %s11 = inlined_call_operand.vmem [shape: f32[16,128], index: 11, kind: output, shape index: {}]
  %s12 = sld [smem:[#allocation0]]
  $region54: #{convnet_forward.1} parent=0
    _
  %s14 = ssub.s32 1, %s12
  %s15 = scalar_select 0, %s14, %s12
  // Predicated region
  $region2: #{convnet_forward.1} parent=0 // pred_check
    _
  $region3: #{convnet_forward.1} parent=0 // pred_check_branch
    %17 = sbr.rel (0) target = $region5
  $region4: #{convnet_forward.1} parent=0 // pred_region
    _
  $region5: #{convnet_forward.1} parent=0 // pred_fallthru
    _
  // Predicated region
  $region6: #{convnet_forward.1} parent=0 // pred_check
    _
  $region7: #{convnet_forward.1} parent=0 // pred_check_branch
    %19 = sbr.rel (0) target = $region9
  $region8: #{convnet_forward.1} parent=0 // pred_region
    _
  $region9: #{convnet_forward.1} parent=0 // pred_fallthru
    _
  // Predicated region
  $region10: #{convnet_forward.1} parent=0 // pred_check
    _
  $region11: #{convnet_forward.1} parent=0 // pred_check_branch
    %21 = sbr.rel (0) target = $region13
  $region12: #{convnet_forward.1} parent=0 // pred_region
    _
  $region13: #{convnet_forward.1} parent=0 // pred_fallthru
    _
  // Predicated region
  $region14: #{convnet_forward.1} parent=0 // pred_check
    _
  $region15: #{convnet_forward.1} parent=0 // pred_check_branch
    %23 = sbr.rel (0) target = $region17
  $region16: #{convnet_forward.1} parent=0 // pred_region
    _
  $region17: #{convnet_forward.1} parent=0 // pred_fallthru
    _
  // Predicated region
  $region18: #{convnet_forward.1} parent=0 // pred_check
    _
  $region19: #{convnet_forward.1} parent=0 // pred_check_branch
    %25 = sbr.rel (0) target = $region21
  $region20: #{convnet_forward.1} parent=0 // pred_region
    _
  $region21: #{convnet_forward.1} parent=0 // pred_fallthru
    _
  // Predicated region
  $region22: #{convnet_forward.1} parent=0 // pred_check
    _
  $region23: #{convnet_forward.1} parent=0 // pred_check_branch
    %27 = sbr.rel (0) target = $region25
  $region24: #{convnet_forward.1} parent=0 // pred_region
    _
  $region25: #{convnet_forward.1} parent=0 // pred_fallthru
    _
  // Predicated region
  $region26: #{convnet_forward.1} parent=0 // pred_check
    _
  $region27: #{convnet_forward.1} parent=0 // pred_check_branch
    %29 = sbr.rel (0) target = $region29
  $region28: #{convnet_forward.1} parent=0 // pred_region
    _
  $region29: #{convnet_forward.1} parent=0 // pred_fallthru
    _
  // Predicated region
  $region30: #{convnet_forward.1} parent=0 // pred_check
    _
  $region31: #{convnet_forward.1} parent=0 // pred_check_branch
    %31 = sbr.rel (0) target = $region33
  $region32: #{convnet_forward.1} parent=0 // pred_region
    _
  $region33: #{convnet_forward.1} parent=0 // pred_fallthru
    _
  // Predicated region
  $region34: #{convnet_forward.1} parent=0 // pred_check
    _
  $region35: #{convnet_forward.1} parent=0 // pred_check_branch
    %33 = sbr.rel (0) target = $region37
  $region36: #{convnet_forward.1} parent=0 // pred_region
    _
  $region37: #{convnet_forward.1} parent=0 // pred_fallthru
    _
  // Predicated region
  $region38: #{convnet_forward.1} parent=0 // pred_check
    _
  $region39: #{convnet_forward.1} parent=0 // pred_check_branch
    %35 = sbr.rel (0) target = $region41
  $region40: #{convnet_forward.1} parent=0 // pred_region
    _
  $region41: #{convnet_forward.1} parent=0 // pred_fallthru
    _
  // Predicated region
  $region42: #{convnet_forward.1} parent=0 // pred_check
    _
  $region43: #{convnet_forward.1} parent=0 // pred_check_branch
    %37 = sbr.rel (0) target = $region45
  $region44: #{convnet_forward.1} parent=0 // pred_region
    _
  $region45: #{convnet_forward.1} parent=0 // pred_fallthru
    _
  %v39 = vld [vmem:[%s0] sm:$0xff]
  %v40 = vld [vmem:[%s0 + $0x8] sm:$0xff]
  %v41 = vld [vmem:[%s0 + $0x10] sm:$0xff]
  %v42 = vld [vmem:[%s0 + $0x18] sm:$0xff]
  %v43 = vld [vmem:[%s0 + $0x20] sm:$0xff]
  %v44 = vld [vmem:[%s0 + $0x28] sm:$0xff]
  %v45 = vld [vmem:[%s0 + $0x30] sm:$0xff]
  %v46 = vld [vmem:[%s0 + $0x38] sm:$0xff]
  %v47 = vld [vmem:[%s0 + $0x40] sm:$0xff]
  %v48 = vld [vmem:[%s0 + $0x48] sm:$0xff]
  %v49 = vld [vmem:[%s0 + $0x50] sm:$0xff]
  %v50 = vld [vmem:[%s0 + $0x58] sm:$0xff]
  %v51 = vld [vmem:[%s0 + $0x60] sm:$0xff]
  %v52 = vld [vmem:[%s0 + $0x68] sm:$0xff]
  %v53 = vld [vmem:[%s0 + $0x70] sm:$0xff]
  %v54 = vld [vmem:[%s0 + $0x78] sm:$0xff]
  %v55 = vld [vmem:[%s0 + $0x80] sm:$0xff]
  %v56 = vld [vmem:[%s0 + $0x88] sm:$0xff]
  %v57 = vld [vmem:[%s0 + $0x90] sm:$0xff]
  %v58 = vld [vmem:[%s0 + $0x98] sm:$0xff]
  %v59 = vld [vmem:[%s0 + $0xa0] sm:$0xff]
  %v60 = vld [vmem:[%s0 + $0xa8] sm:$0xff]
  %v61 = vld [vmem:[%s0 + $0xb0] sm:$0xff]
  %v62 = vld [vmem:[%s0 + $0xb8] sm:$0xff]
  %v63 = vld [vmem:[%s0 + $0xc0] sm:$0xff]
  %v64 = vld [vmem:[%s0 + $0xc8] sm:$0xff]
  %v65 = vld [vmem:[%s0 + $0xd0] sm:$0xff]
  %v66 = vld [vmem:[%s0 + $0xd8] sm:$0xff]
  %v67 = vld [vmem:[%s0 + $0xe0] sm:$0xff]
  %v68 = vld [vmem:[%s0 + $0xe8] sm:$0xff]
  %v69 = vld [vmem:[%s0 + $0xf0] sm:$0xff]
  %v70 = vld [vmem:[%s0 + $0xf8] sm:$0xff]
  %v71 = vld [vmem:[%s0 + $0x100] sm:$0xff]
  %v72 = vld [vmem:[%s0 + $0x108] sm:$0xff]
  %v73 = vld [vmem:[%s0 + $0x110] sm:$0xff]
  %v74 = vld [vmem:[%s0 + $0x118] sm:$0xff]
  %v75 = vld [vmem:[%s0 + $0x120] sm:$0xff]
  %v76 = vld [vmem:[%s0 + $0x128] sm:$0xff]
  %v77 = vld [vmem:[%s0 + $0x130] sm:$0xff]
  %v78 = vld [vmem:[%s0 + $0x138] sm:$0xff]
  %v79 = vld [vmem:[%s0 + $0x140] sm:$0xff]
  %v80 = vld [vmem:[%s0 + $0x148] sm:$0xff]
  %v81 = vld [vmem:[%s0 + $0x150] sm:$0xff]
  %v82 = vld [vmem:[%s0 + $0x158] sm:$0xff]
  %v83 = vld [vmem:[%s0 + $0x160] sm:$0xff]
  %v84 = vld [vmem:[%s0 + $0x168] sm:$0xff]
  %v85 = vld [vmem:[%s0 + $0x170] sm:$0xff]
  %v86 = vld [vmem:[%s0 + $0x178] sm:$0xff]
  %v87 = vld [vmem:[%s0 + $0x180] sm:$0xff]
  %v88 = vld [vmem:[%s0 + $0x188] sm:$0xff]
  %v89 = vld [vmem:[%s0 + $0x190] sm:$0xff]
  %v90 = vld [vmem:[%s0 + $0x198] sm:$0xff]
  %v91 = vld [vmem:[%s0 + $0x1a0] sm:$0xff]
  %v92 = vld [vmem:[%s0 + $0x1a8] sm:$0xff]
  %v93 = vld [vmem:[%s0 + $0x1b0] sm:$0xff]
  %v94 = vld [vmem:[%s0 + $0x1b8] sm:$0xff]
  %v95 = vpack.c.bf16 %v39, %v39
  %v96 = vpack.c.bf16 %v40, %v40
  %v97 = vpack.c.bf16 %v41, %v41
  %v98 = vpack.c.bf16 %v42, %v42
  %v99 = vpack.c.bf16 %v43, %v43
  %v100 = vpack.c.bf16 %v44, %v44
  %v101 = vpack.c.bf16 %v45, %v45
  %v102 = vpack.c.bf16 %v46, %v46
  %v103 = vpack.c.bf16 %v47, %v47
  %v104 = vpack.c.bf16 %v48, %v48
  %v105 = vpack.c.bf16 %v49, %v49
  %v106 = vpack.c.bf16 %v50, %v50
  %v107 = vpack.c.bf16 %v51, %v51
  %v108 = vpack.c.bf16 %v52, %v52
  %v109 = vpack.c.bf16 %v53, %v53
  %v110 = vpack.c.bf16 %v54, %v54
  %v111 = vpack.c.bf16 %v55, %v55
  %v112 = vpack.c.bf16 %v56, %v56
  %v113 = vpack.c.bf16 %v57, %v57
  %v114 = vpack.c.bf16 %v58, %v58
  %v115 = vpack.c.bf16 %v59, %v59
  %v116 = vpack.c.bf16 %v60, %v60
  %v117 = vpack.c.bf16 %v61, %v61
  %v118 = vpack.c.bf16 %v62, %v62
  %v119 = vpack.c.bf16 %v63, %v63
  %v120 = vpack.c.bf16 %v64, %v64
  %v121 = vpack.c.bf16 %v65, %v65
  %v122 = vpack.c.bf16 %v66, %v66
  %v123 = vpack.c.bf16 %v67, %v67
  %v124 = vpack.c.bf16 %v68, %v68
  %v125 = vpack.c.bf16 %v69, %v69
  %v126 = vpack.c.bf16 %v70, %v70
  %v127 = vpack.c.bf16 %v71, %v71
  %v128 = vpack.c.bf16 %v72, %v72
  %v129 = vpack.c.bf16 %v73, %v73
  %v130 = vpack.c.bf16 %v74, %v74
  %v131 = vpack.c.bf16 %v75, %v75
  %v132 = vpack.c.bf16 %v76, %v76
  %v133 = vpack.c.bf16 %v77, %v77
  %v134 = vpack.c.bf16 %v78, %v78
  %v135 = vpack.c.bf16 %v79, %v79
  %v136 = vpack.c.bf16 %v80, %v80
  %v137 = vpack.c.bf16 %v81, %v81
  %v138 = vpack.c.bf16 %v82, %v82
  %v139 = vpack.c.bf16 %v83, %v83
  %v140 = vpack.c.bf16 %v84, %v84
  %v141 = vpack.c.bf16 %v85, %v85
  %v142 = vpack.c.bf16 %v86, %v86
  %v143 = vpack.c.bf16 %v87, %v87
  %v144 = vpack.c.bf16 %v88, %v88
  %v145 = vpack.c.bf16 %v89, %v89
  %v146 = vpack.c.bf16 %v90, %v90
  %v147 = vpack.c.bf16 %v91, %v91
  %v148 = vpack.c.bf16 %v92, %v92
  %v149 = vpack.c.bf16 %v93, %v93
  %v150 = vpack.c.bf16 %v94, %v94
  %v151 = vld [vmem:[%s2] sm:$0x3]
  %v152 = vld [vmem:[%s1] sm:$0xff]
  %v153 = vld [vmem:[%s1 + $0x8] sm:$0xff]
  %v154 = vld [vmem:[%s1 + $0x10] sm:$0xff]
  %v155 = vld [vmem:[%s1 + $0x18] sm:$0x33]
  %s156 = scalar_lea.vmem %s1, 32
  %v157 = vld [vmem:[%s156] sm:$0xff]
  %v158 = vld [vmem:[%s156 + $0x8] sm:$0xff]
  %v159 = vld [vmem:[%s156 + $0x10] sm:$0xff]
  %v160 = vld [vmem:[%s156 + $0x18] sm:$0x33]
  %v173 = vunpack.c.l.b16 %v109
  %v174 = vunpack.c.l.b16 %v110
  %v175 = vunpack.c.l.b16 %v111
  %v176 = vunpack.c.l.b16 %v112
  %v177 = vunpack.c.l.b16 %v113
  %v178 = vunpack.c.l.b16 %v114
  %v179 = vunpack.c.l.b16 %v115
  %v180 = vunpack.c.l.b16 %v116
  %v181 = vunpack.c.l.b16 %v117
  %v182 = vunpack.c.l.b16 %v118
  %v183 = vunpack.c.l.b16 %v119
  %v184 = vunpack.c.l.b16 %v120
  %v185 = vpack.c.b16 %v174, %v173
  %v186 = vpack.c.b16 %v176, %v175
  %v187 = vpack.c.b16 %v178, %v177
  %v188 = vpack.c.b16 %v180, %v179
  %v189 = vpack.c.b16 %v182, %v181
  %v190 = vpack.c.b16 %v184, %v183
  %v195 = vunpack.c.l.b16 %v157
  %v196 = vunpack.c.h.b16 %v157
  %v197 = vunpack.c.l.b16 %v158
  %v198 = vunpack.c.h.b16 %v158
  %v199 = vunpack.c.l.b16 %v159
  %v200 = vunpack.c.h.b16 %v159
  %v201 = vunpack.c.l.b16 %v160
  %v202 = vunpack.c.h.b16 %v160
  %v203 = vpack.c.b16 %v197, %v195
  %v204 = vpack.c.b16 %v198, %v196
  %v205 = vpack.c.b16 %v201, %v199
  %v206 = vpack.c.b16 %v202, %v200
  %vm209 = vcmask 228352
  %v211 = vsel %vm209, %v185, 0
  %v214 = vsel %vm209, %v186, 0
  %v217 = vsel %vm209, %v187, 0
  %v220 = vsel %vm209, %v188, 0
  %v223 = vsel %vm209, %v189, 0
  %v226 = vsel %vm209, %v190, 0
  %vm228 = vcmask 1045504
  %v230 = vsel %vm228, %v205, 0
  %v233 = vsel %vm228, %v206, 0
  %235 = vmatpush.bf16.msra.mxu0 0
  %236 = vmatpush.bf16.msra.mxu0 0
  %237 = vmatpush.bf16.msra.mxu0 0
  %238 = vmatpush.bf16.msra.mxu0 0
  %239 = vmatpush.bf16.msra.mxu0 0
  %240 = vmatpush.bf16.msra.mxu0 0
  %241 = vmatpush.bf16.msra.mxu0 %v230
  %242 = vmatpush.bf16.msra.mxu0 %v203
  %243 = vmatmul.bf16.gmra.mxu0 %v211
  %v244 = vpop.f32.mrf.mxu0
  %v245 = vadd.f32 0.0, %v244
  %v246 = vpop.f32.mrf.mxu0
  %v247 = vadd.f32 0.0, %v246
  %248 = vmatmul.bf16.gmra.mxu0 %v214
  %v249 = vpop.f32.mrf.mxu0
  %v250 = vadd.f32 0.0, %v249
  %v251 = vpop.f32.mrf.mxu0
  %v252 = vadd.f32 0.0, %v251
  %253 = vmatmul.bf16.gmra.mxu0 %v217
  %v254 = vpop.f32.mrf.mxu0
  %v255 = vadd.f32 0.0, %v254
  %v256 = vpop.f32.mrf.mxu0
  %v257 = vadd.f32 0.0, %v256
  %258 = vmatmul.bf16.gmra.mxu0 %v220
  %v259 = vpop.f32.mrf.mxu0
  %v260 = vadd.f32 0.0, %v259
  %v261 = vpop.f32.mrf.mxu0
  %v262 = vadd.f32 0.0, %v261
  %263 = vmatmul.bf16.gmra.mxu0 %v223
  %v264 = vpop.f32.mrf.mxu0
  %v265 = vadd.f32 0.0, %v264
  %v266 = vpop.f32.mrf.mxu0
  %v267 = vadd.f32 0.0, %v266
  %268 = vmatmul.bf16.gmra.mxu0 %v226
  %v269 = vpop.f32.mrf.mxu0
  %v270 = vadd.f32 0.0, %v269
  %v271 = vpop.f32.mrf.mxu0
  %v272 = vadd.f32 0.0, %v271
  %273 = vdwg.mxu0
  %274 = vmatpush.bf16.msra.mxu0 0
  %275 = vmatpush.bf16.msra.mxu0 0
  %276 = vmatpush.bf16.msra.mxu0 0
  %277 = vmatpush.bf16.msra.mxu0 0
  %278 = vmatpush.bf16.msra.mxu0 0
  %279 = vmatpush.bf16.msra.mxu0 0
  %280 = vmatpush.bf16.msra.mxu0 %v233
  %281 = vmatpush.bf16.msra.mxu0 %v204
  %282 = vmatmul.bf16.gmra.mxu0 %v211
  %v283 = vpop.f32.mrf.mxu0
  %v284 = vadd.f32 0.0, %v283
  %v285 = vpop.f32.mrf.mxu0
  %v286 = vadd.f32 0.0, %v285
  %287 = vmatmul.bf16.gmra.mxu0 %v214
  %v288 = vpop.f32.mrf.mxu0
  %v289 = vadd.f32 0.0, %v288
  %v290 = vpop.f32.mrf.mxu0
  %v291 = vadd.f32 0.0, %v290
  %292 = vmatmul.bf16.gmra.mxu0 %v217
  %v293 = vpop.f32.mrf.mxu0
  %v294 = vadd.f32 0.0, %v293
  %v295 = vpop.f32.mrf.mxu0
  %v296 = vadd.f32 0.0, %v295
  %297 = vmatmul.bf16.gmra.mxu0 %v220
  %v298 = vpop.f32.mrf.mxu0
  %v299 = vadd.f32 0.0, %v298
  %v300 = vpop.f32.mrf.mxu0
  %v301 = vadd.f32 0.0, %v300
  %302 = vmatmul.bf16.gmra.mxu0 %v223
  %v303 = vpop.f32.mrf.mxu0
  %v304 = vadd.f32 0.0, %v303
  %v305 = vpop.f32.mrf.mxu0
  %v306 = vadd.f32 0.0, %v305
  %307 = vmatmul.bf16.gmra.mxu0 %v226
  %v308 = vpop.f32.mrf.mxu0
  %v309 = vadd.f32 0.0, %v308
  %v310 = vpop.f32.mrf.mxu0
  %v311 = vadd.f32 0.0, %v310
  %312 = vdwg.mxu0
  %v325 = vunpack.c.l.b16 %v95
  %v326 = vunpack.c.l.b16 %v96
  %v327 = vunpack.c.l.b16 %v97
  %v328 = vunpack.c.l.b16 %v98
  %v329 = vunpack.c.l.b16 %v99
  %v330 = vunpack.c.l.b16 %v100
  %v331 = vunpack.c.l.b16 %v101
  %v332 = vunpack.c.l.b16 %v102
  %v333 = vunpack.c.l.b16 %v103
  %v334 = vunpack.c.l.b16 %v104
  %v335 = vunpack.c.l.b16 %v105
  %v336 = vunpack.c.l.b16 %v106
  %v337 = vpack.c.b16 %v326, %v325
  %v338 = vpack.c.b16 %v328, %v327
  %v339 = vpack.c.b16 %v330, %v329
  %v340 = vpack.c.b16 %v332, %v331
  %v341 = vpack.c.b16 %v334, %v333
  %v342 = vpack.c.b16 %v336, %v335
  %v347 = vunpack.c.l.b16 %v152
  %v348 = vunpack.c.h.b16 %v152
  %v349 = vunpack.c.l.b16 %v153
  %v350 = vunpack.c.h.b16 %v153
  %v351 = vunpack.c.l.b16 %v154
  %v352 = vunpack.c.h.b16 %v154
  %v353 = vunpack.c.l.b16 %v155
  %v354 = vunpack.c.h.b16 %v155
  %v355 = vpack.c.b16 %v349, %v347
  %v356 = vpack.c.b16 %v350, %v348
  %v357 = vpack.c.b16 %v353, %v351
  %v358 = vpack.c.b16 %v354, %v352
  %v362 = vsel %vm209, %v337, 0
  %v365 = vsel %vm209, %v338, 0
  %v368 = vsel %vm209, %v339, 0
  %v371 = vsel %vm209, %v340, 0
  %v374 = vsel %vm209, %v341, 0
  %v377 = vsel %vm209, %v342, 0
  %v380 = vsel %vm228, %v357, 0
  %v383 = vsel %vm228, %v358, 0
  %385 = vmatpush.bf16.msra.mxu0 0
  %386 = vmatpush.bf16.msra.mxu0 0
  %387 = vmatpush.bf16.msra.mxu0 0
  %388 = vmatpush.bf16.msra.mxu0 0
  %389 = vmatpush.bf16.msra.mxu0 0
  %390 = vmatpush.bf16.msra.mxu0 0
  %391 = vmatpush.bf16.msra.mxu0 %v380
  %392 = vmatpush.bf16.msra.mxu0 %v355
  %393 = vmatmul.bf16.gmra.mxu0 %v362
  %v394 = vpop.f32.mrf.mxu0
  %v395 = vadd.f32 %v245, %v394
  %v396 = vpop.f32.mrf.mxu0
  %v397 = vadd.f32 %v247, %v396
  %398 = vmatmul.bf16.gmra.mxu0 %v365
  %v399 = vpop.f32.mrf.mxu0
  %v400 = vadd.f32 %v250, %v399
  %v401 = vpop.f32.mrf.mxu0
  %v402 = vadd.f32 %v252, %v401
  %403 = vmatmul.bf16.gmra.mxu0 %v368
  %v404 = vpop.f32.mrf.mxu0
  %v405 = vadd.f32 %v255, %v404
  %v406 = vpop.f32.mrf.mxu0
  %v407 = vadd.f32 %v257, %v406
  %408 = vmatmul.bf16.gmra.mxu0 %v371
  %v409 = vpop.f32.mrf.mxu0
  %v410 = vadd.f32 %v260, %v409
  %v411 = vpop.f32.mrf.mxu0
  %v412 = vadd.f32 %v262, %v411
  %413 = vmatmul.bf16.gmra.mxu0 %v374
  %v414 = vpop.f32.mrf.mxu0
  %v415 = vadd.f32 %v265, %v414
  %v416 = vpop.f32.mrf.mxu0
  %v417 = vadd.f32 %v267, %v416
  %418 = vmatmul.bf16.gmra.mxu0 %v377
  %v419 = vpop.f32.mrf.mxu0
  %v420 = vadd.f32 %v270, %v419
  %v421 = vpop.f32.mrf.mxu0
  %v422 = vadd.f32 %v272, %v421
  %423 = vdwg.mxu0
  %424 = vmatpush.bf16.msra.mxu0 0
  %425 = vmatpush.bf16.msra.mxu0 0
  %426 = vmatpush.bf16.msra.mxu0 0
  %427 = vmatpush.bf16.msra.mxu0 0
  %428 = vmatpush.bf16.msra.mxu0 0
  %429 = vmatpush.bf16.msra.mxu0 0
  %430 = vmatpush.bf16.msra.mxu0 %v383
  %431 = vmatpush.bf16.msra.mxu0 %v356
  %432 = vmatmul.bf16.gmra.mxu0 %v362
  %v433 = vpop.f32.mrf.mxu0
  %v434 = vadd.f32 %v284, %v433
  %v435 = vpop.f32.mrf.mxu0
  %v436 = vadd.f32 %v286, %v435
  %437 = vmatmul.bf16.gmra.mxu0 %v365
  %v438 = vpop.f32.mrf.mxu0
  %v439 = vadd.f32 %v289, %v438
  %v440 = vpop.f32.mrf.mxu0
  %v441 = vadd.f32 %v291, %v440
  %442 = vmatmul.bf16.gmra.mxu0 %v368
  %v443 = vpop.f32.mrf.mxu0
  %v444 = vadd.f32 %v294, %v443
  %v445 = vpop.f32.mrf.mxu0
  %v446 = vadd.f32 %v296, %v445
  %447 = vmatmul.bf16.gmra.mxu0 %v371
  %v448 = vpop.f32.mrf.mxu0
  %v449 = vadd.f32 %v299, %v448
  %v450 = vpop.f32.mrf.mxu0
  %v451 = vadd.f32 %v301, %v450
  %452 = vmatmul.bf16.gmra.mxu0 %v374
  %v453 = vpop.f32.mrf.mxu0
  %v454 = vadd.f32 %v304, %v453
  %v455 = vpop.f32.mrf.mxu0
  %v456 = vadd.f32 %v306, %v455
  %457 = vmatmul.bf16.gmra.mxu0 %v377
  %v458 = vpop.f32.mrf.mxu0
  %v459 = vadd.f32 %v309, %v458
  %v460 = vpop.f32.mrf.mxu0
  %v461 = vadd.f32 %v311, %v460
  %462 = vdwg.mxu0
  %s463 = scalar_lea.vmem %s1, 64
  %v464 = vld [vmem:[%s463] sm:$0xff]
  %v465 = vld [vmem:[%s463 + $0x8] sm:$0xff]
  %v466 = vld [vmem:[%s463 + $0x10] sm:$0xff]
  %v467 = vld [vmem:[%s463 + $0x18] sm:$0x33]
  %v480 = vunpack.c.l.b16 %v123
  %v481 = vunpack.c.l.b16 %v124
  %v482 = vunpack.c.l.b16 %v125
  %v483 = vunpack.c.l.b16 %v126
  %v484 = vunpack.c.l.b16 %v127
  %v485 = vunpack.c.l.b16 %v128
  %v486 = vunpack.c.l.b16 %v129
  %v487 = vunpack.c.l.b16 %v130
  %v488 = vunpack.c.l.b16 %v131
  %v489 = vunpack.c.l.b16 %v132
  %v490 = vunpack.c.l.b16 %v133
  %v491 = vunpack.c.l.b16 %v134
  %v492 = vpack.c.b16 %v481, %v480
  %v493 = vpack.c.b16 %v483, %v482
  %v494 = vpack.c.b16 %v485, %v484
  %v495 = vpack.c.b16 %v487, %v486
  %v496 = vpack.c.b16 %v489, %v488
  %v497 = vpack.c.b16 %v491, %v490
  %v502 = vunpack.c.l.b16 %v464
  %v503 = vunpack.c.h.b16 %v464
  %v504 = vunpack.c.l.b16 %v465
  %v505 = vunpack.c.h.b16 %v465
  %v506 = vunpack.c.l.b16 %v466
  %v507 = vunpack.c.h.b16 %v466
  %v508 = vunpack.c.l.b16 %v467
  %v509 = vunpack.c.h.b16 %v467
  %v510 = vpack.c.b16 %v504, %v502
  %v511 = vpack.c.b16 %v505, %v503
  %v512 = vpack.c.b16 %v508, %v506
  %v513 = vpack.c.b16 %v509, %v507
  %v517 = vsel %vm209, %v492, 0
  %v520 = vsel %vm209, %v493, 0
  %v523 = vsel %vm209, %v494, 0
  %v526 = vsel %vm209, %v495, 0
  %v529 = vsel %vm209, %v496, 0
  %v532 = vsel %vm209, %v497, 0
  %v535 = vsel %vm228, %v512, 0
  %v538 = vsel %vm228, %v513, 0
  %540 = vmatpush.bf16.msra.mxu0 0
  %541 = vmatpush.bf16.msra.mxu0 0
  %542 = vmatpush.bf16.msra.mxu0 0
  %543 = vmatpush.bf16.msra.mxu0 0
  %544 = vmatpush.bf16.msra.mxu0 0
  %545 = vmatpush.bf16.msra.mxu0 0
  %546 = vmatpush.bf16.msra.mxu0 %v535
  %547 = vmatpush.bf16.msra.mxu0 %v510
  %548 = vmatmul.bf16.gmra.mxu0 %v517
  %v549 = vpop.f32.mrf.mxu0
  %v550 = vadd.f32 0.0, %v549
  %v551 = vpop.f32.mrf.mxu0
  %v552 = vadd.f32 0.0, %v551
  %553 = vmatmul.bf16.gmra.mxu0 %v520
  %v554 = vpop.f32.mrf.mxu0
  %v555 = vadd.f32 0.0, %v554
  %v556 = vpop.f32.mrf.mxu0
  %v557 = vadd.f32 0.0, %v556
  %558 = vmatmul.bf16.gmra.mxu0 %v523
  %v559 = vpop.f32.mrf.mxu0
  %v560 = vadd.f32 0.0, %v559
  %v561 = vpop.f32.mrf.mxu0
  %v562 = vadd.f32 0.0, %v561
  %563 = vmatmul.bf16.gmra.mxu0 %v526
  %v564 = vpop.f32.mrf.mxu0
  %v565 = vadd.f32 0.0, %v564
  %v566 = vpop.f32.mrf.mxu0
  %v567 = vadd.f32 0.0, %v566
  %568 = vmatmul.bf16.gmra.mxu0 %v529
  %v569 = vpop.f32.mrf.mxu0
  %v570 = vadd.f32 0.0, %v569
  %v571 = vpop.f32.mrf.mxu0
  %v572 = vadd.f32 0.0, %v571
  %573 = vmatmul.bf16.gmra.mxu0 %v532
  %v574 = vpop.f32.mrf.mxu0
  %v575 = vadd.f32 0.0, %v574
  %v576 = vpop.f32.mrf.mxu0
  %v577 = vadd.f32 0.0, %v576
  %578 = vdwg.mxu0
  %579 = vmatpush.bf16.msra.mxu0 0
  %580 = vmatpush.bf16.msra.mxu0 0
  %581 = vmatpush.bf16.msra.mxu0 0
  %582 = vmatpush.bf16.msra.mxu0 0
  %583 = vmatpush.bf16.msra.mxu0 0
  %584 = vmatpush.bf16.msra.mxu0 0
  %585 = vmatpush.bf16.msra.mxu0 %v538
  %586 = vmatpush.bf16.msra.mxu0 %v511
  %587 = vmatmul.bf16.gmra.mxu0 %v517
  %v588 = vpop.f32.mrf.mxu0
  %v589 = vadd.f32 0.0, %v588
  %v590 = vpop.f32.mrf.mxu0
  %v591 = vadd.f32 0.0, %v590
  %592 = vmatmul.bf16.gmra.mxu0 %v520
  %v593 = vpop.f32.mrf.mxu0
  %v594 = vadd.f32 0.0, %v593
  %v595 = vpop.f32.mrf.mxu0
  %v596 = vadd.f32 0.0, %v595
  %597 = vmatmul.bf16.gmra.mxu0 %v523
  %v598 = vpop.f32.mrf.mxu0
  %v599 = vadd.f32 0.0, %v598
  %v600 = vpop.f32.mrf.mxu0
  %v601 = vadd.f32 0.0, %v600
  %602 = vmatmul.bf16.gmra.mxu0 %v526
  %v603 = vpop.f32.mrf.mxu0
  %v604 = vadd.f32 0.0, %v603
  %v605 = vpop.f32.mrf.mxu0
  %v606 = vadd.f32 0.0, %v605
  %607 = vmatmul.bf16.gmra.mxu0 %v529
  %v608 = vpop.f32.mrf.mxu0
  %v609 = vadd.f32 0.0, %v608
  %v610 = vpop.f32.mrf.mxu0
  %v611 = vadd.f32 0.0, %v610
  %612 = vmatmul.bf16.gmra.mxu0 %v532
  %v613 = vpop.f32.mrf.mxu0
  %v614 = vadd.f32 0.0, %v613
  %v615 = vpop.f32.mrf.mxu0
  %v616 = vadd.f32 0.0, %v615
  %617 = vdwg.mxu0
  %v618 = vadd.f32 %v395, %v550
  %v619 = vadd.f32 %v434, %v589
  %v620 = vadd.f32 %v397, %v552
  %v621 = vadd.f32 %v436, %v591
  %v622 = vadd.f32 %v400, %v555
  %v623 = vadd.f32 %v439, %v594
  %v624 = vadd.f32 %v402, %v557
  %v625 = vadd.f32 %v441, %v596
  %v626 = vadd.f32 %v405, %v560
  %v627 = vadd.f32 %v444, %v599
  %v628 = vadd.f32 %v407, %v562
  %v629 = vadd.f32 %v446, %v601
  %v630 = vadd.f32 %v410, %v565
  %v631 = vadd.f32 %v449, %v604
  %v632 = vadd.f32 %v412, %v567
  %v633 = vadd.f32 %v451, %v606
  %v634 = vadd.f32 %v415, %v570
  %v635 = vadd.f32 %v454, %v609
  %v636 = vadd.f32 %v417, %v572
  %v637 = vadd.f32 %v456, %v611
  %v638 = vadd.f32 %v420, %v575
  %v639 = vadd.f32 %v459, %v614
  %v640 = vadd.f32 %v422, %v577
  %v641 = vadd.f32 %v461, %v616
  %s642 = scalar_lea.vmem %s1, 96
  %v643 = vld [vmem:[%s642] sm:$0xff]
  %v644 = vld [vmem:[%s642 + $0x8] sm:$0xff]
  %v645 = vld [vmem:[%s642 + $0x10] sm:$0xff]
  %v646 = vld [vmem:[%s642 + $0x18] sm:$0x33]
  %v659 = vunpack.c.l.b16 %v137
  %v660 = vunpack.c.l.b16 %v138
  %v661 = vunpack.c.l.b16 %v139
  %v662 = vunpack.c.l.b16 %v140
  %v663 = vunpack.c.l.b16 %v141
  %v664 = vunpack.c.l.b16 %v142
  %v665 = vunpack.c.l.b16 %v143
  %v666 = vunpack.c.l.b16 %v144
  %v667 = vunpack.c.l.b16 %v145
  %v668 = vunpack.c.l.b16 %v146
  %v669 = vunpack.c.l.b16 %v147
  %v670 = vunpack.c.l.b16 %v148
  %v671 = vpack.c.b16 %v660, %v659
  %v672 = vpack.c.b16 %v662, %v661
  %v673 = vpack.c.b16 %v664, %v663
  %v674 = vpack.c.b16 %v666, %v665
  %v675 = vpack.c.b16 %v668, %v667
  %v676 = vpack.c.b16 %v670, %v669
  %v681 = vunpack.c.l.b16 %v643
  %v682 = vunpack.c.h.b16 %v643
  %v683 = vunpack.c.l.b16 %v644
  %v684 = vunpack.c.h.b16 %v644
  %v685 = vunpack.c.l.b16 %v645
  %v686 = vunpack.c.h.b16 %v645
  %v687 = vunpack.c.l.b16 %v646
  %v688 = vunpack.c.h.b16 %v646
  %v689 = vpack.c.b16 %v683, %v681
  %v690 = vpack.c.b16 %v684, %v682
  %v691 = vpack.c.b16 %v687, %v685
  %v692 = vpack.c.b16 %v688, %v686
  %v696 = vsel %vm209, %v671, 0
  %v699 = vsel %vm209, %v672, 0
  %v702 = vsel %vm209, %v673, 0
  %v705 = vsel %vm209, %v674, 0
  %v708 = vsel %vm209, %v675, 0
  %v711 = vsel %vm209, %v676, 0
  %v714 = vsel %vm228, %v691, 0
  %v717 = vsel %vm228, %v692, 0
  %719 = vmatpush.bf16.msra.mxu0 0
  %720 = vmatpush.bf16.msra.mxu0 0
  %721 = vmatpush.bf16.msra.mxu0 0
  %722 = vmatpush.bf16.msra.mxu0 0
  %723 = vmatpush.bf16.msra.mxu0 0
  %724 = vmatpush.bf16.msra.mxu0 0
  %725 = vmatpush.bf16.msra.mxu0 %v714
  %726 = vmatpush.bf16.msra.mxu0 %v689
  %727 = vmatmul.bf16.gmra.mxu0 %v696
  %v728 = vpop.f32.mrf.mxu0
  %v729 = vadd.f32 0.0, %v728
  %v730 = vpop.f32.mrf.mxu0
  %v731 = vadd.f32 0.0, %v730
  %732 = vmatmul.bf16.gmra.mxu0 %v699
  %v733 = vpop.f32.mrf.mxu0
  %v734 = vadd.f32 0.0, %v733
  %v735 = vpop.f32.mrf.mxu0
  %v736 = vadd.f32 0.0, %v735
  %737 = vmatmul.bf16.gmra.mxu0 %v702
  %v738 = vpop.f32.mrf.mxu0
  %v739 = vadd.f32 0.0, %v738
  %v740 = vpop.f32.mrf.mxu0
  %v741 = vadd.f32 0.0, %v740
  %742 = vmatmul.bf16.gmra.mxu0 %v705
  %v743 = vpop.f32.mrf.mxu0
  %v744 = vadd.f32 0.0, %v743
  %v745 = vpop.f32.mrf.mxu0
  %v746 = vadd.f32 0.0, %v745
  %747 = vmatmul.bf16.gmra.mxu0 %v708
  %v748 = vpop.f32.mrf.mxu0
  %v749 = vadd.f32 0.0, %v748
  %v750 = vpop.f32.mrf.mxu0
  %v751 = vadd.f32 0.0, %v750
  %752 = vmatmul.bf16.gmra.mxu0 %v711
  %v753 = vpop.f32.mrf.mxu0
  %v754 = vadd.f32 0.0, %v753
  %v755 = vpop.f32.mrf.mxu0
  %v756 = vadd.f32 0.0, %v755
  %757 = vdwg.mxu0
  %758 = vmatpush.bf16.msra.mxu0 0
  %759 = vmatpush.bf16.msra.mxu0 0
  %760 = vmatpush.bf16.msra.mxu0 0
  %761 = vmatpush.bf16.msra.mxu0 0
  %762 = vmatpush.bf16.msra.mxu0 0
  %763 = vmatpush.bf16.msra.mxu0 0
  %764 = vmatpush.bf16.msra.mxu0 %v717
  %765 = vmatpush.bf16.msra.mxu0 %v690
  %766 = vmatmul.bf16.gmra.mxu0 %v696
  %v767 = vpop.f32.mrf.mxu0
  %v768 = vadd.f32 0.0, %v767
  %v769 = vpop.f32.mrf.mxu0
  %v770 = vadd.f32 0.0, %v769
  %771 = vmatmul.bf16.gmra.mxu0 %v699
  %v772 = vpop.f32.mrf.mxu0
  %v773 = vadd.f32 0.0, %v772
  %v774 = vpop.f32.mrf.mxu0
  %v775 = vadd.f32 0.0, %v774
  %776 = vmatmul.bf16.gmra.mxu0 %v702
  %v777 = vpop.f32.mrf.mxu0
  %v778 = vadd.f32 0.0, %v777
  %v779 = vpop.f32.mrf.mxu0
  %v780 = vadd.f32 0.0, %v779
  %781 = vmatmul.bf16.gmra.mxu0 %v705
  %v782 = vpop.f32.mrf.mxu0
  %v783 = vadd.f32 0.0, %v782
  %v784 = vpop.f32.mrf.mxu0
  %v785 = vadd.f32 0.0, %v784
  %786 = vmatmul.bf16.gmra.mxu0 %v708
  %v787 = vpop.f32.mrf.mxu0
  %v788 = vadd.f32 0.0, %v787
  %v789 = vpop.f32.mrf.mxu0
  %v790 = vadd.f32 0.0, %v789
  %791 = vmatmul.bf16.gmra.mxu0 %v711
  %v792 = vpop.f32.mrf.mxu0
  %v793 = vadd.f32 0.0, %v792
  %v794 = vpop.f32.mrf.mxu0
  %v795 = vadd.f32 0.0, %v794
  %796 = vdwg.mxu0
  %v797 = vadd.f32 %v618, %v729
  %v798 = vadd.f32 %v619, %v768
  %v799 = vadd.f32 %v620, %v731
  %v800 = vadd.f32 %v621, %v770
  %v801 = vadd.f32 %v622, %v734
  %v802 = vadd.f32 %v623, %v773
  %v803 = vadd.f32 %v624, %v736
  %v804 = vadd.f32 %v625, %v775
  %v805 = vadd.f32 %v626, %v739
  %v806 = vadd.f32 %v627, %v778
  %v807 = vadd.f32 %v628, %v741
  %v808 = vadd.f32 %v629, %v780
  %v809 = vadd.f32 %v630, %v744
  %v810 = vadd.f32 %v631, %v783
  %v811 = vadd.f32 %v632, %v746
  %v812 = vadd.f32 %v633, %v785
  %v813 = vadd.f32 %v634, %v749
  %v814 = vadd.f32 %v635, %v788
  %v815 = vadd.f32 %v636, %v751
  %v816 = vadd.f32 %v637, %v790
  %v817 = vadd.f32 %v638, %v754
  %v818 = vadd.f32 %v639, %v793
  %v819 = vadd.f32 %v640, %v756
  %v820 = vadd.f32 %v641, %v795
  %s821 = scalar_lea.vmem %s1, 128
  %v822 = vld [vmem:[%s821] sm:$0xff]
  %v823 = vld [vmem:[%s821 + $0x8] sm:$0xff]
  %v824 = vld [vmem:[%s821 + $0x10] sm:$0xff]
  %v825 = vld [vmem:[%s821 + $0x18] sm:$0x33]
  %v828 = vunpack.c.l.b16 %v107
  %v829 = vunpack.c.l.b16 %v108
  %v830 = vpack.c.b16 %v829, %v828
  %v835 = vunpack.c.l.b16 %v822
  %v836 = vunpack.c.h.b16 %v822
  %v837 = vunpack.c.l.b16 %v823
  %v838 = vunpack.c.h.b16 %v823
  %v839 = vunpack.c.l.b16 %v824
  %v840 = vunpack.c.h.b16 %v824
  %v841 = vunpack.c.l.b16 %v825
  %v842 = vunpack.c.h.b16 %v825
  %v843 = vpack.c.b16 %v837, %v835
  %v844 = vpack.c.b16 %v838, %v836
  %v845 = vpack.c.b16 %v841, %v839
  %v846 = vpack.c.b16 %v842, %v840
  %v850 = vsel %vm209, %v830, 0
  %v853 = vsel %vm228, %v845, 0
  %v856 = vsel %vm228, %v846, 0
  %858 = vmatpush.bf16.msra.mxu0 0
  %859 = vmatpush.bf16.msra.mxu0 0
  %860 = vmatpush.bf16.msra.mxu0 0
  %861 = vmatpush.bf16.msra.mxu0 0
  %862 = vmatpush.bf16.msra.mxu0 0
  %863 = vmatpush.bf16.msra.mxu0 0
  %864 = vmatpush.bf16.msra.mxu0 %v853
  %865 = vmatpush.bf16.msra.mxu0 %v843
  %866 = vmatmul.bf16.gmra.mxu0 %v365
  %v867 = vpop.f32.mrf.mxu0
  %v868 = vadd.f32 0.0, %v867
  %v869 = vpop.f32.mrf.mxu0
  %v870 = vadd.f32 0.0, %v869
  %871 = vmatmul.bf16.gmra.mxu0 %v368
  %v872 = vpop.f32.mrf.mxu0
  %v873 = vadd.f32 0.0, %v872
  %v874 = vpop.f32.mrf.mxu0
  %v875 = vadd.f32 0.0, %v874
  %876 = vmatmul.bf16.gmra.mxu0 %v371
  %v877 = vpop.f32.mrf.mxu0
  %v878 = vadd.f32 0.0, %v877
  %v879 = vpop.f32.mrf.mxu0
  %v880 = vadd.f32 0.0, %v879
  %881 = vmatmul.bf16.gmra.mxu0 %v374
  %v882 = vpop.f32.mrf.mxu0
  %v883 = vadd.f32 0.0, %v882
  %v884 = vpop.f32.mrf.mxu0
  %v885 = vadd.f32 0.0, %v884
  %886 = vmatmul.bf16.gmra.mxu0 %v377
  %v887 = vpop.f32.mrf.mxu0
  %v888 = vadd.f32 0.0, %v887
  %v889 = vpop.f32.mrf.mxu0
  %v890 = vadd.f32 0.0, %v889
  %891 = vmatmul.bf16.gmra.mxu0 %v850
  %v892 = vpop.f32.mrf.mxu0
  %v893 = vadd.f32 0.0, %v892
  %v894 = vpop.f32.mrf.mxu0
  %v895 = vadd.f32 0.0, %v894
  %896 = vdwg.mxu0
  %897 = vmatpush.bf16.msra.mxu0 0
  %898 = vmatpush.bf16.msra.mxu0 0
  %899 = vmatpush.bf16.msra.mxu0 0
  %900 = vmatpush.bf16.msra.mxu0 0
  %901 = vmatpush.bf16.msra.mxu0 0
  %902 = vmatpush.bf16.msra.mxu0 0
  %903 = vmatpush.bf16.msra.mxu0 %v856
  %904 = vmatpush.bf16.msra.mxu0 %v844
  %905 = vmatmul.bf16.gmra.mxu0 %v365
  %v906 = vpop.f32.mrf.mxu0
  %v907 = vadd.f32 0.0, %v906
  %v908 = vpop.f32.mrf.mxu0
  %v909 = vadd.f32 0.0, %v908
  %910 = vmatmul.bf16.gmra.mxu0 %v368
  %v911 = vpop.f32.mrf.mxu0
  %v912 = vadd.f32 0.0, %v911
  %v913 = vpop.f32.mrf.mxu0
  %v914 = vadd.f32 0.0, %v913
  %915 = vmatmul.bf16.gmra.mxu0 %v371
  %v916 = vpop.f32.mrf.mxu0
  %v917 = vadd.f32 0.0, %v916
  %v918 = vpop.f32.mrf.mxu0
  %v919 = vadd.f32 0.0, %v918
  %920 = vmatmul.bf16.gmra.mxu0 %v374
  %v921 = vpop.f32.mrf.mxu0
  %v922 = vadd.f32 0.0, %v921
  %v923 = vpop.f32.mrf.mxu0
  %v924 = vadd.f32 0.0, %v923
  %925 = vmatmul.bf16.gmra.mxu0 %v377
  %v926 = vpop.f32.mrf.mxu0
  %v927 = vadd.f32 0.0, %v926
  %v928 = vpop.f32.mrf.mxu0
  %v929 = vadd.f32 0.0, %v928
  %930 = vmatmul.bf16.gmra.mxu0 %v850
  %v931 = vpop.f32.mrf.mxu0
  %v932 = vadd.f32 0.0, %v931
  %v933 = vpop.f32.mrf.mxu0
  %v934 = vadd.f32 0.0, %v933
  %935 = vdwg.mxu0
  %v936 = vadd.f32 %v797, %v868
  %v937 = vadd.f32 %v798, %v907
  %v938 = vadd.f32 %v799, %v870
  %v939 = vadd.f32 %v800, %v909
  %v940 = vadd.f32 %v801, %v873
  %v941 = vadd.f32 %v802, %v912
  %v942 = vadd.f32 %v803, %v875
  %v943 = vadd.f32 %v804, %v914
  %v944 = vadd.f32 %v805, %v878
  %v945 = vadd.f32 %v806, %v917
  %v946 = vadd.f32 %v807, %v880
  %v947 = vadd.f32 %v808, %v919
  %v948 = vadd.f32 %v809, %v883
  %v949 = vadd.f32 %v810, %v922
  %v950 = vadd.f32 %v811, %v885
  %v951 = vadd.f32 %v812, %v924
  %v952 = vadd.f32 %v813, %v888
  %v953 = vadd.f32 %v814, %v927
  %v954 = vadd.f32 %v815, %v890
  %v955 = vadd.f32 %v816, %v929
  %v956 = vadd.f32 %v817, %v893
  %v957 = vadd.f32 %v818, %v932
  %v958 = vadd.f32 %v819, %v895
  %v959 = vadd.f32 %v820, %v934
  %v961 = vperm.slane %v151, 0
  %v962 = vperm.slane %v151, 1
  %v965 = vadd.f32 %v936, %v961
  %v966 = vadd.f32 %v937, %v962
  %v967 = vadd.f32 %v938, %v961
  %v968 = vadd.f32 %v939, %v962
  %v969 = vadd.f32 %v940, %v961
  %v970 = vadd.f32 %v941, %v962
  %v971 = vadd.f32 %v942, %v961
  %v972 = vadd.f32 %v943, %v962
  %v973 = vadd.f32 %v944, %v961
  %v974 = vadd.f32 %v945, %v962
  %v975 = vadd.f32 %v946, %v961
  %v976 = vadd.f32 %v947, %v962
  %v977 = vadd.f32 %v948, %v961
  %v978 = vadd.f32 %v949, %v962
  %v979 = vadd.f32 %v950, %v961
  %v980 = vadd.f32 %v951, %v962
  %v981 = vadd.f32 %v952, %v961
  %v982 = vadd.f32 %v953, %v962
  %v983 = vadd.f32 %v954, %v961
  %v984 = vadd.f32 %v955, %v962
  %v985 = vadd.f32 %v956, %v961
  %v986 = vadd.f32 %v957, %v962
  %v987 = vadd.f32 %v958, %v961
  %v988 = vadd.f32 %v959, %v962
  %v989 = vmax.f32 %v965, 0.0
  %v990 = vmax.f32 %v966, 0.0
  %v991 = vmax.f32 %v967, 0.0
  %v992 = vmax.f32 %v968, 0.0
  %v993 = vmax.f32 %v969, 0.0
  %v994 = vmax.f32 %v970, 0.0
  %v995 = vmax.f32 %v971, 0.0
  %v996 = vmax.f32 %v972, 0.0
  %v997 = vmax.f32 %v973, 0.0
  %v998 = vmax.f32 %v974, 0.0
  %v999 = vmax.f32 %v975, 0.0
  %v1000 = vmax.f32 %v976, 0.0
  %v1001 = vmax.f32 %v977, 0.0
  %v1002 = vmax.f32 %v978, 0.0
  %v1003 = vmax.f32 %v979, 0.0
  %v1004 = vmax.f32 %v980, 0.0
  %v1005 = vmax.f32 %v981, 0.0
  %v1006 = vmax.f32 %v982, 0.0
  %v1007 = vmax.f32 %v983, 0.0
  %v1008 = vmax.f32 %v984, 0.0
  %v1009 = vmax.f32 %v985, 0.0
  %v1010 = vmax.f32 %v986, 0.0
  %v1011 = vmax.f32 %v987, 0.0
  %v1012 = vmax.f32 %v988, 0.0
  %1013 = vmatpush.bf16.msra.mxu0 0
  %1014 = vmatpush.bf16.msra.mxu0 0
  %1015 = vmatpush.bf16.msra.mxu0 0
  %1016 = vmatpush.bf16.msra.mxu0 0
  %1017 = vmatpush.bf16.msra.mxu0 0
  %1018 = vmatpush.bf16.msra.mxu0 0
  %1019 = vmatpush.bf16.msra.mxu0 %v230
  %1020 = vmatpush.bf16.msra.mxu0 %v203
  %1021 = vmatmul.bf16.gmra.mxu0 %v517
  %v1022 = vpop.f32.mrf.mxu0
  %v1023 = vadd.f32 0.0, %v1022
  %v1024 = vpop.f32.mrf.mxu0
  %v1025 = vadd.f32 0.0, %v1024
  %1026 = vmatmul.bf16.gmra.mxu0 %v520
  %v1027 = vpop.f32.mrf.mxu0
  %v1028 = vadd.f32 0.0, %v1027
  %v1029 = vpop.f32.mrf.mxu0
  %v1030 = vadd.f32 0.0, %v1029
  %1031 = vmatmul.bf16.gmra.mxu0 %v523
  %v1032 = vpop.f32.mrf.mxu0
  %v1033 = vadd.f32 0.0, %v1032
  %v1034 = vpop.f32.mrf.mxu0
  %v1035 = vadd.f32 0.0, %v1034
  %1036 = vmatmul.bf16.gmra.mxu0 %v526
  %v1037 = vpop.f32.mrf.mxu0
  %v1038 = vadd.f32 0.0, %v1037
  %v1039 = vpop.f32.mrf.mxu0
  %v1040 = vadd.f32 0.0, %v1039
  %1041 = vmatmul.bf16.gmra.mxu0 %v529
  %v1042 = vpop.f32.mrf.mxu0
  %v1043 = vadd.f32 0.0, %v1042
  %v1044 = vpop.f32.mrf.mxu0
  %v1045 = vadd.f32 0.0, %v1044
  %1046 = vmatmul.bf16.gmra.mxu0 %v532
  %v1047 = vpop.f32.mrf.mxu0
  %v1048 = vadd.f32 0.0, %v1047
  %v1049 = vpop.f32.mrf.mxu0
  %v1050 = vadd.f32 0.0, %v1049
  %1051 = vdwg.mxu0
  %1052 = vmatpush.bf16.msra.mxu0 0
  %1053 = vmatpush.bf16.msra.mxu0 0
  %1054 = vmatpush.bf16.msra.mxu0 0
  %1055 = vmatpush.bf16.msra.mxu0 0
  %1056 = vmatpush.bf16.msra.mxu0 0
  %1057 = vmatpush.bf16.msra.mxu0 0
  %1058 = vmatpush.bf16.msra.mxu0 %v233
  %1059 = vmatpush.bf16.msra.mxu0 %v204
  %1060 = vmatmul.bf16.gmra.mxu0 %v517
  %v1061 = vpop.f32.mrf.mxu0
  %v1062 = vadd.f32 0.0, %v1061
  %v1063 = vpop.f32.mrf.mxu0
  %v1064 = vadd.f32 0.0, %v1063
  %1065 = vmatmul.bf16.gmra.mxu0 %v520
  %v1066 = vpop.f32.mrf.mxu0
  %v1067 = vadd.f32 0.0, %v1066
  %v1068 = vpop.f32.mrf.mxu0
  %v1069 = vadd.f32 0.0, %v1068
  %1070 = vmatmul.bf16.gmra.mxu0 %v523
  %v1071 = vpop.f32.mrf.mxu0
  %v1072 = vadd.f32 0.0, %v1071
  %v1073 = vpop.f32.mrf.mxu0
  %v1074 = vadd.f32 0.0, %v1073
  %1075 = vmatmul.bf16.gmra.mxu0 %v526
  %v1076 = vpop.f32.mrf.mxu0
  %v1077 = vadd.f32 0.0, %v1076
  %v1078 = vpop.f32.mrf.mxu0
  %v1079 = vadd.f32 0.0, %v1078
  %1080 = vmatmul.bf16.gmra.mxu0 %v529
  %v1081 = vpop.f32.mrf.mxu0
  %v1082 = vadd.f32 0.0, %v1081
  %v1083 = vpop.f32.mrf.mxu0
  %v1084 = vadd.f32 0.0, %v1083
  %1085 = vmatmul.bf16.gmra.mxu0 %v532
  %v1086 = vpop.f32.mrf.mxu0
  %v1087 = vadd.f32 0.0, %v1086
  %v1088 = vpop.f32.mrf.mxu0
  %v1089 = vadd.f32 0.0, %v1088
  %1090 = vdwg.mxu0
  %1091 = vmatpush.bf16.msra.mxu0 0
  %1092 = vmatpush.bf16.msra.mxu0 0
  %1093 = vmatpush.bf16.msra.mxu0 0
  %1094 = vmatpush.bf16.msra.mxu0 0
  %1095 = vmatpush.bf16.msra.mxu0 0
  %1096 = vmatpush.bf16.msra.mxu0 0
  %1097 = vmatpush.bf16.msra.mxu0 %v380
  %1098 = vmatpush.bf16.msra.mxu0 %v355
  %1099 = vmatmul.bf16.gmra.mxu0 %v211
  %v1100 = vpop.f32.mrf.mxu0
  %v1101 = vadd.f32 %v1023, %v1100
  %v1102 = vpop.f32.mrf.mxu0
  %v1103 = vadd.f32 %v1025, %v1102
  %1104 = vmatmul.bf16.gmra.mxu0 %v214
  %v1105 = vpop.f32.mrf.mxu0
  %v1106 = vadd.f32 %v1028, %v1105
  %v1107 = vpop.f32.mrf.mxu0
  %v1108 = vadd.f32 %v1030, %v1107
  %1109 = vmatmul.bf16.gmra.mxu0 %v217
  %v1110 = vpop.f32.mrf.mxu0
  %v1111 = vadd.f32 %v1033, %v1110
  %v1112 = vpop.f32.mrf.mxu0
  %v1113 = vadd.f32 %v1035, %v1112
  %1114 = vmatmul.bf16.gmra.mxu0 %v220
  %v1115 = vpop.f32.mrf.mxu0
  %v1116 = vadd.f32 %v1038, %v1115
  %v1117 = vpop.f32.mrf.mxu0
  %v1118 = vadd.f32 %v1040, %v1117
  %1119 = vmatmul.bf16.gmra.mxu0 %v223
  %v1120 = vpop.f32.mrf.mxu0
  %v1121 = vadd.f32 %v1043, %v1120
  %v1122 = vpop.f32.mrf.mxu0
  %v1123 = vadd.f32 %v1045, %v1122
  %1124 = vmatmul.bf16.gmra.mxu0 %v226
  %v1125 = vpop.f32.mrf.mxu0
  %v1126 = vadd.f32 %v1048, %v1125
  %v1127 = vpop.f32.mrf.mxu0
  %v1128 = vadd.f32 %v1050, %v1127
  %1129 = vdwg.mxu0
  %1130 = vmatpush.bf16.msra.mxu0 0
  %1131 = vmatpush.bf16.msra.mxu0 0
  %1132 = vmatpush.bf16.msra.mxu0 0
  %1133 = vmatpush.bf16.msra.mxu0 0
  %1134 = vmatpush.bf16.msra.mxu0 0
  %1135 = vmatpush.bf16.msra.mxu0 0
  %1136 = vmatpush.bf16.msra.mxu0 %v383
  %1137 = vmatpush.bf16.msra.mxu0 %v356
  %1138 = vmatmul.bf16.gmra.mxu0 %v211
  %v1139 = vpop.f32.mrf.mxu0
  %v1140 = vadd.f32 %v1062, %v1139
  %v1141 = vpop.f32.mrf.mxu0
  %v1142 = vadd.f32 %v1064, %v1141
  %1143 = vmatmul.bf16.gmra.mxu0 %v214
  %v1144 = vpop.f32.mrf.mxu0
  %v1145 = vadd.f32 %v1067, %v1144
  %v1146 = vpop.f32.mrf.mxu0
  %v1147 = vadd.f32 %v1069, %v1146
  %1148 = vmatmul.bf16.gmra.mxu0 %v217
  %v1149 = vpop.f32.mrf.mxu0
  %v1150 = vadd.f32 %v1072, %v1149
  %v1151 = vpop.f32.mrf.mxu0
  %v1152 = vadd.f32 %v1074, %v1151
  %1153 = vmatmul.bf16.gmra.mxu0 %v220
  %v1154 = vpop.f32.mrf.mxu0
  %v1155 = vadd.f32 %v1077, %v1154
  %v1156 = vpop.f32.mrf.mxu0
  %v1157 = vadd.f32 %v1079, %v1156
  %1158 = vmatmul.bf16.gmra.mxu0 %v223
  %v1159 = vpop.f32.mrf.mxu0
  %v1160 = vadd.f32 %v1082, %v1159
  %v1161 = vpop.f32.mrf.mxu0
  %v1162 = vadd.f32 %v1084, %v1161
  %1163 = vmatmul.bf16.gmra.mxu0 %v226
  %v1164 = vpop.f32.mrf.mxu0
  %v1165 = vadd.f32 %v1087, %v1164
  %v1166 = vpop.f32.mrf.mxu0
  %v1167 = vadd.f32 %v1089, %v1166
  %1168 = vdwg.mxu0
  %1169 = vmatpush.bf16.msra.mxu0 0
  %1170 = vmatpush.bf16.msra.mxu0 0
  %1171 = vmatpush.bf16.msra.mxu0 0
  %1172 = vmatpush.bf16.msra.mxu0 0
  %1173 = vmatpush.bf16.msra.mxu0 0
  %1174 = vmatpush.bf16.msra.mxu0 0
  %1175 = vmatpush.bf16.msra.mxu0 %v535
  %1176 = vmatpush.bf16.msra.mxu0 %v510
  %1177 = vmatmul.bf16.gmra.mxu0 %v696
  %v1178 = vpop.f32.mrf.mxu0
  %v1179 = vadd.f32 0.0, %v1178
  %v1180 = vpop.f32.mrf.mxu0
  %v1181 = vadd.f32 0.0, %v1180
  %1182 = vmatmul.bf16.gmra.mxu0 %v699
  %v1183 = vpop.f32.mrf.mxu0
  %v1184 = vadd.f32 0.0, %v1183
  %v1185 = vpop.f32.mrf.mxu0
  %v1186 = vadd.f32 0.0, %v1185
  %1187 = vmatmul.bf16.gmra.mxu0 %v702
  %v1188 = vpop.f32.mrf.mxu0
  %v1189 = vadd.f32 0.0, %v1188
  %v1190 = vpop.f32.mrf.mxu0
  %v1191 = vadd.f32 0.0, %v1190
  %1192 = vmatmul.bf16.gmra.mxu0 %v705
  %v1193 = vpop.f32.mrf.mxu0
  %v1194 = vadd.f32 0.0, %v1193
  %v1195 = vpop.f32.mrf.mxu0
  %v1196 = vadd.f32 0.0, %v1195
  %1197 = vmatmul.bf16.gmra.mxu0 %v708
  %v1198 = vpop.f32.mrf.mxu0
  %v1199 = vadd.f32 0.0, %v1198
  %v1200 = vpop.f32.mrf.mxu0
  %v1201 = vadd.f32 0.0, %v1200
  %1202 = vmatmul.bf16.gmra.mxu0 %v711
  %v1203 = vpop.f32.mrf.mxu0
  %v1204 = vadd.f32 0.0, %v1203
  %v1205 = vpop.f32.mrf.mxu0
  %v1206 = vadd.f32 0.0, %v1205
  %1207 = vdwg.mxu0
  %1208 = vmatpush.bf16.msra.mxu0 0
  %1209 = vmatpush.bf16.msra.mxu0 0
  %1210 = vmatpush.bf16.msra.mxu0 0
  %1211 = vmatpush.bf16.msra.mxu0 0
  %1212 = vmatpush.bf16.msra.mxu0 0
  %1213 = vmatpush.bf16.msra.mxu0 0
  %1214 = vmatpush.bf16.msra.mxu0 %v538
  %1215 = vmatpush.bf16.msra.mxu0 %v511
  %1216 = vmatmul.bf16.gmra.mxu0 %v696
  %v1217 = vpop.f32.mrf.mxu0
  %v1218 = vadd.f32 0.0, %v1217
  %v1219 = vpop.f32.mrf.mxu0
  %v1220 = vadd.f32 0.0, %v1219
  %1221 = vmatmul.bf16.gmra.mxu0 %v699
  %v1222 = vpop.f32.mrf.mxu0
  %v1223 = vadd.f32 0.0, %v1222
  %v1224 = vpop.f32.mrf.mxu0
  %v1225 = vadd.f32 0.0, %v1224
  %1226 = vmatmul.bf16.gmra.mxu0 %v702
  %v1227 = vpop.f32.mrf.mxu0
  %v1228 = vadd.f32 0.0, %v1227
  %v1229 = vpop.f32.mrf.mxu0
  %v1230 = vadd.f32 0.0, %v1229
  %1231 = vmatmul.bf16.gmra.mxu0 %v705
  %v1232 = vpop.f32.mrf.mxu0
  %v1233 = vadd.f32 0.0, %v1232
  %v1234 = vpop.f32.mrf.mxu0
  %v1235 = vadd.f32 0.0, %v1234
  %1236 = vmatmul.bf16.gmra.mxu0 %v708
  %v1237 = vpop.f32.mrf.mxu0
  %v1238 = vadd.f32 0.0, %v1237
  %v1239 = vpop.f32.mrf.mxu0
  %v1240 = vadd.f32 0.0, %v1239
  %1241 = vmatmul.bf16.gmra.mxu0 %v711
  %v1242 = vpop.f32.mrf.mxu0
  %v1243 = vadd.f32 0.0, %v1242
  %v1244 = vpop.f32.mrf.mxu0
  %v1245 = vadd.f32 0.0, %v1244
  %1246 = vdwg.mxu0
  %v1247 = vadd.f32 %v1101, %v1179
  %v1248 = vadd.f32 %v1140, %v1218
  %v1249 = vadd.f32 %v1103, %v1181
  %v1250 = vadd.f32 %v1142, %v1220
  %v1251 = vadd.f32 %v1106, %v1184
  %v1252 = vadd.f32 %v1145, %v1223
  %v1253 = vadd.f32 %v1108, %v1186
  %v1254 = vadd.f32 %v1147, %v1225
  %v1255 = vadd.f32 %v1111, %v1189
  %v1256 = vadd.f32 %v1150, %v1228
  %v1257 = vadd.f32 %v1113, %v1191
  %v1258 = vadd.f32 %v1152, %v1230
  %v1259 = vadd.f32 %v1116, %v1194
  %v1260 = vadd.f32 %v1155, %v1233
  %v1261 = vadd.f32 %v1118, %v1196
  %v1262 = vadd.f32 %v1157, %v1235
  %v1263 = vadd.f32 %v1121, %v1199
  %v1264 = vadd.f32 %v1160, %v1238
  %v1265 = vadd.f32 %v1123, %v1201
  %v1266 = vadd.f32 %v1162, %v1240
  %v1267 = vadd.f32 %v1126, %v1204
  %v1268 = vadd.f32 %v1165, %v1243
  %v1269 = vadd.f32 %v1128, %v1206
  %v1270 = vadd.f32 %v1167, %v1245
  %1271 = vmatpush.bf16.msra.mxu0 0
  %1272 = vmatpush.bf16.msra.mxu0 0
  %1273 = vmatpush.bf16.msra.mxu0 0
  %1274 = vmatpush.bf16.msra.mxu0 0
  %1275 = vmatpush.bf16.msra.mxu0 0
  %1276 = vmatpush.bf16.msra.mxu0 0
  %1277 = vmatpush.bf16.msra.mxu0 %v714
  %1278 = vmatpush.bf16.msra.mxu0 %v689
  %1279 = vmatmul.bf16.gmra.mxu0 %v365
  %v1280 = vpop.f32.mrf.mxu0
  %v1281 = vadd.f32 0.0, %v1280
  %v1282 = vpop.f32.mrf.mxu0
  %v1283 = vadd.f32 0.0, %v1282
  %1284 = vmatmul.bf16.gmra.mxu0 %v368
  %v1285 = vpop.f32.mrf.mxu0
  %v1286 = vadd.f32 0.0, %v1285
  %v1287 = vpop.f32.mrf.mxu0
  %v1288 = vadd.f32 0.0, %v1287
  %1289 = vmatmul.bf16.gmra.mxu0 %v371
  %v1290 = vpop.f32.mrf.mxu0
  %v1291 = vadd.f32 0.0, %v1290
  %v1292 = vpop.f32.mrf.mxu0
  %v1293 = vadd.f32 0.0, %v1292
  %1294 = vmatmul.bf16.gmra.mxu0 %v374
  %v1295 = vpop.f32.mrf.mxu0
  %v1296 = vadd.f32 0.0, %v1295
  %v1297 = vpop.f32.mrf.mxu0
  %v1298 = vadd.f32 0.0, %v1297
  %1299 = vmatmul.bf16.gmra.mxu0 %v377
  %v1300 = vpop.f32.mrf.mxu0
  %v1301 = vadd.f32 0.0, %v1300
  %v1302 = vpop.f32.mrf.mxu0
  %v1303 = vadd.f32 0.0, %v1302
  %1304 = vmatmul.bf16.gmra.mxu0 %v850
  %v1305 = vpop.f32.mrf.mxu0
  %v1306 = vadd.f32 0.0, %v1305
  %v1307 = vpop.f32.mrf.mxu0
  %v1308 = vadd.f32 0.0, %v1307
  %1309 = vdwg.mxu0
  %1310 = vmatpush.bf16.msra.mxu0 0
  %1311 = vmatpush.bf16.msra.mxu0 0
  %1312 = vmatpush.bf16.msra.mxu0 0
  %1313 = vmatpush.bf16.msra.mxu0 0
  %1314 = vmatpush.bf16.msra.mxu0 0
  %1315 = vmatpush.bf16.msra.mxu0 0
  %1316 = vmatpush.bf16.msra.mxu0 %v717
  %1317 = vmatpush.bf16.msra.mxu0 %v690
  %1318 = vmatmul.bf16.gmra.mxu0 %v365
  %v1319 = vpop.f32.mrf.mxu0
  %v1320 = vadd.f32 0.0, %v1319
  %v1321 = vpop.f32.mrf.mxu0
  %v1322 = vadd.f32 0.0, %v1321
  %1323 = vmatmul.bf16.gmra.mxu0 %v368
  %v1324 = vpop.f32.mrf.mxu0
  %v1325 = vadd.f32 0.0, %v1324
  %v1326 = vpop.f32.mrf.mxu0
  %v1327 = vadd.f32 0.0, %v1326
  %1328 = vmatmul.bf16.gmra.mxu0 %v371
  %v1329 = vpop.f32.mrf.mxu0
  %v1330 = vadd.f32 0.0, %v1329
  %v1331 = vpop.f32.mrf.mxu0
  %v1332 = vadd.f32 0.0, %v1331
  %1333 = vmatmul.bf16.gmra.mxu0 %v374
  %v1334 = vpop.f32.mrf.mxu0
  %v1335 = vadd.f32 0.0, %v1334
  %v1336 = vpop.f32.mrf.mxu0
  %v1337 = vadd.f32 0.0, %v1336
  %1338 = vmatmul.bf16.gmra.mxu0 %v377
  %v1339 = vpop.f32.mrf.mxu0
  %v1340 = vadd.f32 0.0, %v1339
  %v1341 = vpop.f32.mrf.mxu0
  %v1342 = vadd.f32 0.0, %v1341
  %1343 = vmatmul.bf16.gmra.mxu0 %v850
  %v1344 = vpop.f32.mrf.mxu0
  %v1345 = vadd.f32 0.0, %v1344
  %v1346 = vpop.f32.mrf.mxu0
  %v1347 = vadd.f32 0.0, %v1346
  %1348 = vdwg.mxu0
  %v1349 = vadd.f32 %v1247, %v1281
  %v1350 = vadd.f32 %v1248, %v1320
  %v1351 = vadd.f32 %v1249, %v1283
  %v1352 = vadd.f32 %v1250, %v1322
  %v1353 = vadd.f32 %v1251, %v1286
  %v1354 = vadd.f32 %v1252, %v1325
  %v1355 = vadd.f32 %v1253, %v1288
  %v1356 = vadd.f32 %v1254, %v1327
  %v1357 = vadd.f32 %v1255, %v1291
  %v1358 = vadd.f32 %v1256, %v1330
  %v1359 = vadd.f32 %v1257, %v1293
  %v1360 = vadd.f32 %v1258, %v1332
  %v1361 = vadd.f32 %v1259, %v1296
  %v1362 = vadd.f32 %v1260, %v1335
  %v1363 = vadd.f32 %v1261, %v1298
  %v1364 = vadd.f32 %v1262, %v1337
  %v1365 = vadd.f32 %v1263, %v1301
  %v1366 = vadd.f32 %v1264, %v1340
  %v1367 = vadd.f32 %v1265, %v1303
  %v1368 = vadd.f32 %v1266, %v1342
  %v1369 = vadd.f32 %v1267, %v1306
  %v1370 = vadd.f32 %v1268, %v1345
  %v1371 = vadd.f32 %v1269, %v1308
  %v1372 = vadd.f32 %v1270, %v1347
  %v1375 = vunpack.c.l.b16 %v121
  %v1376 = vunpack.c.l.b16 %v122
  %v1377 = vpack.c.b16 %v1376, %v1375
  %v1379 = vsel %vm209, %v1377, 0
  %1381 = vmatpush.bf16.msra.mxu0 0
  %1382 = vmatpush.bf16.msra.mxu0 0
  %1383 = vmatpush.bf16.msra.mxu0 0
  %1384 = vmatpush.bf16.msra.mxu0 0
  %1385 = vmatpush.bf16.msra.mxu0 0
  %1386 = vmatpush.bf16.msra.mxu0 0
  %1387 = vmatpush.bf16.msra.mxu0 %v853
  %1388 = vmatpush.bf16.msra.mxu0 %v843
  %1389 = vmatmul.bf16.gmra.mxu0 %v214
  %v1390 = vpop.f32.mrf.mxu0
  %v1391 = vadd.f32 0.0, %v1390
  %v1392 = vpop.f32.mrf.mxu0
  %v1393 = vadd.f32 0.0, %v1392
  %1394 = vmatmul.bf16.gmra.mxu0 %v217
  %v1395 = vpop.f32.mrf.mxu0
  %v1396 = vadd.f32 0.0, %v1395
  %v1397 = vpop.f32.mrf.mxu0
  %v1398 = vadd.f32 0.0, %v1397
  %1399 = vmatmul.bf16.gmra.mxu0 %v220
  %v1400 = vpop.f32.mrf.mxu0
  %v1401 = vadd.f32 0.0, %v1400
  %v1402 = vpop.f32.mrf.mxu0
  %v1403 = vadd.f32 0.0, %v1402
  %1404 = vmatmul.bf16.gmra.mxu0 %v223
  %v1405 = vpop.f32.mrf.mxu0
  %v1406 = vadd.f32 0.0, %v1405
  %v1407 = vpop.f32.mrf.mxu0
  %v1408 = vadd.f32 0.0, %v1407
  %1409 = vmatmul.bf16.gmra.mxu0 %v226
  %v1410 = vpop.f32.mrf.mxu0
  %v1411 = vadd.f32 0.0, %v1410
  %v1412 = vpop.f32.mrf.mxu0
  %v1413 = vadd.f32 0.0, %v1412
  %1414 = vmatmul.bf16.gmra.mxu0 %v1379
  %v1415 = vpop.f32.mrf.mxu0
  %v1416 = vadd.f32 0.0, %v1415
  %v1417 = vpop.f32.mrf.mxu0
  %v1418 = vadd.f32 0.0, %v1417
  %1419 = vdwg.mxu0
  %1420 = vmatpush.bf16.msra.mxu0 0
  %1421 = vmatpush.bf16.msra.mxu0 0
  %1422 = vmatpush.bf16.msra.mxu0 0
  %1423 = vmatpush.bf16.msra.mxu0 0
  %1424 = vmatpush.bf16.msra.mxu0 0
  %1425 = vmatpush.bf16.msra.mxu0 0
  %1426 = vmatpush.bf16.msra.mxu0 %v856
  %1427 = vmatpush.bf16.msra.mxu0 %v844
  %1428 = vmatmul.bf16.gmra.mxu0 %v214
  %v1429 = vpop.f32.mrf.mxu0
  %v1430 = vadd.f32 0.0, %v1429
  %v1431 = vpop.f32.mrf.mxu0
  %v1432 = vadd.f32 0.0, %v1431
  %1433 = vmatmul.bf16.gmra.mxu0 %v217
  %v1434 = vpop.f32.mrf.mxu0
  %v1435 = vadd.f32 0.0, %v1434
  %v1436 = vpop.f32.mrf.mxu0
  %v1437 = vadd.f32 0.0, %v1436
  %1438 = vmatmul.bf16.gmra.mxu0 %v220
  %v1439 = vpop.f32.mrf.mxu0
  %v1440 = vadd.f32 0.0, %v1439
  %v1441 = vpop.f32.mrf.mxu0
  %v1442 = vadd.f32 0.0, %v1441
  %1443 = vmatmul.bf16.gmra.mxu0 %v223
  %v1444 = vpop.f32.mrf.mxu0
  %v1445 = vadd.f32 0.0, %v1444
  %v1446 = vpop.f32.mrf.mxu0
  %v1447 = vadd.f32 0.0, %v1446
  %1448 = vmatmul.bf16.gmra.mxu0 %v226
  %v1449 = vpop.f32.mrf.mxu0
  %v1450 = vadd.f32 0.0, %v1449
  %v1451 = vpop.f32.mrf.mxu0
  %v1452 = vadd.f32 0.0, %v1451
  %1453 = vmatmul.bf16.gmra.mxu0 %v1379
  %v1454 = vpop.f32.mrf.mxu0
  %v1455 = vadd.f32 0.0, %v1454
  %v1456 = vpop.f32.mrf.mxu0
  %v1457 = vadd.f32 0.0, %v1456
  %1458 = vdwg.mxu0
  %v1459 = vadd.f32 %v1349, %v1391
  %v1460 = vadd.f32 %v1350, %v1430
  %v1461 = vadd.f32 %v1351, %v1393
  %v1462 = vadd.f32 %v1352, %v1432
  %v1463 = vadd.f32 %v1353, %v1396
  %v1464 = vadd.f32 %v1354, %v1435
  %v1465 = vadd.f32 %v1355, %v1398
  %v1466 = vadd.f32 %v1356, %v1437
  %v1467 = vadd.f32 %v1357, %v1401
  %v1468 = vadd.f32 %v1358, %v1440
  %v1469 = vadd.f32 %v1359, %v1403
  %v1470 = vadd.f32 %v1360, %v1442
  %v1471 = vadd.f32 %v1361, %v1406
  %v1472 = vadd.f32 %v1362, %v1445
  %v1473 = vadd.f32 %v1363, %v1408
  %v1474 = vadd.f32 %v1364, %v1447
  %v1475 = vadd.f32 %v1365, %v1411
  %v1476 = vadd.f32 %v1366, %v1450
  %v1477 = vadd.f32 %v1367, %v1413
  %v1478 = vadd.f32 %v1368, %v1452
  %v1479 = vadd.f32 %v1369, %v1416
  %v1480 = vadd.f32 %v1370, %v1455
  %v1481 = vadd.f32 %v1371, %v1418
  %v1482 = vadd.f32 %v1372, %v1457
  %v1483 = vadd.f32 %v1459, %v961
  %v1484 = vadd.f32 %v1460, %v962
  %v1485 = vadd.f32 %v1461, %v961
  %v1486 = vadd.f32 %v1462, %v962
  %v1487 = vadd.f32 %v1463, %v961
  %v1488 = vadd.f32 %v1464, %v962
  %v1489 = vadd.f32 %v1465, %v961
  %v1490 = vadd.f32 %v1466, %v962
  %v1491 = vadd.f32 %v1467, %v961
  %v1492 = vadd.f32 %v1468, %v962
  %v1493 = vadd.f32 %v1469, %v961
  %v1494 = vadd.f32 %v1470, %v962
  %v1495 = vadd.f32 %v1471, %v961
  %v1496 = vadd.f32 %v1472, %v962
  %v1497 = vadd.f32 %v1473, %v961
  %v1498 = vadd.f32 %v1474, %v962
  %v1499 = vadd.f32 %v1475, %v961
  %v1500 = vadd.f32 %v1476, %v962
  %v1501 = vadd.f32 %v1477, %v961
  %v1502 = vadd.f32 %v1478, %v962
  %v1503 = vadd.f32 %v1479, %v961
  %v1504 = vadd.f32 %v1480, %v962
  %v1505 = vadd.f32 %v1481, %v961
  %v1506 = vadd.f32 %v1482, %v962
  %v1507 = vmax.f32 %v1483, 0.0
  %v1508 = vmax.f32 %v1484, 0.0
  %v1509 = vmax.f32 %v1485, 0.0
  %v1510 = vmax.f32 %v1486, 0.0
  %v1511 = vmax.f32 %v1487, 0.0
  %v1512 = vmax.f32 %v1488, 0.0
  %v1513 = vmax.f32 %v1489, 0.0
  %v1514 = vmax.f32 %v1490, 0.0
  %v1515 = vmax.f32 %v1491, 0.0
  %v1516 = vmax.f32 %v1492, 0.0
  %v1517 = vmax.f32 %v1493, 0.0
  %v1518 = vmax.f32 %v1494, 0.0
  %v1519 = vmax.f32 %v1495, 0.0
  %v1520 = vmax.f32 %v1496, 0.0
  %v1521 = vmax.f32 %v1497, 0.0
  %v1522 = vmax.f32 %v1498, 0.0
  %v1523 = vmax.f32 %v1499, 0.0
  %v1524 = vmax.f32 %v1500, 0.0
  %v1525 = vmax.f32 %v1501, 0.0
  %v1526 = vmax.f32 %v1502, 0.0
  %v1527 = vmax.f32 %v1503, 0.0
  %v1528 = vmax.f32 %v1504, 0.0
  %v1529 = vmax.f32 %v1505, 0.0
  %v1530 = vmax.f32 %v1506, 0.0
  %1531 = vmatpush.bf16.msra.mxu0 0
  %1532 = vmatpush.bf16.msra.mxu0 0
  %1533 = vmatpush.bf16.msra.mxu0 0
  %1534 = vmatpush.bf16.msra.mxu0 0
  %1535 = vmatpush.bf16.msra.mxu0 0
  %1536 = vmatpush.bf16.msra.mxu0 0
  %1537 = vmatpush.bf16.msra.mxu0 %v230
  %1538 = vmatpush.bf16.msra.mxu0 %v203
  %1539 = vmatmul.bf16.gmra.mxu0 %v696
  %v1540 = vpop.f32.mrf.mxu0
  %v1541 = vadd.f32 0.0, %v1540
  %v1542 = vpop.f32.mrf.mxu0
  %v1543 = vadd.f32 0.0, %v1542
  %1544 = vmatmul.bf16.gmra.mxu0 %v699
  %v1545 = vpop.f32.mrf.mxu0
  %v1546 = vadd.f32 0.0, %v1545
  %v1547 = vpop.f32.mrf.mxu0
  %v1548 = vadd.f32 0.0, %v1547
  %1549 = vmatmul.bf16.gmra.mxu0 %v702
  %v1550 = vpop.f32.mrf.mxu0
  %v1551 = vadd.f32 0.0, %v1550
  %v1552 = vpop.f32.mrf.mxu0
  %v1553 = vadd.f32 0.0, %v1552
  %1554 = vmatmul.bf16.gmra.mxu0 %v705
  %v1555 = vpop.f32.mrf.mxu0
  %v1556 = vadd.f32 0.0, %v1555
  %v1557 = vpop.f32.mrf.mxu0
  %v1558 = vadd.f32 0.0, %v1557
  %1559 = vmatmul.bf16.gmra.mxu0 %v708
  %v1560 = vpop.f32.mrf.mxu0
  %v1561 = vadd.f32 0.0, %v1560
  %v1562 = vpop.f32.mrf.mxu0
  %v1563 = vadd.f32 0.0, %v1562
  %1564 = vmatmul.bf16.gmra.mxu0 %v711
  %v1565 = vpop.f32.mrf.mxu0
  %v1566 = vadd.f32 0.0, %v1565
  %v1567 = vpop.f32.mrf.mxu0
  %v1568 = vadd.f32 0.0, %v1567
  %1569 = vdwg.mxu0
  %1570 = vmatpush.bf16.msra.mxu0 0
  %1571 = vmatpush.bf16.msra.mxu0 0
  %1572 = vmatpush.bf16.msra.mxu0 0
  %1573 = vmatpush.bf16.msra.mxu0 0
  %1574 = vmatpush.bf16.msra.mxu0 0
  %1575 = vmatpush.bf16.msra.mxu0 0
  %1576 = vmatpush.bf16.msra.mxu0 %v233
  %1577 = vmatpush.bf16.msra.mxu0 %v204
  %1578 = vmatmul.bf16.gmra.mxu0 %v696
  %v1579 = vpop.f32.mrf.mxu0
  %v1580 = vadd.f32 0.0, %v1579
  %v1581 = vpop.f32.mrf.mxu0
  %v1582 = vadd.f32 0.0, %v1581
  %1583 = vmatmul.bf16.gmra.mxu0 %v699
  %v1584 = vpop.f32.mrf.mxu0
  %v1585 = vadd.f32 0.0, %v1584
  %v1586 = vpop.f32.mrf.mxu0
  %v1587 = vadd.f32 0.0, %v1586
  %1588 = vmatmul.bf16.gmra.mxu0 %v702
  %v1589 = vpop.f32.mrf.mxu0
  %v1590 = vadd.f32 0.0, %v1589
  %v1591 = vpop.f32.mrf.mxu0
  %v1592 = vadd.f32 0.0, %v1591
  %1593 = vmatmul.bf16.gmra.mxu0 %v705
  %v1594 = vpop.f32.mrf.mxu0
  %v1595 = vadd.f32 0.0, %v1594
  %v1596 = vpop.f32.mrf.mxu0
  %v1597 = vadd.f32 0.0, %v1596
  %1598 = vmatmul.bf16.gmra.mxu0 %v708
  %v1599 = vpop.f32.mrf.mxu0
  %v1600 = vadd.f32 0.0, %v1599
  %v1601 = vpop.f32.mrf.mxu0
  %v1602 = vadd.f32 0.0, %v1601
  %1603 = vmatmul.bf16.gmra.mxu0 %v711
  %v1604 = vpop.f32.mrf.mxu0
  %v1605 = vadd.f32 0.0, %v1604
  %v1606 = vpop.f32.mrf.mxu0
  %v1607 = vadd.f32 0.0, %v1606
  %1608 = vdwg.mxu0
  %1609 = vmatpush.bf16.msra.mxu0 0
  %1610 = vmatpush.bf16.msra.mxu0 0
  %1611 = vmatpush.bf16.msra.mxu0 0
  %1612 = vmatpush.bf16.msra.mxu0 0
  %1613 = vmatpush.bf16.msra.mxu0 0
  %1614 = vmatpush.bf16.msra.mxu0 0
  %1615 = vmatpush.bf16.msra.mxu0 %v380
  %1616 = vmatpush.bf16.msra.mxu0 %v355
  %1617 = vmatmul.bf16.gmra.mxu0 %v517
  %v1618 = vpop.f32.mrf.mxu0
  %v1619 = vadd.f32 %v1541, %v1618
  %v1620 = vpop.f32.mrf.mxu0
  %v1621 = vadd.f32 %v1543, %v1620
  %1622 = vmatmul.bf16.gmra.mxu0 %v520
  %v1623 = vpop.f32.mrf.mxu0
  %v1624 = vadd.f32 %v1546, %v1623
  %v1625 = vpop.f32.mrf.mxu0
  %v1626 = vadd.f32 %v1548, %v1625
  %1627 = vmatmul.bf16.gmra.mxu0 %v523
  %v1628 = vpop.f32.mrf.mxu0
  %v1629 = vadd.f32 %v1551, %v1628
  %v1630 = vpop.f32.mrf.mxu0
  %v1631 = vadd.f32 %v1553, %v1630
  %1632 = vmatmul.bf16.gmra.mxu0 %v526
  %v1633 = vpop.f32.mrf.mxu0
  %v1634 = vadd.f32 %v1556, %v1633
  %v1635 = vpop.f32.mrf.mxu0
  %v1636 = vadd.f32 %v1558, %v1635
  %1637 = vmatmul.bf16.gmra.mxu0 %v529
  %v1638 = vpop.f32.mrf.mxu0
  %v1639 = vadd.f32 %v1561, %v1638
  %v1640 = vpop.f32.mrf.mxu0
  %v1641 = vadd.f32 %v1563, %v1640
  %1642 = vmatmul.bf16.gmra.mxu0 %v532
  %v1643 = vpop.f32.mrf.mxu0
  %v1644 = vadd.f32 %v1566, %v1643
  %v1645 = vpop.f32.mrf.mxu0
  %v1646 = vadd.f32 %v1568, %v1645
  %1647 = vdwg.mxu0
  %1648 = vmatpush.bf16.msra.mxu0 0
  %1649 = vmatpush.bf16.msra.mxu0 0
  %1650 = vmatpush.bf16.msra.mxu0 0
  %1651 = vmatpush.bf16.msra.mxu0 0
  %1652 = vmatpush.bf16.msra.mxu0 0
  %1653 = vmatpush.bf16.msra.mxu0 0
  %1654 = vmatpush.bf16.msra.mxu0 %v383
  %1655 = vmatpush.bf16.msra.mxu0 %v356
  %1656 = vmatmul.bf16.gmra.mxu0 %v517
  %v1657 = vpop.f32.mrf.mxu0
  %v1658 = vadd.f32 %v1580, %v1657
  %v1659 = vpop.f32.mrf.mxu0
  %v1660 = vadd.f32 %v1582, %v1659
  %1661 = vmatmul.bf16.gmra.mxu0 %v520
  %v1662 = vpop.f32.mrf.mxu0
  %v1663 = vadd.f32 %v1585, %v1662
  %v1664 = vpop.f32.mrf.mxu0
  %v1665 = vadd.f32 %v1587, %v1664
  %1666 = vmatmul.bf16.gmra.mxu0 %v523
  %v1667 = vpop.f32.mrf.mxu0
  %v1668 = vadd.f32 %v1590, %v1667
  %v1669 = vpop.f32.mrf.mxu0
  %v1670 = vadd.f32 %v1592, %v1669
  %1671 = vmatmul.bf16.gmra.mxu0 %v526
  %v1672 = vpop.f32.mrf.mxu0
  %v1673 = vadd.f32 %v1595, %v1672
  %v1674 = vpop.f32.mrf.mxu0
  %v1675 = vadd.f32 %v1597, %v1674
  %1676 = vmatmul.bf16.gmra.mxu0 %v529
  %v1677 = vpop.f32.mrf.mxu0
  %v1678 = vadd.f32 %v1600, %v1677
  %v1679 = vpop.f32.mrf.mxu0
  %v1680 = vadd.f32 %v1602, %v1679
  %1681 = vmatmul.bf16.gmra.mxu0 %v532
  %v1682 = vpop.f32.mrf.mxu0
  %v1683 = vadd.f32 %v1605, %v1682
  %v1684 = vpop.f32.mrf.mxu0
  %v1685 = vadd.f32 %v1607, %v1684
  %1686 = vdwg.mxu0
  %1687 = vmatpush.bf16.msra.mxu0 0
  %1688 = vmatpush.bf16.msra.mxu0 0
  %1689 = vmatpush.bf16.msra.mxu0 0
  %1690 = vmatpush.bf16.msra.mxu0 0
  %1691 = vmatpush.bf16.msra.mxu0 0
  %1692 = vmatpush.bf16.msra.mxu0 0
  %1693 = vmatpush.bf16.msra.mxu0 %v535
  %1694 = vmatpush.bf16.msra.mxu0 %v510
  %1695 = vmatmul.bf16.gmra.mxu0 %v365
  %v1696 = vpop.f32.mrf.mxu0
  %v1697 = vadd.f32 0.0, %v1696
  %v1698 = vpop.f32.mrf.mxu0
  %v1699 = vadd.f32 0.0, %v1698
  %1700 = vmatmul.bf16.gmra.mxu0 %v368
  %v1701 = vpop.f32.mrf.mxu0
  %v1702 = vadd.f32 0.0, %v1701
  %v1703 = vpop.f32.mrf.mxu0
  %v1704 = vadd.f32 0.0, %v1703
  %1705 = vmatmul.bf16.gmra.mxu0 %v371
  %v1706 = vpop.f32.mrf.mxu0
  %v1707 = vadd.f32 0.0, %v1706
  %v1708 = vpop.f32.mrf.mxu0
  %v1709 = vadd.f32 0.0, %v1708
  %1710 = vmatmul.bf16.gmra.mxu0 %v374
  %v1711 = vpop.f32.mrf.mxu0
  %v1712 = vadd.f32 0.0, %v1711
  %v1713 = vpop.f32.mrf.mxu0
  %v1714 = vadd.f32 0.0, %v1713
  %1715 = vmatmul.bf16.gmra.mxu0 %v377
  %v1716 = vpop.f32.mrf.mxu0
  %v1717 = vadd.f32 0.0, %v1716
  %v1718 = vpop.f32.mrf.mxu0
  %v1719 = vadd.f32 0.0, %v1718
  %1720 = vmatmul.bf16.gmra.mxu0 %v850
  %v1721 = vpop.f32.mrf.mxu0
  %v1722 = vadd.f32 0.0, %v1721
  %v1723 = vpop.f32.mrf.mxu0
  %v1724 = vadd.f32 0.0, %v1723
  %1725 = vdwg.mxu0
  %1726 = vmatpush.bf16.msra.mxu0 0
  %1727 = vmatpush.bf16.msra.mxu0 0
  %1728 = vmatpush.bf16.msra.mxu0 0
  %1729 = vmatpush.bf16.msra.mxu0 0
  %1730 = vmatpush.bf16.msra.mxu0 0
  %1731 = vmatpush.bf16.msra.mxu0 0
  %1732 = vmatpush.bf16.msra.mxu0 %v538
  %1733 = vmatpush.bf16.msra.mxu0 %v511
  %1734 = vmatmul.bf16.gmra.mxu0 %v365
  %v1735 = vpop.f32.mrf.mxu0
  %v1736 = vadd.f32 0.0, %v1735
  %v1737 = vpop.f32.mrf.mxu0
  %v1738 = vadd.f32 0.0, %v1737
  %1739 = vmatmul.bf16.gmra.mxu0 %v368
  %v1740 = vpop.f32.mrf.mxu0
  %v1741 = vadd.f32 0.0, %v1740
  %v1742 = vpop.f32.mrf.mxu0
  %v1743 = vadd.f32 0.0, %v1742
  %1744 = vmatmul.bf16.gmra.mxu0 %v371
  %v1745 = vpop.f32.mrf.mxu0
  %v1746 = vadd.f32 0.0, %v1745
  %v1747 = vpop.f32.mrf.mxu0
  %v1748 = vadd.f32 0.0, %v1747
  %1749 = vmatmul.bf16.gmra.mxu0 %v374
  %v1750 = vpop.f32.mrf.mxu0
  %v1751 = vadd.f32 0.0, %v1750
  %v1752 = vpop.f32.mrf.mxu0
  %v1753 = vadd.f32 0.0, %v1752
  %1754 = vmatmul.bf16.gmra.mxu0 %v377
  %v1755 = vpop.f32.mrf.mxu0
  %v1756 = vadd.f32 0.0, %v1755
  %v1757 = vpop.f32.mrf.mxu0
  %v1758 = vadd.f32 0.0, %v1757
  %1759 = vmatmul.bf16.gmra.mxu0 %v850
  %v1760 = vpop.f32.mrf.mxu0
  %v1761 = vadd.f32 0.0, %v1760
  %v1762 = vpop.f32.mrf.mxu0
  %v1763 = vadd.f32 0.0, %v1762
  %1764 = vdwg.mxu0
  %v1765 = vadd.f32 %v1619, %v1697
  %v1766 = vadd.f32 %v1658, %v1736
  %v1767 = vadd.f32 %v1621, %v1699
  %v1768 = vadd.f32 %v1660, %v1738
  %v1769 = vadd.f32 %v1624, %v1702
  %v1770 = vadd.f32 %v1663, %v1741
  %v1771 = vadd.f32 %v1626, %v1704
  %v1772 = vadd.f32 %v1665, %v1743
  %v1773 = vadd.f32 %v1629, %v1707
  %v1774 = vadd.f32 %v1668, %v1746
  %v1775 = vadd.f32 %v1631, %v1709
  %v1776 = vadd.f32 %v1670, %v1748
  %v1777 = vadd.f32 %v1634, %v1712
  %v1778 = vadd.f32 %v1673, %v1751
  %v1779 = vadd.f32 %v1636, %v1714
  %v1780 = vadd.f32 %v1675, %v1753
  %v1781 = vadd.f32 %v1639, %v1717
  %v1782 = vadd.f32 %v1678, %v1756
  %v1783 = vadd.f32 %v1641, %v1719
  %v1784 = vadd.f32 %v1680, %v1758
  %v1785 = vadd.f32 %v1644, %v1722
  %v1786 = vadd.f32 %v1683, %v1761
  %v1787 = vadd.f32 %v1646, %v1724
  %v1788 = vadd.f32 %v1685, %v1763
  %1789 = vmatpush.bf16.msra.mxu0 0
  %1790 = vmatpush.bf16.msra.mxu0 0
  %1791 = vmatpush.bf16.msra.mxu0 0
  %1792 = vmatpush.bf16.msra.mxu0 0
  %1793 = vmatpush.bf16.msra.mxu0 0
  %1794 = vmatpush.bf16.msra.mxu0 0
  %1795 = vmatpush.bf16.msra.mxu0 %v714
  %1796 = vmatpush.bf16.msra.mxu0 %v689
  %1797 = vmatmul.bf16.gmra.mxu0 %v214
  %v1798 = vpop.f32.mrf.mxu0
  %v1799 = vadd.f32 0.0, %v1798
  %v1800 = vpop.f32.mrf.mxu0
  %v1801 = vadd.f32 0.0, %v1800
  %1802 = vmatmul.bf16.gmra.mxu0 %v217
  %v1803 = vpop.f32.mrf.mxu0
  %v1804 = vadd.f32 0.0, %v1803
  %v1805 = vpop.f32.mrf.mxu0
  %v1806 = vadd.f32 0.0, %v1805
  %1807 = vmatmul.bf16.gmra.mxu0 %v220
  %v1808 = vpop.f32.mrf.mxu0
  %v1809 = vadd.f32 0.0, %v1808
  %v1810 = vpop.f32.mrf.mxu0
  %v1811 = vadd.f32 0.0, %v1810
  %1812 = vmatmul.bf16.gmra.mxu0 %v223
  %v1813 = vpop.f32.mrf.mxu0
  %v1814 = vadd.f32 0.0, %v1813
  %v1815 = vpop.f32.mrf.mxu0
  %v1816 = vadd.f32 0.0, %v1815
  %1817 = vmatmul.bf16.gmra.mxu0 %v226
  %v1818 = vpop.f32.mrf.mxu0
  %v1819 = vadd.f32 0.0, %v1818
  %v1820 = vpop.f32.mrf.mxu0
  %v1821 = vadd.f32 0.0, %v1820
  %1822 = vmatmul.bf16.gmra.mxu0 %v1379
  %v1823 = vpop.f32.mrf.mxu0
  %v1824 = vadd.f32 0.0, %v1823
  %v1825 = vpop.f32.mrf.mxu0
  %v1826 = vadd.f32 0.0, %v1825
  %1827 = vdwg.mxu0
  %1828 = vmatpush.bf16.msra.mxu0 0
  %1829 = vmatpush.bf16.msra.mxu0 0
  %1830 = vmatpush.bf16.msra.mxu0 0
  %1831 = vmatpush.bf16.msra.mxu0 0
  %1832 = vmatpush.bf16.msra.mxu0 0
  %1833 = vmatpush.bf16.msra.mxu0 0
  %1834 = vmatpush.bf16.msra.mxu0 %v717
  %1835 = vmatpush.bf16.msra.mxu0 %v690
  %1836 = vmatmul.bf16.gmra.mxu0 %v214
  %v1837 = vpop.f32.mrf.mxu0
  %v1838 = vadd.f32 0.0, %v1837
  %v1839 = vpop.f32.mrf.mxu0
  %v1840 = vadd.f32 0.0, %v1839
  %1841 = vmatmul.bf16.gmra.mxu0 %v217
  %v1842 = vpop.f32.mrf.mxu0
  %v1843 = vadd.f32 0.0, %v1842
  %v1844 = vpop.f32.mrf.mxu0
  %v1845 = vadd.f32 0.0, %v1844
  %1846 = vmatmul.bf16.gmra.mxu0 %v220
  %v1847 = vpop.f32.mrf.mxu0
  %v1848 = vadd.f32 0.0, %v1847
  %v1849 = vpop.f32.mrf.mxu0
  %v1850 = vadd.f32 0.0, %v1849
  %1851 = vmatmul.bf16.gmra.mxu0 %v223
  %v1852 = vpop.f32.mrf.mxu0
  %v1853 = vadd.f32 0.0, %v1852
  %v1854 = vpop.f32.mrf.mxu0
  %v1855 = vadd.f32 0.0, %v1854
  %1856 = vmatmul.bf16.gmra.mxu0 %v226
  %v1857 = vpop.f32.mrf.mxu0
  %v1858 = vadd.f32 0.0, %v1857
  %v1859 = vpop.f32.mrf.mxu0
  %v1860 = vadd.f32 0.0, %v1859
  %1861 = vmatmul.bf16.gmra.mxu0 %v1379
  %v1862 = vpop.f32.mrf.mxu0
  %v1863 = vadd.f32 0.0, %v1862
  %v1864 = vpop.f32.mrf.mxu0
  %v1865 = vadd.f32 0.0, %v1864
  %1866 = vdwg.mxu0
  %v1867 = vadd.f32 %v1765, %v1799
  %v1868 = vadd.f32 %v1766, %v1838
  %v1869 = vadd.f32 %v1767, %v1801
  %v1870 = vadd.f32 %v1768, %v1840
  %v1871 = vadd.f32 %v1769, %v1804
  %v1872 = vadd.f32 %v1770, %v1843
  %v1873 = vadd.f32 %v1771, %v1806
  %v1874 = vadd.f32 %v1772, %v1845
  %v1875 = vadd.f32 %v1773, %v1809
  %v1876 = vadd.f32 %v1774, %v1848
  %v1877 = vadd.f32 %v1775, %v1811
  %v1878 = vadd.f32 %v1776, %v1850
  %v1879 = vadd.f32 %v1777, %v1814
  %v1880 = vadd.f32 %v1778, %v1853
  %v1881 = vadd.f32 %v1779, %v1816
  %v1882 = vadd.f32 %v1780, %v1855
  %v1883 = vadd.f32 %v1781, %v1819
  %v1884 = vadd.f32 %v1782, %v1858
  %v1885 = vadd.f32 %v1783, %v1821
  %v1886 = vadd.f32 %v1784, %v1860
  %v1887 = vadd.f32 %v1785, %v1824
  %v1888 = vadd.f32 %v1786, %v1863
  %v1889 = vadd.f32 %v1787, %v1826
  %v1890 = vadd.f32 %v1788, %v1865
  %v1893 = vunpack.c.l.b16 %v135
  %v1894 = vunpack.c.l.b16 %v136
  %v1895 = vpack.c.b16 %v1894, %v1893
  %v1897 = vsel %vm209, %v1895, 0
  %1899 = vmatpush.bf16.msra.mxu0 0
  %1900 = vmatpush.bf16.msra.mxu0 0
  %1901 = vmatpush.bf16.msra.mxu0 0
  %1902 = vmatpush.bf16.msra.mxu0 0
  %1903 = vmatpush.bf16.msra.mxu0 0
  %1904 = vmatpush.bf16.msra.mxu0 0
  %1905 = vmatpush.bf16.msra.mxu0 %v853
  %1906 = vmatpush.bf16.msra.mxu0 %v843
  %1907 = vmatmul.bf16.gmra.mxu0 %v520
  %v1908 = vpop.f32.mrf.mxu0
  %v1909 = vadd.f32 0.0, %v1908
  %v1910 = vpop.f32.mrf.mxu0
  %v1911 = vadd.f32 0.0, %v1910
  %1912 = vmatmul.bf16.gmra.mxu0 %v523
  %v1913 = vpop.f32.mrf.mxu0
  %v1914 = vadd.f32 0.0, %v1913
  %v1915 = vpop.f32.mrf.mxu0
  %v1916 = vadd.f32 0.0, %v1915
  %1917 = vmatmul.bf16.gmra.mxu0 %v526
  %v1918 = vpop.f32.mrf.mxu0
  %v1919 = vadd.f32 0.0, %v1918
  %v1920 = vpop.f32.mrf.mxu0
  %v1921 = vadd.f32 0.0, %v1920
  %1922 = vmatmul.bf16.gmra.mxu0 %v529
  %v1923 = vpop.f32.mrf.mxu0
  %v1924 = vadd.f32 0.0, %v1923
  %v1925 = vpop.f32.mrf.mxu0
  %v1926 = vadd.f32 0.0, %v1925
  %1927 = vmatmul.bf16.gmra.mxu0 %v532
  %v1928 = vpop.f32.mrf.mxu0
  %v1929 = vadd.f32 0.0, %v1928
  %v1930 = vpop.f32.mrf.mxu0
  %v1931 = vadd.f32 0.0, %v1930
  %1932 = vmatmul.bf16.gmra.mxu0 %v1897
  %v1933 = vpop.f32.mrf.mxu0
  %v1934 = vadd.f32 0.0, %v1933
  %v1935 = vpop.f32.mrf.mxu0
  %v1936 = vadd.f32 0.0, %v1935
  %1937 = vdwg.mxu0
  %1938 = vmatpush.bf16.msra.mxu0 0
  %1939 = vmatpush.bf16.msra.mxu0 0
  %1940 = vmatpush.bf16.msra.mxu0 0
  %1941 = vmatpush.bf16.msra.mxu0 0
  %1942 = vmatpush.bf16.msra.mxu0 0
  %1943 = vmatpush.bf16.msra.mxu0 0
  %1944 = vmatpush.bf16.msra.mxu0 %v856
  %1945 = vmatpush.bf16.msra.mxu0 %v844
  %1946 = vmatmul.bf16.gmra.mxu0 %v520
  %v1947 = vpop.f32.mrf.mxu0
  %v1948 = vadd.f32 0.0, %v1947
  %v1949 = vpop.f32.mrf.mxu0
  %v1950 = vadd.f32 0.0, %v1949
  %1951 = vmatmul.bf16.gmra.mxu0 %v523
  %v1952 = vpop.f32.mrf.mxu0
  %v1953 = vadd.f32 0.0, %v1952
  %v1954 = vpop.f32.mrf.mxu0
  %v1955 = vadd.f32 0.0, %v1954
  %1956 = vmatmul.bf16.gmra.mxu0 %v526
  %v1957 = vpop.f32.mrf.mxu0
  %v1958 = vadd.f32 0.0, %v1957
  %v1959 = vpop.f32.mrf.mxu0
  %v1960 = vadd.f32 0.0, %v1959
  %1961 = vmatmul.bf16.gmra.mxu0 %v529
  %v1962 = vpop.f32.mrf.mxu0
  %v1963 = vadd.f32 0.0, %v1962
  %v1964 = vpop.f32.mrf.mxu0
  %v1965 = vadd.f32 0.0, %v1964
  %1966 = vmatmul.bf16.gmra.mxu0 %v532
  %v1967 = vpop.f32.mrf.mxu0
  %v1968 = vadd.f32 0.0, %v1967
  %v1969 = vpop.f32.mrf.mxu0
  %v1970 = vadd.f32 0.0, %v1969
  %1971 = vmatmul.bf16.gmra.mxu0 %v1897
  %v1972 = vpop.f32.mrf.mxu0
  %v1973 = vadd.f32 0.0, %v1972
  %v1974 = vpop.f32.mrf.mxu0
  %v1975 = vadd.f32 0.0, %v1974
  %1976 = vdwg.mxu0
  %v1977 = vadd.f32 %v1867, %v1909
  %v1978 = vadd.f32 %v1868, %v1948
  %v1979 = vadd.f32 %v1869, %v1911
  %v1980 = vadd.f32 %v1870, %v1950
  %v1981 = vadd.f32 %v1871, %v1914
  %v1982 = vadd.f32 %v1872, %v1953
  %v1983 = vadd.f32 %v1873, %v1916
  %v1984 = vadd.f32 %v1874, %v1955
  %v1985 = vadd.f32 %v1875, %v1919
  %v1986 = vadd.f32 %v1876, %v1958
  %v1987 = vadd.f32 %v1877, %v1921
  %v1988 = vadd.f32 %v1878, %v1960
  %v1989 = vadd.f32 %v1879, %v1924
  %v1990 = vadd.f32 %v1880, %v1963
  %v1991 = vadd.f32 %v1881, %v1926
  %v1992 = vadd.f32 %v1882, %v1965
  %v1993 = vadd.f32 %v1883, %v1929
  %v1994 = vadd.f32 %v1884, %v1968
  %v1995 = vadd.f32 %v1885, %v1931
  %v1996 = vadd.f32 %v1886, %v1970
  %v1997 = vadd.f32 %v1887, %v1934
  %v1998 = vadd.f32 %v1888, %v1973
  %v1999 = vadd.f32 %v1889, %v1936
  %v2000 = vadd.f32 %v1890, %v1975
  %v2001 = vadd.f32 %v1977, %v961
  %v2002 = vadd.f32 %v1978, %v962
  %v2003 = vadd.f32 %v1979, %v961
  %v2004 = vadd.f32 %v1980, %v962
  %v2005 = vadd.f32 %v1981, %v961
  %v2006 = vadd.f32 %v1982, %v962
  %v2007 = vadd.f32 %v1983, %v961
  %v2008 = vadd.f32 %v1984, %v962
  %v2009 = vadd.f32 %v1985, %v961
  %v2010 = vadd.f32 %v1986, %v962
  %v2011 = vadd.f32 %v1987, %v961
  %v2012 = vadd.f32 %v1988, %v962
  %v2013 = vadd.f32 %v1989, %v961
  %v2014 = vadd.f32 %v1990, %v962
  %v2015 = vadd.f32 %v1991, %v961
  %v2016 = vadd.f32 %v1992, %v962
  %v2017 = vadd.f32 %v1993, %v961
  %v2018 = vadd.f32 %v1994, %v962
  %v2019 = vadd.f32 %v1995, %v961
  %v2020 = vadd.f32 %v1996, %v962
  %v2021 = vadd.f32 %v1997, %v961
  %v2022 = vadd.f32 %v1998, %v962
  %v2023 = vadd.f32 %v1999, %v961
  %v2024 = vadd.f32 %v2000, %v962
  %v2025 = vmax.f32 %v2001, 0.0
  %v2026 = vmax.f32 %v2002, 0.0
  %v2027 = vmax.f32 %v2003, 0.0
  %v2028 = vmax.f32 %v2004, 0.0
  %v2029 = vmax.f32 %v2005, 0.0
  %v2030 = vmax.f32 %v2006, 0.0
  %v2031 = vmax.f32 %v2007, 0.0
  %v2032 = vmax.f32 %v2008, 0.0
  %v2033 = vmax.f32 %v2009, 0.0
  %v2034 = vmax.f32 %v2010, 0.0
  %v2035 = vmax.f32 %v2011, 0.0
  %v2036 = vmax.f32 %v2012, 0.0
  %v2037 = vmax.f32 %v2013, 0.0
  %v2038 = vmax.f32 %v2014, 0.0
  %v2039 = vmax.f32 %v2015, 0.0
  %v2040 = vmax.f32 %v2016, 0.0
  %v2041 = vmax.f32 %v2017, 0.0
  %v2042 = vmax.f32 %v2018, 0.0
  %v2043 = vmax.f32 %v2019, 0.0
  %v2044 = vmax.f32 %v2020, 0.0
  %v2045 = vmax.f32 %v2021, 0.0
  %v2046 = vmax.f32 %v2022, 0.0
  %v2047 = vmax.f32 %v2023, 0.0
  %v2048 = vmax.f32 %v2024, 0.0
  %2049 = vmatpush.bf16.msra.mxu0 0
  %2050 = vmatpush.bf16.msra.mxu0 0
  %2051 = vmatpush.bf16.msra.mxu0 0
  %2052 = vmatpush.bf16.msra.mxu0 0
  %2053 = vmatpush.bf16.msra.mxu0 0
  %2054 = vmatpush.bf16.msra.mxu0 0
  %2055 = vmatpush.bf16.msra.mxu0 %v230
  %2056 = vmatpush.bf16.msra.mxu0 %v203
  %2057 = vmatmul.bf16.gmra.mxu0 %v365
  %v2058 = vpop.f32.mrf.mxu0
  %v2059 = vadd.f32 0.0, %v2058
  %v2060 = vpop.f32.mrf.mxu0
  %v2061 = vadd.f32 0.0, %v2060
  %2062 = vmatmul.bf16.gmra.mxu0 %v368
  %v2063 = vpop.f32.mrf.mxu0
  %v2064 = vadd.f32 0.0, %v2063
  %v2065 = vpop.f32.mrf.mxu0
  %v2066 = vadd.f32 0.0, %v2065
  %2067 = vmatmul.bf16.gmra.mxu0 %v371
  %v2068 = vpop.f32.mrf.mxu0
  %v2069 = vadd.f32 0.0, %v2068
  %v2070 = vpop.f32.mrf.mxu0
  %v2071 = vadd.f32 0.0, %v2070
  %2072 = vmatmul.bf16.gmra.mxu0 %v374
  %v2073 = vpop.f32.mrf.mxu0
  %v2074 = vadd.f32 0.0, %v2073
  %v2075 = vpop.f32.mrf.mxu0
  %v2076 = vadd.f32 0.0, %v2075
  %2077 = vmatmul.bf16.gmra.mxu0 %v377
  %v2078 = vpop.f32.mrf.mxu0
  %v2079 = vadd.f32 0.0, %v2078
  %v2080 = vpop.f32.mrf.mxu0
  %v2081 = vadd.f32 0.0, %v2080
  %2082 = vmatmul.bf16.gmra.mxu0 %v850
  %v2083 = vpop.f32.mrf.mxu0
  %v2084 = vadd.f32 0.0, %v2083
  %v2085 = vpop.f32.mrf.mxu0
  %v2086 = vadd.f32 0.0, %v2085
  %2087 = vdwg.mxu0
  %2088 = vmatpush.bf16.msra.mxu0 0
  %2089 = vmatpush.bf16.msra.mxu0 0
  %2090 = vmatpush.bf16.msra.mxu0 0
  %2091 = vmatpush.bf16.msra.mxu0 0
  %2092 = vmatpush.bf16.msra.mxu0 0
  %2093 = vmatpush.bf16.msra.mxu0 0
  %2094 = vmatpush.bf16.msra.mxu0 %v233
  %2095 = vmatpush.bf16.msra.mxu0 %v204
  %2096 = vmatmul.bf16.gmra.mxu0 %v365
  %v2097 = vpop.f32.mrf.mxu0
  %v2098 = vadd.f32 0.0, %v2097
  %v2099 = vpop.f32.mrf.mxu0
  %v2100 = vadd.f32 0.0, %v2099
  %2101 = vmatmul.bf16.gmra.mxu0 %v368
  %v2102 = vpop.f32.mrf.mxu0
  %v2103 = vadd.f32 0.0, %v2102
  %v2104 = vpop.f32.mrf.mxu0
  %v2105 = vadd.f32 0.0, %v2104
  %2106 = vmatmul.bf16.gmra.mxu0 %v371
  %v2107 = vpop.f32.mrf.mxu0
  %v2108 = vadd.f32 0.0, %v2107
  %v2109 = vpop.f32.mrf.mxu0
  %v2110 = vadd.f32 0.0, %v2109
  %2111 = vmatmul.bf16.gmra.mxu0 %v374
  %v2112 = vpop.f32.mrf.mxu0
  %v2113 = vadd.f32 0.0, %v2112
  %v2114 = vpop.f32.mrf.mxu0
  %v2115 = vadd.f32 0.0, %v2114
  %2116 = vmatmul.bf16.gmra.mxu0 %v377
  %v2117 = vpop.f32.mrf.mxu0
  %v2118 = vadd.f32 0.0, %v2117
  %v2119 = vpop.f32.mrf.mxu0
  %v2120 = vadd.f32 0.0, %v2119
  %2121 = vmatmul.bf16.gmra.mxu0 %v850
  %v2122 = vpop.f32.mrf.mxu0
  %v2123 = vadd.f32 0.0, %v2122
  %v2124 = vpop.f32.mrf.mxu0
  %v2125 = vadd.f32 0.0, %v2124
  %2126 = vdwg.mxu0
  %2127 = vmatpush.bf16.msra.mxu0 0
  %2128 = vmatpush.bf16.msra.mxu0 0
  %2129 = vmatpush.bf16.msra.mxu0 0
  %2130 = vmatpush.bf16.msra.mxu0 0
  %2131 = vmatpush.bf16.msra.mxu0 0
  %2132 = vmatpush.bf16.msra.mxu0 0
  %2133 = vmatpush.bf16.msra.mxu0 %v380
  %2134 = vmatpush.bf16.msra.mxu0 %v355
  %2135 = vmatmul.bf16.gmra.mxu0 %v696
  %v2136 = vpop.f32.mrf.mxu0
  %v2137 = vadd.f32 %v2059, %v2136
  %v2138 = vpop.f32.mrf.mxu0
  %v2139 = vadd.f32 %v2061, %v2138
  %2140 = vmatmul.bf16.gmra.mxu0 %v699
  %v2141 = vpop.f32.mrf.mxu0
  %v2142 = vadd.f32 %v2064, %v2141
  %v2143 = vpop.f32.mrf.mxu0
  %v2144 = vadd.f32 %v2066, %v2143
  %2145 = vmatmul.bf16.gmra.mxu0 %v702
  %v2146 = vpop.f32.mrf.mxu0
  %v2147 = vadd.f32 %v2069, %v2146
  %v2148 = vpop.f32.mrf.mxu0
  %v2149 = vadd.f32 %v2071, %v2148
  %2150 = vmatmul.bf16.gmra.mxu0 %v705
  %v2151 = vpop.f32.mrf.mxu0
  %v2152 = vadd.f32 %v2074, %v2151
  %v2153 = vpop.f32.mrf.mxu0
  %v2154 = vadd.f32 %v2076, %v2153
  %2155 = vmatmul.bf16.gmra.mxu0 %v708
  %v2156 = vpop.f32.mrf.mxu0
  %v2157 = vadd.f32 %v2079, %v2156
  %v2158 = vpop.f32.mrf.mxu0
  %v2159 = vadd.f32 %v2081, %v2158
  %2160 = vmatmul.bf16.gmra.mxu0 %v711
  %v2161 = vpop.f32.mrf.mxu0
  %v2162 = vadd.f32 %v2084, %v2161
  %v2163 = vpop.f32.mrf.mxu0
  %v2164 = vadd.f32 %v2086, %v2163
  %2165 = vdwg.mxu0
  %2166 = vmatpush.bf16.msra.mxu0 0
  %2167 = vmatpush.bf16.msra.mxu0 0
  %2168 = vmatpush.bf16.msra.mxu0 0
  %2169 = vmatpush.bf16.msra.mxu0 0
  %2170 = vmatpush.bf16.msra.mxu0 0
  %2171 = vmatpush.bf16.msra.mxu0 0
  %2172 = vmatpush.bf16.msra.mxu0 %v383
  %2173 = vmatpush.bf16.msra.mxu0 %v356
  %2174 = vmatmul.bf16.gmra.mxu0 %v696
  %v2175 = vpop.f32.mrf.mxu0
  %v2176 = vadd.f32 %v2098, %v2175
  %v2177 = vpop.f32.mrf.mxu0
  %v2178 = vadd.f32 %v2100, %v2177
  %2179 = vmatmul.bf16.gmra.mxu0 %v699
  %v2180 = vpop.f32.mrf.mxu0
  %v2181 = vadd.f32 %v2103, %v2180
  %v2182 = vpop.f32.mrf.mxu0
  %v2183 = vadd.f32 %v2105, %v2182
  %2184 = vmatmul.bf16.gmra.mxu0 %v702
  %v2185 = vpop.f32.mrf.mxu0
  %v2186 = vadd.f32 %v2108, %v2185
  %v2187 = vpop.f32.mrf.mxu0
  %v2188 = vadd.f32 %v2110, %v2187
  %2189 = vmatmul.bf16.gmra.mxu0 %v705
  %v2190 = vpop.f32.mrf.mxu0
  %v2191 = vadd.f32 %v2113, %v2190
  %v2192 = vpop.f32.mrf.mxu0
  %v2193 = vadd.f32 %v2115, %v2192
  %2194 = vmatmul.bf16.gmra.mxu0 %v708
  %v2195 = vpop.f32.mrf.mxu0
  %v2196 = vadd.f32 %v2118, %v2195
  %v2197 = vpop.f32.mrf.mxu0
  %v2198 = vadd.f32 %v2120, %v2197
  %2199 = vmatmul.bf16.gmra.mxu0 %v711
  %v2200 = vpop.f32.mrf.mxu0
  %v2201 = vadd.f32 %v2123, %v2200
  %v2202 = vpop.f32.mrf.mxu0
  %v2203 = vadd.f32 %v2125, %v2202
  %2204 = vdwg.mxu0
  %2205 = vmatpush.bf16.msra.mxu0 0
  %2206 = vmatpush.bf16.msra.mxu0 0
  %2207 = vmatpush.bf16.msra.mxu0 0
  %2208 = vmatpush.bf16.msra.mxu0 0
  %2209 = vmatpush.bf16.msra.mxu0 0
  %2210 = vmatpush.bf16.msra.mxu0 0
  %2211 = vmatpush.bf16.msra.mxu0 %v535
  %2212 = vmatpush.bf16.msra.mxu0 %v510
  %2213 = vmatmul.bf16.gmra.mxu0 %v214
  %v2214 = vpop.f32.mrf.mxu0
  %v2215 = vadd.f32 0.0, %v2214
  %v2216 = vpop.f32.mrf.mxu0
  %v2217 = vadd.f32 0.0, %v2216
  %2218 = vmatmul.bf16.gmra.mxu0 %v217
  %v2219 = vpop.f32.mrf.mxu0
  %v2220 = vadd.f32 0.0, %v2219
  %v2221 = vpop.f32.mrf.mxu0
  %v2222 = vadd.f32 0.0, %v2221
  %2223 = vmatmul.bf16.gmra.mxu0 %v220
  %v2224 = vpop.f32.mrf.mxu0
  %v2225 = vadd.f32 0.0, %v2224
  %v2226 = vpop.f32.mrf.mxu0
  %v2227 = vadd.f32 0.0, %v2226
  %2228 = vmatmul.bf16.gmra.mxu0 %v223
  %v2229 = vpop.f32.mrf.mxu0
  %v2230 = vadd.f32 0.0, %v2229
  %v2231 = vpop.f32.mrf.mxu0
  %v2232 = vadd.f32 0.0, %v2231
  %2233 = vmatmul.bf16.gmra.mxu0 %v226
  %v2234 = vpop.f32.mrf.mxu0
  %v2235 = vadd.f32 0.0, %v2234
  %v2236 = vpop.f32.mrf.mxu0
  %v2237 = vadd.f32 0.0, %v2236
  %2238 = vmatmul.bf16.gmra.mxu0 %v1379
  %v2239 = vpop.f32.mrf.mxu0
  %v2240 = vadd.f32 0.0, %v2239
  %v2241 = vpop.f32.mrf.mxu0
  %v2242 = vadd.f32 0.0, %v2241
  %2243 = vdwg.mxu0
  %2244 = vmatpush.bf16.msra.mxu0 0
  %2245 = vmatpush.bf16.msra.mxu0 0
  %2246 = vmatpush.bf16.msra.mxu0 0
  %2247 = vmatpush.bf16.msra.mxu0 0
  %2248 = vmatpush.bf16.msra.mxu0 0
  %2249 = vmatpush.bf16.msra.mxu0 0
  %2250 = vmatpush.bf16.msra.mxu0 %v538
  %2251 = vmatpush.bf16.msra.mxu0 %v511
  %2252 = vmatmul.bf16.gmra.mxu0 %v214
  %v2253 = vpop.f32.mrf.mxu0
  %v2254 = vadd.f32 0.0, %v2253
  %v2255 = vpop.f32.mrf.mxu0
  %v2256 = vadd.f32 0.0, %v2255
  %2257 = vmatmul.bf16.gmra.mxu0 %v217
  %v2258 = vpop.f32.mrf.mxu0
  %v2259 = vadd.f32 0.0, %v2258
  %v2260 = vpop.f32.mrf.mxu0
  %v2261 = vadd.f32 0.0, %v2260
  %2262 = vmatmul.bf16.gmra.mxu0 %v220
  %v2263 = vpop.f32.mrf.mxu0
  %v2264 = vadd.f32 0.0, %v2263
  %v2265 = vpop.f32.mrf.mxu0
  %v2266 = vadd.f32 0.0, %v2265
  %2267 = vmatmul.bf16.gmra.mxu0 %v223
  %v2268 = vpop.f32.mrf.mxu0
  %v2269 = vadd.f32 0.0, %v2268
  %v2270 = vpop.f32.mrf.mxu0
  %v2271 = vadd.f32 0.0, %v2270
  %2272 = vmatmul.bf16.gmra.mxu0 %v226
  %v2273 = vpop.f32.mrf.mxu0
  %v2274 = vadd.f32 0.0, %v2273
  %v2275 = vpop.f32.mrf.mxu0
  %v2276 = vadd.f32 0.0, %v2275
  %2277 = vmatmul.bf16.gmra.mxu0 %v1379
  %v2278 = vpop.f32.mrf.mxu0
  %v2279 = vadd.f32 0.0, %v2278
  %v2280 = vpop.f32.mrf.mxu0
  %v2281 = vadd.f32 0.0, %v2280
  %2282 = vdwg.mxu0
  %v2283 = vadd.f32 %v2137, %v2215
  %v2284 = vadd.f32 %v2176, %v2254
  %v2285 = vadd.f32 %v2139, %v2217
  %v2286 = vadd.f32 %v2178, %v2256
  %v2287 = vadd.f32 %v2142, %v2220
  %v2288 = vadd.f32 %v2181, %v2259
  %v2289 = vadd.f32 %v2144, %v2222
  %v2290 = vadd.f32 %v2183, %v2261
  %v2291 = vadd.f32 %v2147, %v2225
  %v2292 = vadd.f32 %v2186, %v2264
  %v2293 = vadd.f32 %v2149, %v2227
  %v2294 = vadd.f32 %v2188, %v2266
  %v2295 = vadd.f32 %v2152, %v2230
  %v2296 = vadd.f32 %v2191, %v2269
  %v2297 = vadd.f32 %v2154, %v2232
  %v2298 = vadd.f32 %v2193, %v2271
  %v2299 = vadd.f32 %v2157, %v2235
  %v2300 = vadd.f32 %v2196, %v2274
  %v2301 = vadd.f32 %v2159, %v2237
  %v2302 = vadd.f32 %v2198, %v2276
  %v2303 = vadd.f32 %v2162, %v2240
  %v2304 = vadd.f32 %v2201, %v2279
  %v2305 = vadd.f32 %v2164, %v2242
  %v2306 = vadd.f32 %v2203, %v2281
  %2307 = vmatpush.bf16.msra.mxu0 0
  %2308 = vmatpush.bf16.msra.mxu0 0
  %2309 = vmatpush.bf16.msra.mxu0 0
  %2310 = vmatpush.bf16.msra.mxu0 0
  %2311 = vmatpush.bf16.msra.mxu0 0
  %2312 = vmatpush.bf16.msra.mxu0 0
  %2313 = vmatpush.bf16.msra.mxu0 %v714
  %2314 = vmatpush.bf16.msra.mxu0 %v689
  %2315 = vmatmul.bf16.gmra.mxu0 %v520
  %v2316 = vpop.f32.mrf.mxu0
  %v2317 = vadd.f32 0.0, %v2316
  %v2318 = vpop.f32.mrf.mxu0
  %v2319 = vadd.f32 0.0, %v2318
  %2320 = vmatmul.bf16.gmra.mxu0 %v523
  %v2321 = vpop.f32.mrf.mxu0
  %v2322 = vadd.f32 0.0, %v2321
  %v2323 = vpop.f32.mrf.mxu0
  %v2324 = vadd.f32 0.0, %v2323
  %2325 = vmatmul.bf16.gmra.mxu0 %v526
  %v2326 = vpop.f32.mrf.mxu0
  %v2327 = vadd.f32 0.0, %v2326
  %v2328 = vpop.f32.mrf.mxu0
  %v2329 = vadd.f32 0.0, %v2328
  %2330 = vmatmul.bf16.gmra.mxu0 %v529
  %v2331 = vpop.f32.mrf.mxu0
  %v2332 = vadd.f32 0.0, %v2331
  %v2333 = vpop.f32.mrf.mxu0
  %v2334 = vadd.f32 0.0, %v2333
  %2335 = vmatmul.bf16.gmra.mxu0 %v532
  %v2336 = vpop.f32.mrf.mxu0
  %v2337 = vadd.f32 0.0, %v2336
  %v2338 = vpop.f32.mrf.mxu0
  %v2339 = vadd.f32 0.0, %v2338
  %2340 = vmatmul.bf16.gmra.mxu0 %v1897
  %v2341 = vpop.f32.mrf.mxu0
  %v2342 = vadd.f32 0.0, %v2341
  %v2343 = vpop.f32.mrf.mxu0
  %v2344 = vadd.f32 0.0, %v2343
  %2345 = vdwg.mxu0
  %2346 = vmatpush.bf16.msra.mxu0 0
  %2347 = vmatpush.bf16.msra.mxu0 0
  %2348 = vmatpush.bf16.msra.mxu0 0
  %2349 = vmatpush.bf16.msra.mxu0 0
  %2350 = vmatpush.bf16.msra.mxu0 0
  %2351 = vmatpush.bf16.msra.mxu0 0
  %2352 = vmatpush.bf16.msra.mxu0 %v717
  %2353 = vmatpush.bf16.msra.mxu0 %v690
  %2354 = vmatmul.bf16.gmra.mxu0 %v520
  %v2355 = vpop.f32.mrf.mxu0
  %v2356 = vadd.f32 0.0, %v2355
  %v2357 = vpop.f32.mrf.mxu0
  %v2358 = vadd.f32 0.0, %v2357
  %2359 = vmatmul.bf16.gmra.mxu0 %v523
  %v2360 = vpop.f32.mrf.mxu0
  %v2361 = vadd.f32 0.0, %v2360
  %v2362 = vpop.f32.mrf.mxu0
  %v2363 = vadd.f32 0.0, %v2362
  %2364 = vmatmul.bf16.gmra.mxu0 %v526
  %v2365 = vpop.f32.mrf.mxu0
  %v2366 = vadd.f32 0.0, %v2365
  %v2367 = vpop.f32.mrf.mxu0
  %v2368 = vadd.f32 0.0, %v2367
  %2369 = vmatmul.bf16.gmra.mxu0 %v529
  %v2370 = vpop.f32.mrf.mxu0
  %v2371 = vadd.f32 0.0, %v2370
  %v2372 = vpop.f32.mrf.mxu0
  %v2373 = vadd.f32 0.0, %v2372
  %2374 = vmatmul.bf16.gmra.mxu0 %v532
  %v2375 = vpop.f32.mrf.mxu0
  %v2376 = vadd.f32 0.0, %v2375
  %v2377 = vpop.f32.mrf.mxu0
  %v2378 = vadd.f32 0.0, %v2377
  %2379 = vmatmul.bf16.gmra.mxu0 %v1897
  %v2380 = vpop.f32.mrf.mxu0
  %v2381 = vadd.f32 0.0, %v2380
  %v2382 = vpop.f32.mrf.mxu0
  %v2383 = vadd.f32 0.0, %v2382
  %2384 = vdwg.mxu0
  %v2385 = vadd.f32 %v2283, %v2317
  %v2386 = vadd.f32 %v2284, %v2356
  %v2387 = vadd.f32 %v2285, %v2319
  %v2388 = vadd.f32 %v2286, %v2358
  %v2389 = vadd.f32 %v2287, %v2322
  %v2390 = vadd.f32 %v2288, %v2361
  %v2391 = vadd.f32 %v2289, %v2324
  %v2392 = vadd.f32 %v2290, %v2363
  %v2393 = vadd.f32 %v2291, %v2327
  %v2394 = vadd.f32 %v2292, %v2366
  %v2395 = vadd.f32 %v2293, %v2329
  %v2396 = vadd.f32 %v2294, %v2368
  %v2397 = vadd.f32 %v2295, %v2332
  %v2398 = vadd.f32 %v2296, %v2371
  %v2399 = vadd.f32 %v2297, %v2334
  %v2400 = vadd.f32 %v2298, %v2373
  %v2401 = vadd.f32 %v2299, %v2337
  %v2402 = vadd.f32 %v2300, %v2376
  %v2403 = vadd.f32 %v2301, %v2339
  %v2404 = vadd.f32 %v2302, %v2378
  %v2405 = vadd.f32 %v2303, %v2342
  %v2406 = vadd.f32 %v2304, %v2381
  %v2407 = vadd.f32 %v2305, %v2344
  %v2408 = vadd.f32 %v2306, %v2383
  %v2411 = vunpack.c.l.b16 %v149
  %v2412 = vunpack.c.l.b16 %v150
  %v2413 = vpack.c.b16 %v2412, %v2411
  %v2415 = vsel %vm209, %v2413, 0
  %2417 = vmatpush.bf16.msra.mxu0 0
  %2418 = vmatpush.bf16.msra.mxu0 0
  %2419 = vmatpush.bf16.msra.mxu0 0
  %2420 = vmatpush.bf16.msra.mxu0 0
  %2421 = vmatpush.bf16.msra.mxu0 0
  %2422 = vmatpush.bf16.msra.mxu0 0
  %2423 = vmatpush.bf16.msra.mxu0 %v853
  %2424 = vmatpush.bf16.msra.mxu0 %v843
  %2425 = vmatmul.bf16.gmra.mxu0 %v699
  %v2426 = vpop.f32.mrf.mxu0
  %v2427 = vadd.f32 0.0, %v2426
  %v2428 = vpop.f32.mrf.mxu0
  %v2429 = vadd.f32 0.0, %v2428
  %2430 = vmatmul.bf16.gmra.mxu0 %v702
  %v2431 = vpop.f32.mrf.mxu0
  %v2432 = vadd.f32 0.0, %v2431
  %v2433 = vpop.f32.mrf.mxu0
  %v2434 = vadd.f32 0.0, %v2433
  %2435 = vmatmul.bf16.gmra.mxu0 %v705
  %v2436 = vpop.f32.mrf.mxu0
  %v2437 = vadd.f32 0.0, %v2436
  %v2438 = vpop.f32.mrf.mxu0
  %v2439 = vadd.f32 0.0, %v2438
  %2440 = vmatmul.bf16.gmra.mxu0 %v708
  %v2441 = vpop.f32.mrf.mxu0
  %v2442 = vadd.f32 0.0, %v2441
  %v2443 = vpop.f32.mrf.mxu0
  %v2444 = vadd.f32 0.0, %v2443
  %2445 = vmatmul.bf16.gmra.mxu0 %v711
  %v2446 = vpop.f32.mrf.mxu0
  %v2447 = vadd.f32 0.0, %v2446
  %v2448 = vpop.f32.mrf.mxu0
  %v2449 = vadd.f32 0.0, %v2448
  %2450 = vmatmul.bf16.gmra.mxu0 %v2415
  %v2451 = vpop.f32.mrf.mxu0
  %v2452 = vadd.f32 0.0, %v2451
  %v2453 = vpop.f32.mrf.mxu0
  %v2454 = vadd.f32 0.0, %v2453
  %2455 = vdwg.mxu0
  %2456 = vmatpush.bf16.msra.mxu0 0
  %2457 = vmatpush.bf16.msra.mxu0 0
  %2458 = vmatpush.bf16.msra.mxu0 0
  %2459 = vmatpush.bf16.msra.mxu0 0
  %2460 = vmatpush.bf16.msra.mxu0 0
  %2461 = vmatpush.bf16.msra.mxu0 0
  %2462 = vmatpush.bf16.msra.mxu0 %v856
  %2463 = vmatpush.bf16.msra.mxu0 %v844
  %2464 = vmatmul.bf16.gmra.mxu0 %v699
  %v2465 = vpop.f32.mrf.mxu0
  %v2466 = vadd.f32 0.0, %v2465
  %v2467 = vpop.f32.mrf.mxu0
  %v2468 = vadd.f32 0.0, %v2467
  %2469 = vmatmul.bf16.gmra.mxu0 %v702
  %v2470 = vpop.f32.mrf.mxu0
  %v2471 = vadd.f32 0.0, %v2470
  %v2472 = vpop.f32.mrf.mxu0
  %v2473 = vadd.f32 0.0, %v2472
  %2474 = vmatmul.bf16.gmra.mxu0 %v705
  %v2475 = vpop.f32.mrf.mxu0
  %v2476 = vadd.f32 0.0, %v2475
  %v2477 = vpop.f32.mrf.mxu0
  %v2478 = vadd.f32 0.0, %v2477
  %2479 = vmatmul.bf16.gmra.mxu0 %v708
  %v2480 = vpop.f32.mrf.mxu0
  %v2481 = vadd.f32 0.0, %v2480
  %v2482 = vpop.f32.mrf.mxu0
  %v2483 = vadd.f32 0.0, %v2482
  %2484 = vmatmul.bf16.gmra.mxu0 %v711
  %v2485 = vpop.f32.mrf.mxu0
  %v2486 = vadd.f32 0.0, %v2485
  %v2487 = vpop.f32.mrf.mxu0
  %v2488 = vadd.f32 0.0, %v2487
  %2489 = vmatmul.bf16.gmra.mxu0 %v2415
  %v2490 = vpop.f32.mrf.mxu0
  %v2491 = vadd.f32 0.0, %v2490
  %v2492 = vpop.f32.mrf.mxu0
  %v2493 = vadd.f32 0.0, %v2492
  %2494 = vdwg.mxu0
  %v2495 = vadd.f32 %v2385, %v2427
  %v2496 = vadd.f32 %v2386, %v2466
  %v2497 = vadd.f32 %v2387, %v2429
  %v2498 = vadd.f32 %v2388, %v2468
  %v2499 = vadd.f32 %v2389, %v2432
  %v2500 = vadd.f32 %v2390, %v2471
  %v2501 = vadd.f32 %v2391, %v2434
  %v2502 = vadd.f32 %v2392, %v2473
  %v2503 = vadd.f32 %v2393, %v2437
  %v2504 = vadd.f32 %v2394, %v2476
  %v2505 = vadd.f32 %v2395, %v2439
  %v2506 = vadd.f32 %v2396, %v2478
  %v2507 = vadd.f32 %v2397, %v2442
  %v2508 = vadd.f32 %v2398, %v2481
  %v2509 = vadd.f32 %v2399, %v2444
  %v2510 = vadd.f32 %v2400, %v2483
  %v2511 = vadd.f32 %v2401, %v2447
  %v2512 = vadd.f32 %v2402, %v2486
  %v2513 = vadd.f32 %v2403, %v2449
  %v2514 = vadd.f32 %v2404, %v2488
  %v2515 = vadd.f32 %v2405, %v2452
  %v2516 = vadd.f32 %v2406, %v2491
  %v2517 = vadd.f32 %v2407, %v2454
  %v2518 = vadd.f32 %v2408, %v2493
  %v2519 = vadd.f32 %v2495, %v961
  %v2520 = vadd.f32 %v2496, %v962
  %v2521 = vadd.f32 %v2497, %v961
  %v2522 = vadd.f32 %v2498, %v962
  %v2523 = vadd.f32 %v2499, %v961
  %v2524 = vadd.f32 %v2500, %v962
  %v2525 = vadd.f32 %v2501, %v961
  %v2526 = vadd.f32 %v2502, %v962
  %v2527 = vadd.f32 %v2503, %v961
  %v2528 = vadd.f32 %v2504, %v962
  %v2529 = vadd.f32 %v2505, %v961
  %v2530 = vadd.f32 %v2506, %v962
  %v2531 = vadd.f32 %v2507, %v961
  %v2532 = vadd.f32 %v2508, %v962
  %v2533 = vadd.f32 %v2509, %v961
  %v2534 = vadd.f32 %v2510, %v962
  %v2535 = vadd.f32 %v2511, %v961
  %v2536 = vadd.f32 %v2512, %v962
  %v2537 = vadd.f32 %v2513, %v961
  %v2538 = vadd.f32 %v2514, %v962
  %v2539 = vadd.f32 %v2515, %v961
  %v2540 = vadd.f32 %v2516, %v962
  %v2541 = vadd.f32 %v2517, %v961
  %v2542 = vadd.f32 %v2518, %v962
  %v2543 = vmax.f32 %v2519, 0.0
  %v2544 = vmax.f32 %v2520, 0.0
  %v2545 = vmax.f32 %v2521, 0.0
  %v2546 = vmax.f32 %v2522, 0.0
  %v2547 = vmax.f32 %v2523, 0.0
  %v2548 = vmax.f32 %v2524, 0.0
  %v2549 = vmax.f32 %v2525, 0.0
  %v2550 = vmax.f32 %v2526, 0.0
  %v2551 = vmax.f32 %v2527, 0.0
  %v2552 = vmax.f32 %v2528, 0.0
  %v2553 = vmax.f32 %v2529, 0.0
  %v2554 = vmax.f32 %v2530, 0.0
  %v2555 = vmax.f32 %v2531, 0.0
  %v2556 = vmax.f32 %v2532, 0.0
  %v2557 = vmax.f32 %v2533, 0.0
  %v2558 = vmax.f32 %v2534, 0.0
  %v2559 = vmax.f32 %v2535, 0.0
  %v2560 = vmax.f32 %v2536, 0.0
  %v2561 = vmax.f32 %v2537, 0.0
  %v2562 = vmax.f32 %v2538, 0.0
  %v2563 = vmax.f32 %v2539, 0.0
  %v2564 = vmax.f32 %v2540, 0.0
  %v2565 = vmax.f32 %v2541, 0.0
  %v2566 = vmax.f32 %v2542, 0.0
  %v2567 = vmax.f32 %v989, %v1507
  %v2568 = vmax.f32 %v990, %v1508
  %v2569 = vmax.f32 %v991, %v1509
  %v2570 = vmax.f32 %v992, %v1510
  %v2571 = vmax.f32 %v993, %v1511
  %v2572 = vmax.f32 %v994, %v1512
  %v2573 = vmax.f32 %v995, %v1513
  %v2574 = vmax.f32 %v996, %v1514
  %v2575 = vmax.f32 %v997, %v1515
  %v2576 = vmax.f32 %v998, %v1516
  %v2577 = vmax.f32 %v999, %v1517
  %v2578 = vmax.f32 %v1000, %v1518
  %v2579 = vmax.f32 %v1001, %v1519
  %v2580 = vmax.f32 %v1002, %v1520
  %v2581 = vmax.f32 %v1003, %v1521
  %v2582 = vmax.f32 %v1004, %v1522
  %v2583 = vmax.f32 %v1005, %v1523
  %v2584 = vmax.f32 %v1006, %v1524
  %v2585 = vmax.f32 %v1007, %v1525
  %v2586 = vmax.f32 %v1008, %v1526
  %v2587 = vmax.f32 %v1009, %v1527
  %v2588 = vmax.f32 %v1010, %v1528
  %v2589 = vmax.f32 %v1011, %v1529
  %v2590 = vmax.f32 %v1012, %v1530
  %v2591 = vmax.f32 %v2025, %v2543
  %v2592 = vmax.f32 %v2026, %v2544
  %v2593 = vmax.f32 %v2027, %v2545
  %v2594 = vmax.f32 %v2028, %v2546
  %v2595 = vmax.f32 %v2029, %v2547
  %v2596 = vmax.f32 %v2030, %v2548
  %v2597 = vmax.f32 %v2031, %v2549
  %v2598 = vmax.f32 %v2032, %v2550
  %v2599 = vmax.f32 %v2033, %v2551
  %v2600 = vmax.f32 %v2034, %v2552
  %v2601 = vmax.f32 %v2035, %v2553
  %v2602 = vmax.f32 %v2036, %v2554
  %v2603 = vmax.f32 %v2037, %v2555
  %v2604 = vmax.f32 %v2038, %v2556
  %v2605 = vmax.f32 %v2039, %v2557
  %v2606 = vmax.f32 %v2040, %v2558
  %v2607 = vmax.f32 %v2041, %v2559
  %v2608 = vmax.f32 %v2042, %v2560
  %v2609 = vmax.f32 %v2043, %v2561
  %v2610 = vmax.f32 %v2044, %v2562
  %v2611 = vmax.f32 %v2045, %v2563
  %v2612 = vmax.f32 %v2046, %v2564
  %v2613 = vmax.f32 %v2047, %v2565
  %v2614 = vmax.f32 %v2048, %v2566
  %2639 = vrot.lane.b32.xlu0 %v2567, 56
  %v2640 = vpop.permute.xlu0 %2639
  %2641 = vrot.lane.b32.xlu0 %v2568, 56
  %v2642 = vpop.permute.xlu0 %2641
  %2643 = vrot.lane.b32.xlu0 %v2569, 56
  %v2644 = vpop.permute.xlu0 %2643
  %2645 = vrot.lane.b32.xlu0 %v2570, 56
  %v2646 = vpop.permute.xlu0 %2645
  %2647 = vrot.lane.b32.xlu0 %v2571, 56
  %v2648 = vpop.permute.xlu0 %2647
  %2649 = vrot.lane.b32.xlu0 %v2572, 56
  %v2650 = vpop.permute.xlu0 %2649
  %2651 = vrot.lane.b32.xlu0 %v2573, 56
  %v2652 = vpop.permute.xlu0 %2651
  %2653 = vrot.lane.b32.xlu0 %v2574, 56
  %v2654 = vpop.permute.xlu0 %2653
  %2655 = vrot.lane.b32.xlu0 %v2575, 56
  %v2656 = vpop.permute.xlu0 %2655
  %2657 = vrot.lane.b32.xlu0 %v2576, 56
  %v2658 = vpop.permute.xlu0 %2657
  %2659 = vrot.lane.b32.xlu0 %v2577, 56
  %v2660 = vpop.permute.xlu0 %2659
  %2661 = vrot.lane.b32.xlu0 %v2578, 56
  %v2662 = vpop.permute.xlu0 %2661
  %2663 = vrot.lane.b32.xlu0 %v2579, 56
  %v2664 = vpop.permute.xlu0 %2663
  %2665 = vrot.lane.b32.xlu0 %v2580, 56
  %v2666 = vpop.permute.xlu0 %2665
  %2667 = vrot.lane.b32.xlu0 %v2581, 56
  %v2668 = vpop.permute.xlu0 %2667
  %2669 = vrot.lane.b32.xlu0 %v2582, 56
  %v2670 = vpop.permute.xlu0 %2669
  %2671 = vrot.lane.b32.xlu0 %v2583, 56
  %v2672 = vpop.permute.xlu0 %2671
  %2673 = vrot.lane.b32.xlu0 %v2584, 56
  %v2674 = vpop.permute.xlu0 %2673
  %2675 = vrot.lane.b32.xlu0 %v2585, 56
  %v2676 = vpop.permute.xlu0 %2675
  %2677 = vrot.lane.b32.xlu0 %v2586, 56
  %v2678 = vpop.permute.xlu0 %2677
  %2679 = vrot.lane.b32.xlu0 %v2587, 56
  %v2680 = vpop.permute.xlu0 %2679
  %2681 = vrot.lane.b32.xlu0 %v2588, 56
  %v2682 = vpop.permute.xlu0 %2681
  %2683 = vrot.lane.b32.xlu0 %v2589, 56
  %v2684 = vpop.permute.xlu0 %2683
  %2685 = vrot.lane.b32.xlu0 %v2590, 56
  %v2686 = vpop.permute.xlu0 %2685
  %vm2687 = vcmask 457728
  %v2688 = vsel %vm2687, %v2640, %v2642
  %v2689 = vsel %vm2687, %v2644, %v2646
  %v2690 = vsel %vm2687, %v2648, %v2650
  %v2691 = vsel %vm2687, %v2652, %v2654
  %v2692 = vsel %vm2687, %v2656, %v2658
  %v2693 = vsel %vm2687, %v2660, %v2662
  %v2694 = vsel %vm2687, %v2664, %v2666
  %v2695 = vsel %vm2687, %v2668, %v2670
  %v2696 = vsel %vm2687, %v2672, %v2674
  %v2697 = vsel %vm2687, %v2676, %v2678
  %v2698 = vsel %vm2687, %v2680, %v2682
  %v2699 = vsel %vm2687, %v2684, %v2686
  %v2712 = vmax.f32 %v2567, %v2688
  %v2713 = vmax.f32 %v2569, %v2689
  %v2714 = vmax.f32 %v2571, %v2690
  %v2715 = vmax.f32 %v2573, %v2691
  %v2716 = vmax.f32 %v2575, %v2692
  %v2717 = vmax.f32 %v2577, %v2693
  %v2718 = vmax.f32 %v2579, %v2694
  %v2719 = vmax.f32 %v2581, %v2695
  %v2720 = vmax.f32 %v2583, %v2696
  %v2721 = vmax.f32 %v2585, %v2697
  %v2722 = vmax.f32 %v2587, %v2698
  %v2723 = vmax.f32 %v2589, %v2699
  %v2724 = vpack.c.bf16 %v2712, %v2712
  %v2725 = vpack.c.bf16 %v2713, %v2713
  %v2726 = vpack.c.bf16 %v2714, %v2714
  %v2727 = vpack.c.bf16 %v2715, %v2715
  %v2728 = vpack.c.bf16 %v2716, %v2716
  %v2729 = vpack.c.bf16 %v2717, %v2717
  %v2730 = vpack.c.bf16 %v2718, %v2718
  %v2731 = vpack.c.bf16 %v2719, %v2719
  %v2732 = vpack.c.bf16 %v2720, %v2720
  %v2733 = vpack.c.bf16 %v2721, %v2721
  %v2734 = vpack.c.bf16 %v2722, %v2722
  %v2735 = vpack.c.bf16 %v2723, %v2723
  %2760 = vrot.lane.b32.xlu0 %v2591, 56
  %v2761 = vpop.permute.xlu0 %2760
  %2762 = vrot.lane.b32.xlu0 %v2592, 56
  %v2763 = vpop.permute.xlu0 %2762
  %2764 = vrot.lane.b32.xlu0 %v2593, 56
  %v2765 = vpop.permute.xlu0 %2764
  %2766 = vrot.lane.b32.xlu0 %v2594, 56
  %v2767 = vpop.permute.xlu0 %2766
  %2768 = vrot.lane.b32.xlu0 %v2595, 56
  %v2769 = vpop.permute.xlu0 %2768
  %2770 = vrot.lane.b32.xlu0 %v2596, 56
  %v2771 = vpop.permute.xlu0 %2770
  %2772 = vrot.lane.b32.xlu0 %v2597, 56
  %v2773 = vpop.permute.xlu0 %2772
  %2774 = vrot.lane.b32.xlu0 %v2598, 56
  %v2775 = vpop.permute.xlu0 %2774
  %2776 = vrot.lane.b32.xlu0 %v2599, 56
  %v2777 = vpop.permute.xlu0 %2776
  %2778 = vrot.lane.b32.xlu0 %v2600, 56
  %v2779 = vpop.permute.xlu0 %2778
  %2780 = vrot.lane.b32.xlu0 %v2601, 56
  %v2781 = vpop.permute.xlu0 %2780
  %2782 = vrot.lane.b32.xlu0 %v2602, 56
  %v2783 = vpop.permute.xlu0 %2782
  %2784 = vrot.lane.b32.xlu0 %v2603, 56
  %v2785 = vpop.permute.xlu0 %2784
  %2786 = vrot.lane.b32.xlu0 %v2604, 56
  %v2787 = vpop.permute.xlu0 %2786
  %2788 = vrot.lane.b32.xlu0 %v2605, 56
  %v2789 = vpop.permute.xlu0 %2788
  %2790 = vrot.lane.b32.xlu0 %v2606, 56
  %v2791 = vpop.permute.xlu0 %2790
  %2792 = vrot.lane.b32.xlu0 %v2607, 56
  %v2793 = vpop.permute.xlu0 %2792
  %2794 = vrot.lane.b32.xlu0 %v2608, 56
  %v2795 = vpop.permute.xlu0 %2794
  %2796 = vrot.lane.b32.xlu0 %v2609, 56
  %v2797 = vpop.permute.xlu0 %2796
  %2798 = vrot.lane.b32.xlu0 %v2610, 56
  %v2799 = vpop.permute.xlu0 %2798
  %2800 = vrot.lane.b32.xlu0 %v2611, 56
  %v2801 = vpop.permute.xlu0 %2800
  %2802 = vrot.lane.b32.xlu0 %v2612, 56
  %v2803 = vpop.permute.xlu0 %2802
  %2804 = vrot.lane.b32.xlu0 %v2613, 56
  %v2805 = vpop.permute.xlu0 %2804
  %2806 = vrot.lane.b32.xlu0 %v2614, 56
  %v2807 = vpop.permute.xlu0 %2806
  %v2808 = vsel %vm2687, %v2761, %v2763
  %v2809 = vsel %vm2687, %v2765, %v2767
  %v2810 = vsel %vm2687, %v2769, %v2771
  %v2811 = vsel %vm2687, %v2773, %v2775
  %v2812 = vsel %vm2687, %v2777, %v2779
  %v2813 = vsel %vm2687, %v2781, %v2783
  %v2814 = vsel %vm2687, %v2785, %v2787
  %v2815 = vsel %vm2687, %v2789, %v2791
  %v2816 = vsel %vm2687, %v2793, %v2795
  %v2817 = vsel %vm2687, %v2797, %v2799
  %v2818 = vsel %vm2687, %v2801, %v2803
  %v2819 = vsel %vm2687, %v2805, %v2807
  %v2832 = vmax.f32 %v2591, %v2808
  %v2833 = vmax.f32 %v2593, %v2809
  %v2834 = vmax.f32 %v2595, %v2810
  %v2835 = vmax.f32 %v2597, %v2811
  %v2836 = vmax.f32 %v2599, %v2812
  %v2837 = vmax.f32 %v2601, %v2813
  %v2838 = vmax.f32 %v2603, %v2814
  %v2839 = vmax.f32 %v2605, %v2815
  %v2840 = vmax.f32 %v2607, %v2816
  %v2841 = vmax.f32 %v2609, %v2817
  %v2842 = vmax.f32 %v2611, %v2818
  %v2843 = vmax.f32 %v2613, %v2819
  %v2844 = vpack.c.bf16 %v2832, %v2832
  %v2845 = vpack.c.bf16 %v2833, %v2833
  %v2846 = vpack.c.bf16 %v2834, %v2834
  %v2847 = vpack.c.bf16 %v2835, %v2835
  %v2848 = vpack.c.bf16 %v2836, %v2836
  %v2849 = vpack.c.bf16 %v2837, %v2837
  %v2850 = vpack.c.bf16 %v2838, %v2838
  %v2851 = vpack.c.bf16 %v2839, %v2839
  %v2852 = vpack.c.bf16 %v2840, %v2840
  %v2853 = vpack.c.bf16 %v2841, %v2841
  %v2854 = vpack.c.bf16 %v2842, %v2842
  %v2855 = vpack.c.bf16 %v2843, %v2843
  %v2856 = vld [vmem:[%s4] sm:$0x1]
  %v2857 = vld [vmem:[%s3] sm:$0xf]
  %v2858 = vld [vmem:[%s3 + $0x4] sm:$0xf]
  %v2859 = vld [vmem:[%s3 + $0x8] sm:$0xf]
  %v2860 = vld [vmem:[%s3 + $0xc] sm:$0xf]
  %v2861 = vld [vmem:[%s3 + $0x10] sm:$0xf]
  %v2862 = vld [vmem:[%s3 + $0x14] sm:$0xf]
  %v2863 = vld [vmem:[%s3 + $0x18] sm:$0xf]
  %v2864 = vld [vmem:[%s3 + $0x1c] sm:$0xf]
  %v2865 = vld [vmem:[%s3 + $0x20] sm:$0xf]
  %s2866 = scalar_lea.vmem %s3, 36
  %v2867 = vld [vmem:[%s2866] sm:$0xf]
  %v2868 = vld [vmem:[%s2866 + $0x4] sm:$0xf]
  %v2869 = vld [vmem:[%s2866 + $0x8] sm:$0xf]
  %v2870 = vld [vmem:[%s2866 + $0xc] sm:$0xf]
  %v2871 = vld [vmem:[%s2866 + $0x10] sm:$0xf]
  %v2872 = vld [vmem:[%s2866 + $0x14] sm:$0xf]
  %v2873 = vld [vmem:[%s2866 + $0x18] sm:$0xf]
  %v2874 = vld [vmem:[%s2866 + $0x1c] sm:$0xf]
  %v2875 = vld [vmem:[%s2866 + $0x20] sm:$0xf]
  %v2884 = vunpack.c.l.b16 %v2844
  %v2885 = vunpack.c.l.b16 %v2845
  %v2886 = vunpack.c.l.b16 %v2846
  %v2887 = vunpack.c.l.b16 %v2847
  %v2888 = vunpack.c.l.b16 %v2848
  %v2889 = vunpack.c.l.b16 %v2849
  %v2890 = vunpack.c.l.b16 %v2850
  %v2891 = vunpack.c.l.b16 %v2851
  %v2892 = vpack.c.b16 %v2885, %v2884
  %v2893 = vpack.c.b16 %v2887, %v2886
  %v2894 = vpack.c.b16 %v2889, %v2888
  %v2895 = vpack.c.b16 %v2891, %v2890
  %v2905 = vunpack.c.l.b16 %v2867
  %v2906 = vunpack.c.l.b16 %v2868
  %v2907 = vunpack.c.l.b16 %v2869
  %v2908 = vunpack.c.l.b16 %v2870
  %v2909 = vunpack.c.l.b16 %v2871
  %v2910 = vunpack.c.l.b16 %v2872
  %v2911 = vunpack.c.l.b16 %v2873
  %v2912 = vunpack.c.l.b16 %v2874
  %v2913 = vunpack.c.l.b16 %v2875
  %v2914 = vpack.c.b16 %v2906, %v2905
  %v2915 = vpack.c.b16 %v2908, %v2907
  %v2916 = vpack.c.b16 %v2910, %v2909
  %v2917 = vpack.c.b16 %v2912, %v2911
  %v2918 = vpack.c.b16 %v2913, %v2913
  %vm2923 = vcmask 588800
  %v2925 = vsel %vm2923, %v2892, 0
  %v2928 = vsel %vm2923, %v2893, 0
  %v2931 = vsel %vm2923, %v2894, 0
  %v2934 = vsel %vm2923, %v2895, 0
  %vm2936 = vcmask 1043456
  %v2938 = vsel %vm2936, %v2918, 0
  %2940 = vmatpush.bf16.msra.mxu0 0
  %2941 = vmatpush.bf16.msra.mxu0 0
  %2942 = vmatpush.bf16.msra.mxu0 0
  %2943 = vmatpush.bf16.msra.mxu0 %v2938
  %2944 = vmatpush.bf16.msra.mxu0 %v2917
  %2945 = vmatpush.bf16.msra.mxu0 %v2916
  %2946 = vmatpush.bf16.msra.mxu0 %v2915
  %2947 = vmatpush.bf16.msra.mxu0 %v2914
  %2948 = vmatmul.bf16.gmra.mxu0 %v2925
  %v2949 = vpop.f32.mrf.mxu0
  %v2950 = vadd.f32 0.0, %v2949
  %v2951 = vpop.f32.mrf.mxu0
  %v2952 = vadd.f32 0.0, %v2951
  %2953 = vmatmul.bf16.gmra.mxu0 %v2928
  %v2954 = vpop.f32.mrf.mxu0
  %v2955 = vadd.f32 0.0, %v2954
  %v2956 = vpop.f32.mrf.mxu0
  %v2957 = vadd.f32 0.0, %v2956
  %2958 = vmatmul.bf16.gmra.mxu0 %v2931
  %v2959 = vpop.f32.mrf.mxu0
  %v2960 = vadd.f32 0.0, %v2959
  %v2961 = vpop.f32.mrf.mxu0
  %v2962 = vadd.f32 0.0, %v2961
  %2963 = vmatmul.bf16.gmra.mxu0 %v2934
  %v2964 = vpop.f32.mrf.mxu0
  %v2965 = vadd.f32 0.0, %v2964
  %v2966 = vpop.f32.mrf.mxu0
  %v2967 = vadd.f32 0.0, %v2966
  %2968 = vdwg.mxu0
  %v2977 = vunpack.c.l.b16 %v2724
  %v2978 = vunpack.c.l.b16 %v2725
  %v2979 = vunpack.c.l.b16 %v2726
  %v2980 = vunpack.c.l.b16 %v2727
  %v2981 = vunpack.c.l.b16 %v2728
  %v2982 = vunpack.c.l.b16 %v2729
  %v2983 = vunpack.c.l.b16 %v2730
  %v2984 = vunpack.c.l.b16 %v2731
  %v2985 = vpack.c.b16 %v2978, %v2977
  %v2986 = vpack.c.b16 %v2980, %v2979
  %v2987 = vpack.c.b16 %v2982, %v2981
  %v2988 = vpack.c.b16 %v2984, %v2983
  %v2998 = vunpack.c.l.b16 %v2857
  %v2999 = vunpack.c.l.b16 %v2858
  %v3000 = vunpack.c.l.b16 %v2859
  %v3001 = vunpack.c.l.b16 %v2860
  %v3002 = vunpack.c.l.b16 %v2861
  %v3003 = vunpack.c.l.b16 %v2862
  %v3004 = vunpack.c.l.b16 %v2863
  %v3005 = vunpack.c.l.b16 %v2864
  %v3006 = vunpack.c.l.b16 %v2865
  %v3007 = vpack.c.b16 %v2999, %v2998
  %v3008 = vpack.c.b16 %v3001, %v3000
  %v3009 = vpack.c.b16 %v3003, %v3002
  %v3010 = vpack.c.b16 %v3005, %v3004
  %v3011 = vpack.c.b16 %v3006, %v3006
  %v3017 = vsel %vm2923, %v2985, 0
  %v3020 = vsel %vm2923, %v2986, 0
  %v3023 = vsel %vm2923, %v2987, 0
  %v3026 = vsel %vm2923, %v2988, 0
  %v3029 = vsel %vm2936, %v3011, 0
  %3031 = vmatpush.bf16.msra.mxu0 0
  %3032 = vmatpush.bf16.msra.mxu0 0
  %3033 = vmatpush.bf16.msra.mxu0 0
  %3034 = vmatpush.bf16.msra.mxu0 %v3029
  %3035 = vmatpush.bf16.msra.mxu0 %v3010
  %3036 = vmatpush.bf16.msra.mxu0 %v3009
  %3037 = vmatpush.bf16.msra.mxu0 %v3008
  %3038 = vmatpush.bf16.msra.mxu0 %v3007
  %3039 = vmatmul.bf16.gmra.mxu0 %v3017
  %v3040 = vpop.f32.mrf.mxu0
  %v3041 = vadd.f32 %v2950, %v3040
  %v3042 = vpop.f32.mrf.mxu0
  %v3043 = vadd.f32 %v2952, %v3042
  %3044 = vmatmul.bf16.gmra.mxu0 %v3020
  %v3045 = vpop.f32.mrf.mxu0
  %v3046 = vadd.f32 %v2955, %v3045
  %v3047 = vpop.f32.mrf.mxu0
  %v3048 = vadd.f32 %v2957, %v3047
  %3049 = vmatmul.bf16.gmra.mxu0 %v3023
  %v3050 = vpop.f32.mrf.mxu0
  %v3051 = vadd.f32 %v2960, %v3050
  %v3052 = vpop.f32.mrf.mxu0
  %v3053 = vadd.f32 %v2962, %v3052
  %3054 = vmatmul.bf16.gmra.mxu0 %v3026
  %v3055 = vpop.f32.mrf.mxu0
  %v3056 = vadd.f32 %v2965, %v3055
  %v3057 = vpop.f32.mrf.mxu0
  %v3058 = vadd.f32 %v2967, %v3057
  %3059 = vdwg.mxu0
  %s3060 = scalar_lea.vmem %s3, 72
  %v3061 = vld [vmem:[%s3060] sm:$0xf]
  %v3062 = vld [vmem:[%s3060 + $0x4] sm:$0xf]
  %v3063 = vld [vmem:[%s3060 + $0x8] sm:$0xf]
  %v3064 = vld [vmem:[%s3060 + $0xc] sm:$0xf]
  %v3065 = vld [vmem:[%s3060 + $0x10] sm:$0xf]
  %v3066 = vld [vmem:[%s3060 + $0x14] sm:$0xf]
  %v3067 = vld [vmem:[%s3060 + $0x18] sm:$0xf]
  %v3068 = vld [vmem:[%s3060 + $0x1c] sm:$0xf]
  %v3069 = vld [vmem:[%s3060 + $0x20] sm:$0xf]
  %v3072 = vunpack.c.l.b16 %v2732
  %v3073 = vunpack.c.l.b16 %v2733
  %v3074 = vpack.c.b16 %v3073, %v3072
  %v3084 = vunpack.c.l.b16 %v3061
  %v3085 = vunpack.c.l.b16 %v3062
  %v3086 = vunpack.c.l.b16 %v3063
  %v3087 = vunpack.c.l.b16 %v3064
  %v3088 = vunpack.c.l.b16 %v3065
  %v3089 = vunpack.c.l.b16 %v3066
  %v3090 = vunpack.c.l.b16 %v3067
  %v3091 = vunpack.c.l.b16 %v3068
  %v3092 = vunpack.c.l.b16 %v3069
  %v3093 = vpack.c.b16 %v3085, %v3084
  %v3094 = vpack.c.b16 %v3087, %v3086
  %v3095 = vpack.c.b16 %v3089, %v3088
  %v3096 = vpack.c.b16 %v3091, %v3090
  %v3097 = vpack.c.b16 %v3092, %v3092
  %v3103 = vsel %vm2923, %v3074, 0
  %v3106 = vsel %vm2936, %v3097, 0
  %3108 = vmatpush.bf16.msra.mxu0 0
  %3109 = vmatpush.bf16.msra.mxu0 0
  %3110 = vmatpush.bf16.msra.mxu0 0
  %3111 = vmatpush.bf16.msra.mxu0 %v3106
  %3112 = vmatpush.bf16.msra.mxu0 %v3096
  %3113 = vmatpush.bf16.msra.mxu0 %v3095
  %3114 = vmatpush.bf16.msra.mxu0 %v3094
  %3115 = vmatpush.bf16.msra.mxu0 %v3093
  %3116 = vmatmul.bf16.gmra.mxu0 %v3020
  %v3117 = vpop.f32.mrf.mxu0
  %v3118 = vadd.f32 0.0, %v3117
  %v3119 = vpop.f32.mrf.mxu0
  %v3120 = vadd.f32 0.0, %v3119
  %3121 = vmatmul.bf16.gmra.mxu0 %v3023
  %v3122 = vpop.f32.mrf.mxu0
  %v3123 = vadd.f32 0.0, %v3122
  %v3124 = vpop.f32.mrf.mxu0
  %v3125 = vadd.f32 0.0, %v3124
  %3126 = vmatmul.bf16.gmra.mxu0 %v3026
  %v3127 = vpop.f32.mrf.mxu0
  %v3128 = vadd.f32 0.0, %v3127
  %v3129 = vpop.f32.mrf.mxu0
  %v3130 = vadd.f32 0.0, %v3129
  %3131 = vmatmul.bf16.gmra.mxu0 %v3103
  %v3132 = vpop.f32.mrf.mxu0
  %v3133 = vadd.f32 0.0, %v3132
  %v3134 = vpop.f32.mrf.mxu0
  %v3135 = vadd.f32 0.0, %v3134
  %3136 = vdwg.mxu0
  %v3137 = vadd.f32 %v3041, %v3118
  %v3138 = vadd.f32 %v3043, %v3120
  %v3139 = vadd.f32 %v3046, %v3123
  %v3140 = vadd.f32 %v3048, %v3125
  %v3141 = vadd.f32 %v3051, %v3128
  %v3142 = vadd.f32 %v3053, %v3130
  %v3143 = vadd.f32 %v3056, %v3133
  %v3144 = vadd.f32 %v3058, %v3135
  %s3145 = scalar_lea.vmem %s3, 108
  %v3146 = vld [vmem:[%s3145] sm:$0xf]
  %v3147 = vld [vmem:[%s3145 + $0x4] sm:$0xf]
  %v3148 = vld [vmem:[%s3145 + $0x8] sm:$0xf]
  %v3149 = vld [vmem:[%s3145 + $0xc] sm:$0xf]
  %v3150 = vld [vmem:[%s3145 + $0x10] sm:$0xf]
  %v3151 = vld [vmem:[%s3145 + $0x14] sm:$0xf]
  %v3152 = vld [vmem:[%s3145 + $0x18] sm:$0xf]
  %v3153 = vld [vmem:[%s3145 + $0x1c] sm:$0xf]
  %v3154 = vld [vmem:[%s3145 + $0x20] sm:$0xf]
  %v3157 = vunpack.c.l.b16 %v2852
  %v3158 = vunpack.c.l.b16 %v2853
  %v3159 = vpack.c.b16 %v3158, %v3157
  %v3169 = vunpack.c.l.b16 %v3146
  %v3170 = vunpack.c.l.b16 %v3147
  %v3171 = vunpack.c.l.b16 %v3148
  %v3172 = vunpack.c.l.b16 %v3149
  %v3173 = vunpack.c.l.b16 %v3150
  %v3174 = vunpack.c.l.b16 %v3151
  %v3175 = vunpack.c.l.b16 %v3152
  %v3176 = vunpack.c.l.b16 %v3153
  %v3177 = vunpack.c.l.b16 %v3154
  %v3178 = vpack.c.b16 %v3170, %v3169
  %v3179 = vpack.c.b16 %v3172, %v3171
  %v3180 = vpack.c.b16 %v3174, %v3173
  %v3181 = vpack.c.b16 %v3176, %v3175
  %v3182 = vpack.c.b16 %v3177, %v3177
  %v3188 = vsel %vm2923, %v3159, 0
  %v3191 = vsel %vm2936, %v3182, 0
  %3193 = vmatpush.bf16.msra.mxu0 0
  %3194 = vmatpush.bf16.msra.mxu0 0
  %3195 = vmatpush.bf16.msra.mxu0 0
  %3196 = vmatpush.bf16.msra.mxu0 %v3191
  %3197 = vmatpush.bf16.msra.mxu0 %v3181
  %3198 = vmatpush.bf16.msra.mxu0 %v3180
  %3199 = vmatpush.bf16.msra.mxu0 %v3179
  %3200 = vmatpush.bf16.msra.mxu0 %v3178
  %3201 = vmatmul.bf16.gmra.mxu0 %v2928
  %v3202 = vpop.f32.mrf.mxu0
  %v3203 = vadd.f32 0.0, %v3202
  %v3204 = vpop.f32.mrf.mxu0
  %v3205 = vadd.f32 0.0, %v3204
  %3206 = vmatmul.bf16.gmra.mxu0 %v2931
  %v3207 = vpop.f32.mrf.mxu0
  %v3208 = vadd.f32 0.0, %v3207
  %v3209 = vpop.f32.mrf.mxu0
  %v3210 = vadd.f32 0.0, %v3209
  %3211 = vmatmul.bf16.gmra.mxu0 %v2934
  %v3212 = vpop.f32.mrf.mxu0
  %v3213 = vadd.f32 0.0, %v3212
  %v3214 = vpop.f32.mrf.mxu0
  %v3215 = vadd.f32 0.0, %v3214
  %3216 = vmatmul.bf16.gmra.mxu0 %v3188
  %v3217 = vpop.f32.mrf.mxu0
  %v3218 = vadd.f32 0.0, %v3217
  %v3219 = vpop.f32.mrf.mxu0
  %v3220 = vadd.f32 0.0, %v3219
  %3221 = vdwg.mxu0
  %v3222 = vadd.f32 %v3137, %v3203
  %v3223 = vadd.f32 %v3138, %v3205
  %v3224 = vadd.f32 %v3139, %v3208
  %v3225 = vadd.f32 %v3140, %v3210
  %v3226 = vadd.f32 %v3141, %v3213
  %v3227 = vadd.f32 %v3142, %v3215
  %v3228 = vadd.f32 %v3143, %v3218
  %v3229 = vadd.f32 %v3144, %v3220
  %s3230 = scalar_lea.vmem %s3, 144
  %v3231 = vld [vmem:[%s3230] sm:$0xf]
  %v3232 = vld [vmem:[%s3230 + $0x4] sm:$0xf]
  %v3233 = vld [vmem:[%s3230 + $0x8] sm:$0xf]
  %v3234 = vld [vmem:[%s3230 + $0xc] sm:$0xf]
  %v3235 = vld [vmem:[%s3230 + $0x10] sm:$0xf]
  %v3236 = vld [vmem:[%s3230 + $0x14] sm:$0xf]
  %v3237 = vld [vmem:[%s3230 + $0x18] sm:$0xf]
  %v3238 = vld [vmem:[%s3230 + $0x1c] sm:$0xf]
  %v3239 = vld [vmem:[%s3230 + $0x20] sm:$0xf]
  %v3242 = vunpack.c.l.b16 %v2734
  %v3243 = vunpack.c.l.b16 %v2735
  %v3244 = vpack.c.b16 %v3243, %v3242
  %v3254 = vunpack.c.l.b16 %v3231
  %v3255 = vunpack.c.l.b16 %v3232
  %v3256 = vunpack.c.l.b16 %v3233
  %v3257 = vunpack.c.l.b16 %v3234
  %v3258 = vunpack.c.l.b16 %v3235
  %v3259 = vunpack.c.l.b16 %v3236
  %v3260 = vunpack.c.l.b16 %v3237
  %v3261 = vunpack.c.l.b16 %v3238
  %v3262 = vunpack.c.l.b16 %v3239
  %v3263 = vpack.c.b16 %v3255, %v3254
  %v3264 = vpack.c.b16 %v3257, %v3256
  %v3265 = vpack.c.b16 %v3259, %v3258
  %v3266 = vpack.c.b16 %v3261, %v3260
  %v3267 = vpack.c.b16 %v3262, %v3262
  %v3273 = vsel %vm2923, %v3244, 0
  %v3276 = vsel %vm2936, %v3267, 0
  %3278 = vmatpush.bf16.msra.mxu0 0
  %3279 = vmatpush.bf16.msra.mxu0 0
  %3280 = vmatpush.bf16.msra.mxu0 0
  %3281 = vmatpush.bf16.msra.mxu0 %v3276
  %3282 = vmatpush.bf16.msra.mxu0 %v3266
  %3283 = vmatpush.bf16.msra.mxu0 %v3265
  %3284 = vmatpush.bf16.msra.mxu0 %v3264
  %3285 = vmatpush.bf16.msra.mxu0 %v3263
  %3286 = vmatmul.bf16.gmra.mxu0 %v3023
  %v3287 = vpop.f32.mrf.mxu0
  %v3288 = vadd.f32 0.0, %v3287
  %v3289 = vpop.f32.mrf.mxu0
  %v3290 = vadd.f32 0.0, %v3289
  %3291 = vmatmul.bf16.gmra.mxu0 %v3026
  %v3292 = vpop.f32.mrf.mxu0
  %v3293 = vadd.f32 0.0, %v3292
  %v3294 = vpop.f32.mrf.mxu0
  %v3295 = vadd.f32 0.0, %v3294
  %3296 = vmatmul.bf16.gmra.mxu0 %v3103
  %v3297 = vpop.f32.mrf.mxu0
  %v3298 = vadd.f32 0.0, %v3297
  %v3299 = vpop.f32.mrf.mxu0
  %v3300 = vadd.f32 0.0, %v3299
  %3301 = vmatmul.bf16.gmra.mxu0 %v3273
  %v3302 = vpop.f32.mrf.mxu0
  %v3303 = vadd.f32 0.0, %v3302
  %v3304 = vpop.f32.mrf.mxu0
  %v3305 = vadd.f32 0.0, %v3304
  %3306 = vdwg.mxu0
  %v3307 = vadd.f32 %v3222, %v3288
  %v3308 = vadd.f32 %v3223, %v3290
  %v3309 = vadd.f32 %v3224, %v3293
  %v3310 = vadd.f32 %v3225, %v3295
  %v3311 = vadd.f32 %v3226, %v3298
  %v3312 = vadd.f32 %v3227, %v3300
  %v3313 = vadd.f32 %v3228, %v3303
  %v3314 = vadd.f32 %v3229, %v3305
  %v3316 = vperm.slane %v2856, 0
  %v3318 = vadd.f32 %v3307, %v3316
  %v3319 = vadd.f32 %v3308, %v3316
  %v3320 = vadd.f32 %v3309, %v3316
  %v3321 = vadd.f32 %v3310, %v3316
  %v3322 = vadd.f32 %v3311, %v3316
  %v3323 = vadd.f32 %v3312, %v3316
  %v3324 = vadd.f32 %v3313, %v3316
  %v3325 = vadd.f32 %v3314, %v3316
  %v3326 = vmax.f32 %v3318, 0.0
  %v3327 = vmax.f32 %v3319, 0.0
  %v3328 = vmax.f32 %v3320, 0.0
  %v3329 = vmax.f32 %v3321, 0.0
  %v3330 = vmax.f32 %v3322, 0.0
  %v3331 = vmax.f32 %v3323, 0.0
  %v3332 = vmax.f32 %v3324, 0.0
  %v3333 = vmax.f32 %v3325, 0.0
  %3334 = vmatpush.bf16.msra.mxu0 0
  %3335 = vmatpush.bf16.msra.mxu0 0
  %3336 = vmatpush.bf16.msra.mxu0 0
  %3337 = vmatpush.bf16.msra.mxu0 %v2938
  %3338 = vmatpush.bf16.msra.mxu0 %v2917
  %3339 = vmatpush.bf16.msra.mxu0 %v2916
  %3340 = vmatpush.bf16.msra.mxu0 %v2915
  %3341 = vmatpush.bf16.msra.mxu0 %v2914
  %3342 = vmatmul.bf16.gmra.mxu0 %v3020
  %v3343 = vpop.f32.mrf.mxu0
  %v3344 = vadd.f32 0.0, %v3343
  %v3345 = vpop.f32.mrf.mxu0
  %v3346 = vadd.f32 0.0, %v3345
  %3347 = vmatmul.bf16.gmra.mxu0 %v3023
  %v3348 = vpop.f32.mrf.mxu0
  %v3349 = vadd.f32 0.0, %v3348
  %v3350 = vpop.f32.mrf.mxu0
  %v3351 = vadd.f32 0.0, %v3350
  %3352 = vmatmul.bf16.gmra.mxu0 %v3026
  %v3353 = vpop.f32.mrf.mxu0
  %v3354 = vadd.f32 0.0, %v3353
  %v3355 = vpop.f32.mrf.mxu0
  %v3356 = vadd.f32 0.0, %v3355
  %3357 = vmatmul.bf16.gmra.mxu0 %v3103
  %v3358 = vpop.f32.mrf.mxu0
  %v3359 = vadd.f32 0.0, %v3358
  %v3360 = vpop.f32.mrf.mxu0
  %v3361 = vadd.f32 0.0, %v3360
  %3362 = vdwg.mxu0
  %3363 = vmatpush.bf16.msra.mxu0 0
  %3364 = vmatpush.bf16.msra.mxu0 0
  %3365 = vmatpush.bf16.msra.mxu0 0
  %3366 = vmatpush.bf16.msra.mxu0 %v3029
  %3367 = vmatpush.bf16.msra.mxu0 %v3010
  %3368 = vmatpush.bf16.msra.mxu0 %v3009
  %3369 = vmatpush.bf16.msra.mxu0 %v3008
  %3370 = vmatpush.bf16.msra.mxu0 %v3007
  %3371 = vmatmul.bf16.gmra.mxu0 %v2925
  %v3372 = vpop.f32.mrf.mxu0
  %v3373 = vadd.f32 %v3344, %v3372
  %v3374 = vpop.f32.mrf.mxu0
  %v3375 = vadd.f32 %v3346, %v3374
  %3376 = vmatmul.bf16.gmra.mxu0 %v2928
  %v3377 = vpop.f32.mrf.mxu0
  %v3378 = vadd.f32 %v3349, %v3377
  %v3379 = vpop.f32.mrf.mxu0
  %v3380 = vadd.f32 %v3351, %v3379
  %3381 = vmatmul.bf16.gmra.mxu0 %v2931
  %v3382 = vpop.f32.mrf.mxu0
  %v3383 = vadd.f32 %v3354, %v3382
  %v3384 = vpop.f32.mrf.mxu0
  %v3385 = vadd.f32 %v3356, %v3384
  %3386 = vmatmul.bf16.gmra.mxu0 %v2934
  %v3387 = vpop.f32.mrf.mxu0
  %v3388 = vadd.f32 %v3359, %v3387
  %v3389 = vpop.f32.mrf.mxu0
  %v3390 = vadd.f32 %v3361, %v3389
  %3391 = vdwg.mxu0
  %3392 = vmatpush.bf16.msra.mxu0 0
  %3393 = vmatpush.bf16.msra.mxu0 0
  %3394 = vmatpush.bf16.msra.mxu0 0
  %3395 = vmatpush.bf16.msra.mxu0 %v3106
  %3396 = vmatpush.bf16.msra.mxu0 %v3096
  %3397 = vmatpush.bf16.msra.mxu0 %v3095
  %3398 = vmatpush.bf16.msra.mxu0 %v3094
  %3399 = vmatpush.bf16.msra.mxu0 %v3093
  %3400 = vmatmul.bf16.gmra.mxu0 %v2928
  %v3401 = vpop.f32.mrf.mxu0
  %v3402 = vadd.f32 0.0, %v3401
  %v3403 = vpop.f32.mrf.mxu0
  %v3404 = vadd.f32 0.0, %v3403
  %3405 = vmatmul.bf16.gmra.mxu0 %v2931
  %v3406 = vpop.f32.mrf.mxu0
  %v3407 = vadd.f32 0.0, %v3406
  %v3408 = vpop.f32.mrf.mxu0
  %v3409 = vadd.f32 0.0, %v3408
  %3410 = vmatmul.bf16.gmra.mxu0 %v2934
  %v3411 = vpop.f32.mrf.mxu0
  %v3412 = vadd.f32 0.0, %v3411
  %v3413 = vpop.f32.mrf.mxu0
  %v3414 = vadd.f32 0.0, %v3413
  %3415 = vmatmul.bf16.gmra.mxu0 %v3188
  %v3416 = vpop.f32.mrf.mxu0
  %v3417 = vadd.f32 0.0, %v3416
  %v3418 = vpop.f32.mrf.mxu0
  %v3419 = vadd.f32 0.0, %v3418
  %3420 = vdwg.mxu0
  %v3421 = vadd.f32 %v3373, %v3402
  %v3422 = vadd.f32 %v3375, %v3404
  %v3423 = vadd.f32 %v3378, %v3407
  %v3424 = vadd.f32 %v3380, %v3409
  %v3425 = vadd.f32 %v3383, %v3412
  %v3426 = vadd.f32 %v3385, %v3414
  %v3427 = vadd.f32 %v3388, %v3417
  %v3428 = vadd.f32 %v3390, %v3419
  %3429 = vmatpush.bf16.msra.mxu0 0
  %3430 = vmatpush.bf16.msra.mxu0 0
  %3431 = vmatpush.bf16.msra.mxu0 0
  %3432 = vmatpush.bf16.msra.mxu0 %v3191
  %3433 = vmatpush.bf16.msra.mxu0 %v3181
  %3434 = vmatpush.bf16.msra.mxu0 %v3180
  %3435 = vmatpush.bf16.msra.mxu0 %v3179
  %3436 = vmatpush.bf16.msra.mxu0 %v3178
  %3437 = vmatmul.bf16.gmra.mxu0 %v3023
  %v3438 = vpop.f32.mrf.mxu0
  %v3439 = vadd.f32 0.0, %v3438
  %v3440 = vpop.f32.mrf.mxu0
  %v3441 = vadd.f32 0.0, %v3440
  %3442 = vmatmul.bf16.gmra.mxu0 %v3026
  %v3443 = vpop.f32.mrf.mxu0
  %v3444 = vadd.f32 0.0, %v3443
  %v3445 = vpop.f32.mrf.mxu0
  %v3446 = vadd.f32 0.0, %v3445
  %3447 = vmatmul.bf16.gmra.mxu0 %v3103
  %v3448 = vpop.f32.mrf.mxu0
  %v3449 = vadd.f32 0.0, %v3448
  %v3450 = vpop.f32.mrf.mxu0
  %v3451 = vadd.f32 0.0, %v3450
  %3452 = vmatmul.bf16.gmra.mxu0 %v3273
  %v3453 = vpop.f32.mrf.mxu0
  %v3454 = vadd.f32 0.0, %v3453
  %v3455 = vpop.f32.mrf.mxu0
  %v3456 = vadd.f32 0.0, %v3455
  %3457 = vdwg.mxu0
  %v3458 = vadd.f32 %v3421, %v3439
  %v3459 = vadd.f32 %v3422, %v3441
  %v3460 = vadd.f32 %v3423, %v3444
  %v3461 = vadd.f32 %v3424, %v3446
  %v3462 = vadd.f32 %v3425, %v3449
  %v3463 = vadd.f32 %v3426, %v3451
  %v3464 = vadd.f32 %v3427, %v3454
  %v3465 = vadd.f32 %v3428, %v3456
  %v3468 = vunpack.c.l.b16 %v2854
  %v3469 = vunpack.c.l.b16 %v2855
  %v3470 = vpack.c.b16 %v3469, %v3468
  %v3472 = vsel %vm2923, %v3470, 0
  %3474 = vmatpush.bf16.msra.mxu0 0
  %3475 = vmatpush.bf16.msra.mxu0 0
  %3476 = vmatpush.bf16.msra.mxu0 0
  %3477 = vmatpush.bf16.msra.mxu0 %v3276
  %3478 = vmatpush.bf16.msra.mxu0 %v3266
  %3479 = vmatpush.bf16.msra.mxu0 %v3265
  %3480 = vmatpush.bf16.msra.mxu0 %v3264
  %3481 = vmatpush.bf16.msra.mxu0 %v3263
  %3482 = vmatmul.bf16.gmra.mxu0 %v2931
  %v3483 = vpop.f32.mrf.mxu0
  %v3484 = vadd.f32 0.0, %v3483
  %v3485 = vpop.f32.mrf.mxu0
  %v3486 = vadd.f32 0.0, %v3485
  %3487 = vmatmul.bf16.gmra.mxu0 %v2934
  %v3488 = vpop.f32.mrf.mxu0
  %v3489 = vadd.f32 0.0, %v3488
  %v3490 = vpop.f32.mrf.mxu0
  %v3491 = vadd.f32 0.0, %v3490
  %3492 = vmatmul.bf16.gmra.mxu0 %v3188
  %v3493 = vpop.f32.mrf.mxu0
  %v3494 = vadd.f32 0.0, %v3493
  %v3495 = vpop.f32.mrf.mxu0
  %v3496 = vadd.f32 0.0, %v3495
  %3497 = vmatmul.bf16.gmra.mxu0 %v3472
  %v3498 = vpop.f32.mrf.mxu0
  %v3499 = vadd.f32 0.0, %v3498
  %v3500 = vpop.f32.mrf.mxu0
  %v3501 = vadd.f32 0.0, %v3500
  %3502 = vdwg.mxu0
  %v3503 = vadd.f32 %v3458, %v3484
  %v3504 = vadd.f32 %v3459, %v3486
  %v3505 = vadd.f32 %v3460, %v3489
  %v3506 = vadd.f32 %v3461, %v3491
  %v3507 = vadd.f32 %v3462, %v3494
  %v3508 = vadd.f32 %v3463, %v3496
  %v3509 = vadd.f32 %v3464, %v3499
  %v3510 = vadd.f32 %v3465, %v3501
  %v3511 = vadd.f32 %v3503, %v3316
  %v3512 = vadd.f32 %v3504, %v3316
  %v3513 = vadd.f32 %v3505, %v3316
  %v3514 = vadd.f32 %v3506, %v3316
  %v3515 = vadd.f32 %v3507, %v3316
  %v3516 = vadd.f32 %v3508, %v3316
  %v3517 = vadd.f32 %v3509, %v3316
  %v3518 = vadd.f32 %v3510, %v3316
  %v3519 = vmax.f32 %v3511, 0.0
  %v3520 = vmax.f32 %v3512, 0.0
  %v3521 = vmax.f32 %v3513, 0.0
  %v3522 = vmax.f32 %v3514, 0.0
  %v3523 = vmax.f32 %v3515, 0.0
  %v3524 = vmax.f32 %v3516, 0.0
  %v3525 = vmax.f32 %v3517, 0.0
  %v3526 = vmax.f32 %v3518, 0.0
  %v3527 = vmax.f32 %v3326, %v3519
  %v3528 = vmax.f32 %v3327, %v3520
  %v3529 = vmax.f32 %v3328, %v3521
  %v3530 = vmax.f32 %v3329, %v3522
  %v3531 = vmax.f32 %v3330, %v3523
  %v3532 = vmax.f32 %v3331, %v3524
  %v3533 = vmax.f32 %v3332, %v3525
  %v3534 = vmax.f32 %v3333, %v3526
  %3543 = vrot.lane.b32.xlu0 %v3527, 64
  %v3544 = vpop.permute.xlu0 %3543
  %3545 = vrot.lane.b32.xlu0 %v3528, 64
  %v3546 = vpop.permute.xlu0 %3545
  %3547 = vrot.lane.b32.xlu0 %v3529, 64
  %v3548 = vpop.permute.xlu0 %3547
  %3549 = vrot.lane.b32.xlu0 %v3530, 64
  %v3550 = vpop.permute.xlu0 %3549
  %3551 = vrot.lane.b32.xlu0 %v3531, 64
  %v3552 = vpop.permute.xlu0 %3551
  %3553 = vrot.lane.b32.xlu0 %v3532, 64
  %v3554 = vpop.permute.xlu0 %3553
  %3555 = vrot.lane.b32.xlu0 %v3533, 64
  %v3556 = vpop.permute.xlu0 %3555
  %3557 = vrot.lane.b32.xlu0 %v3534, 64
  %v3558 = vpop.permute.xlu0 %3557
  %v3567 = vmax.f32 %v3527, %v3544
  %v3568 = vmax.f32 %v3528, %v3546
  %v3569 = vmax.f32 %v3529, %v3548
  %v3570 = vmax.f32 %v3530, %v3550
  %v3571 = vmax.f32 %v3531, %v3552
  %v3572 = vmax.f32 %v3532, %v3554
  %v3573 = vmax.f32 %v3533, %v3556
  %v3574 = vmax.f32 %v3534, %v3558
  %v3575 = vpack.c.bf16 %v3567, %v3567
  %v3576 = vpack.c.bf16 %v3568, %v3568
  %v3577 = vpack.c.bf16 %v3569, %v3569
  %v3578 = vpack.c.bf16 %v3570, %v3570
  %v3579 = vpack.c.bf16 %v3571, %v3571
  %v3580 = vpack.c.bf16 %v3572, %v3572
  %v3581 = vpack.c.bf16 %v3573, %v3573
  %v3582 = vpack.c.bf16 %v3574, %v3574
  %v3585 = vunpack.c.l.b16 %v3575
  %v3586 = vunpack.c.l.b16 %v3576
  %v3587 = vpack.c.b16 %v3586, %v3585
  %v3590 = vunpack.c.l.b16 %v3577
  %v3591 = vunpack.c.l.b16 %v3578
  %v3592 = vpack.c.b16 %v3591, %v3590
  %3593 = vrot.lane.b32.xlu0 %v3592, 64
  %v3594 = vpop.permute.xlu0 %3593
  %v3597 = vunpack.c.l.b16 %v3579
  %v3598 = vunpack.c.l.b16 %v3580
  %v3599 = vpack.c.b16 %v3598, %v3597
  %v3602 = vunpack.c.l.b16 %v3581
  %v3603 = vunpack.c.l.b16 %v3582
  %v3604 = vpack.c.b16 %v3603, %v3602
  %3605 = vrot.lane.b32.xlu0 %v3604, 64
  %v3606 = vpop.permute.xlu0 %3605
  %vm3607 = vcmask 523264
  %v3610 = vsel %vm3607, %v3587, %v3594
  %v3614 = vsel %vm3607, %v3599, %v3606
  %v3616 = vld [vmem:[%s5] sm:$0xf]
  %v3617 = vld [vmem:[%s5 + $0x4] sm:$0xf]
  %v3618 = vld [vmem:[%s5 + $0x8] sm:$0xf]
  %v3619 = vld [vmem:[%s5 + $0xc] sm:$0xf]
  %v3620 = vld [vmem:[%s5 + $0x10] sm:$0xf]
  %v3621 = vld [vmem:[%s5 + $0x14] sm:$0xf]
  %v3622 = vld [vmem:[%s5 + $0x18] sm:$0xf]
  %v3623 = vld [vmem:[%s5 + $0x1c] sm:$0xf]
  %v3624 = vld [vmem:[%s5 + $0x20] sm:$0xf]
  %v3625 = vld [vmem:[%s5 + $0x24] sm:$0xf]
  %v3626 = vld [vmem:[%s5 + $0x28] sm:$0xf]
  %v3627 = vld [vmem:[%s5 + $0x2c] sm:$0xf]
  %v3628 = vld [vmem:[%s5 + $0x30] sm:$0xf]
  %v3629 = vld [vmem:[%s5 + $0x34] sm:$0xf]
  %v3630 = vld [vmem:[%s5 + $0x38] sm:$0xf]
  %v3631 = vld [vmem:[%s5 + $0x3c] sm:$0xf]
  %v3632 = vld [vmem:[%s5 + $0x40] sm:$0xf]
  %v3633 = vld [vmem:[%s5 + $0x44] sm:$0xf]
  %v3634 = vld [vmem:[%s5 + $0x48] sm:$0xf]
  %v3635 = vld [vmem:[%s5 + $0x4c] sm:$0xf]
  %v3636 = vld [vmem:[%s5 + $0x50] sm:$0xf]
  %v3637 = vld [vmem:[%s5 + $0x54] sm:$0xf]
  %v3638 = vld [vmem:[%s5 + $0x58] sm:$0xf]
  %v3639 = vld [vmem:[%s5 + $0x5c] sm:$0xf]
  %v3640 = vld [vmem:[%s5 + $0x60] sm:$0xf]
  %v3641 = vld [vmem:[%s5 + $0x64] sm:$0xf]
  %v3642 = vld [vmem:[%s5 + $0x68] sm:$0xf]
  %v3643 = vld [vmem:[%s5 + $0x6c] sm:$0xf]
  %v3644 = vld [vmem:[%s5 + $0x70] sm:$0xf]
  %v3645 = vld [vmem:[%s5 + $0x74] sm:$0xf]
  %v3646 = vld [vmem:[%s5 + $0x78] sm:$0xf]
  %v3647 = vld [vmem:[%s5 + $0x7c] sm:$0xf]
  %v3648 = vld [vmem:[%s6] sm:$0x1]
  %v3650 = vperm.slane %v3648, 0
  %v3684 = vunpack.c.l.b16 %v3616
  %v3685 = vunpack.c.l.b16 %v3617
  %v3686 = vunpack.c.l.b16 %v3618
  %v3687 = vunpack.c.l.b16 %v3619
  %v3688 = vunpack.c.l.b16 %v3620
  %v3689 = vunpack.c.l.b16 %v3621
  %v3690 = vunpack.c.l.b16 %v3622
  %v3691 = vunpack.c.l.b16 %v3623
  %v3692 = vunpack.c.l.b16 %v3624
  %v3693 = vunpack.c.l.b16 %v3625
  %v3694 = vunpack.c.l.b16 %v3626
  %v3695 = vunpack.c.l.b16 %v3627
  %v3696 = vunpack.c.l.b16 %v3628
  %v3697 = vunpack.c.l.b16 %v3629
  %v3698 = vunpack.c.l.b16 %v3630
  %v3699 = vunpack.c.l.b16 %v3631
  %v3700 = vunpack.c.l.b16 %v3632
  %v3701 = vunpack.c.l.b16 %v3633
  %v3702 = vunpack.c.l.b16 %v3634
  %v3703 = vunpack.c.l.b16 %v3635
  %v3704 = vunpack.c.l.b16 %v3636
  %v3705 = vunpack.c.l.b16 %v3637
  %v3706 = vunpack.c.l.b16 %v3638
  %v3707 = vunpack.c.l.b16 %v3639
  %v3708 = vunpack.c.l.b16 %v3640
  %v3709 = vunpack.c.l.b16 %v3641
  %v3710 = vunpack.c.l.b16 %v3642
  %v3711 = vunpack.c.l.b16 %v3643
  %v3712 = vunpack.c.l.b16 %v3644
  %v3713 = vunpack.c.l.b16 %v3645
  %v3714 = vunpack.c.l.b16 %v3646
  %v3715 = vunpack.c.l.b16 %v3647
  %v3716 = vpack.c.b16 %v3685, %v3684
  %v3717 = vpack.c.b16 %v3687, %v3686
  %v3718 = vpack.c.b16 %v3689, %v3688
  %v3719 = vpack.c.b16 %v3691, %v3690
  %v3720 = vpack.c.b16 %v3693, %v3692
  %v3721 = vpack.c.b16 %v3695, %v3694
  %v3722 = vpack.c.b16 %v3697, %v3696
  %v3723 = vpack.c.b16 %v3699, %v3698
  %v3724 = vpack.c.b16 %v3701, %v3700
  %v3725 = vpack.c.b16 %v3703, %v3702
  %v3726 = vpack.c.b16 %v3705, %v3704
  %v3727 = vpack.c.b16 %v3707, %v3706
  %v3728 = vpack.c.b16 %v3709, %v3708
  %v3729 = vpack.c.b16 %v3711, %v3710
  %v3730 = vpack.c.b16 %v3713, %v3712
  %v3731 = vpack.c.b16 %v3715, %v3714
  %3748 = vmatpush.bf16.msra.mxu0 %v3723
  %3749 = vmatpush.bf16.msra.mxu0 %v3722
  %3750 = vmatpush.bf16.msra.mxu0 %v3721
  %3751 = vmatpush.bf16.msra.mxu0 %v3720
  %3752 = vmatpush.bf16.msra.mxu0 %v3719
  %3753 = vmatpush.bf16.msra.mxu0 %v3718
  %3754 = vmatpush.bf16.msra.mxu0 %v3717
  %3755 = vmatpush.bf16.msra.mxu0 %v3716
  %3756 = vmatmul.bf16.gmra.mxu0 %v3610
  %v3757 = vpop.f32.mrf.mxu0
  %v3758 = vadd.f32 %v3650, %v3757
  %v3759 = vpop.f32.mrf.mxu0
  %v3760 = vadd.f32 %v3650, %v3759
  %3761 = vdwg.mxu0
  %3762 = vmatpush.bf16.msra.mxu0 %v3731
  %3763 = vmatpush.bf16.msra.mxu0 %v3730
  %3764 = vmatpush.bf16.msra.mxu0 %v3729
  %3765 = vmatpush.bf16.msra.mxu0 %v3728
  %3766 = vmatpush.bf16.msra.mxu0 %v3727
  %3767 = vmatpush.bf16.msra.mxu0 %v3726
  %3768 = vmatpush.bf16.msra.mxu0 %v3725
  %3769 = vmatpush.bf16.msra.mxu0 %v3724
  %3770 = vmatmul.bf16.gmra.mxu0 %v3614
  %v3771 = vpop.f32.mrf.mxu0
  %v3772 = vadd.f32 %v3758, %v3771
  %v3773 = vpop.f32.mrf.mxu0
  %v3774 = vadd.f32 %v3760, %v3773
  %3775 = vdwg.mxu0
  %v3776 = vmax.f32 %v3772, 0.0
  %v3777 = vmax.f32 %v3774, 0.0
  %v3778 = vpack.c.bf16 %v3777, %v3776
  %v3779 = vld [vmem:[%s7] sm:$0xf]
  %v3780 = vld [vmem:[%s7 + $0x4] sm:$0xf]
  %v3781 = vld [vmem:[%s7 + $0x8] sm:$0xf]
  %v3782 = vld [vmem:[%s7 + $0xc] sm:$0xf]
  %v3783 = vld [vmem:[%s7 + $0x10] sm:$0xf]
  %v3784 = vld [vmem:[%s7 + $0x14] sm:$0xf]
  %v3785 = vld [vmem:[%s7 + $0x18] sm:$0xf]
  %v3786 = vld [vmem:[%s7 + $0x1c] sm:$0xf]
  %v3787 = vld [vmem:[%s7 + $0x20] sm:$0xf]
  %v3788 = vld [vmem:[%s7 + $0x24] sm:$0xf]
  %v3789 = vld [vmem:[%s7 + $0x28] sm:$0xf]
  %v3790 = vld [vmem:[%s7 + $0x2c] sm:$0xf]
  %v3791 = vld [vmem:[%s7 + $0x30] sm:$0xf]
  %v3792 = vld [vmem:[%s7 + $0x34] sm:$0xf]
  %v3793 = vld [vmem:[%s7 + $0x38] sm:$0xf]
  %v3794 = vld [vmem:[%s7 + $0x3c] sm:$0xf]
  %v3795 = vld [vmem:[%s8] sm:$0x1]
  %v3797 = vperm.slane %v3795, 0
  %v3815 = vunpack.c.l.b16 %v3779
  %v3816 = vunpack.c.l.b16 %v3780
  %v3817 = vunpack.c.l.b16 %v3781
  %v3818 = vunpack.c.l.b16 %v3782
  %v3819 = vunpack.c.l.b16 %v3783
  %v3820 = vunpack.c.l.b16 %v3784
  %v3821 = vunpack.c.l.b16 %v3785
  %v3822 = vunpack.c.l.b16 %v3786
  %v3823 = vunpack.c.l.b16 %v3787
  %v3824 = vunpack.c.l.b16 %v3788
  %v3825 = vunpack.c.l.b16 %v3789
  %v3826 = vunpack.c.l.b16 %v3790
  %v3827 = vunpack.c.l.b16 %v3791
  %v3828 = vunpack.c.l.b16 %v3792
  %v3829 = vunpack.c.l.b16 %v3793
  %v3830 = vunpack.c.l.b16 %v3794
  %v3831 = vpack.c.b16 %v3816, %v3815
  %v3832 = vpack.c.b16 %v3818, %v3817
  %v3833 = vpack.c.b16 %v3820, %v3819
  %v3834 = vpack.c.b16 %v3822, %v3821
  %v3835 = vpack.c.b16 %v3824, %v3823
  %v3836 = vpack.c.b16 %v3826, %v3825
  %v3837 = vpack.c.b16 %v3828, %v3827
  %v3838 = vpack.c.b16 %v3830, %v3829
  %3847 = vmatpush.bf16.msra.mxu0 %v3838
  %3848 = vmatpush.bf16.msra.mxu0 %v3837
  %3849 = vmatpush.bf16.msra.mxu0 %v3836
  %3850 = vmatpush.bf16.msra.mxu0 %v3835
  %3851 = vmatpush.bf16.msra.mxu0 %v3834
  %3852 = vmatpush.bf16.msra.mxu0 %v3833
  %3853 = vmatpush.bf16.msra.mxu0 %v3832
  %3854 = vmatpush.bf16.msra.mxu0 %v3831
  %3855 = vmatmul.bf16.gmra.mxu0 %v3778
  %v3856 = vpop.f32.mrf.mxu0
  %v3857 = vadd.f32 %v3797, %v3856
  %v3858 = vpop.f32.mrf.mxu0
  %v3859 = vadd.f32 %v3797, %v3858
  %3860 = vdwg.mxu0
  %v3861 = vmax.f32 %v3857, 0.0
  %v3862 = vmax.f32 %v3859, 0.0
  %v3863 = vpack.c.bf16 %v3862, %v3861
  %v3864 = vld [vmem:[%s9] sm:$0xf]
  %v3865 = vld [vmem:[%s9 + $0x4] sm:$0xf]
  %v3866 = vld [vmem:[%s9 + $0x8] sm:$0xf]
  %v3867 = vld [vmem:[%s9 + $0xc] sm:$0xf]
  %v3868 = vld [vmem:[%s9 + $0x10] sm:$0xf]
  %v3869 = vld [vmem:[%s9 + $0x14] sm:$0xf]
  %v3870 = vld [vmem:[%s9 + $0x18] sm:$0xf]
  %v3871 = vld [vmem:[%s9 + $0x1c] sm:$0xf]
  %v3872 = vld [vmem:[%s9 + $0x20] sm:$0xf]
  %v3873 = vld [vmem:[%s9 + $0x24] sm:$0xf]
  %v3874 = vld [vmem:[%s9 + $0x28] sm:$0xf]
  %v3875 = vld [vmem:[%s9 + $0x2c] sm:$0xf]
  %v3876 = vld [vmem:[%s9 + $0x30] sm:$0xf]
  %v3877 = vld [vmem:[%s9 + $0x34] sm:$0xf]
  %v3878 = vld [vmem:[%s9 + $0x38] sm:$0xf]
  %v3879 = vld [vmem:[%s9 + $0x3c] sm:$0xf]
  %v3880 = vld [vmem:[%s10] sm:$0x1]
  %v3882 = vperm.slane %v3880, 0
  %v3900 = vunpack.c.l.b16 %v3864
  %v3901 = vunpack.c.l.b16 %v3865
  %v3902 = vunpack.c.l.b16 %v3866
  %v3903 = vunpack.c.l.b16 %v3867
  %v3904 = vunpack.c.l.b16 %v3868
  %v3905 = vunpack.c.l.b16 %v3869
  %v3906 = vunpack.c.l.b16 %v3870
  %v3907 = vunpack.c.l.b16 %v3871
  %v3908 = vunpack.c.l.b16 %v3872
  %v3909 = vunpack.c.l.b16 %v3873
  %v3910 = vunpack.c.l.b16 %v3874
  %v3911 = vunpack.c.l.b16 %v3875
  %v3912 = vunpack.c.l.b16 %v3876
  %v3913 = vunpack.c.l.b16 %v3877
  %v3914 = vunpack.c.l.b16 %v3878
  %v3915 = vunpack.c.l.b16 %v3879
  %v3916 = vpack.c.b16 %v3901, %v3900
  %v3917 = vpack.c.b16 %v3903, %v3902
  %v3918 = vpack.c.b16 %v3905, %v3904
  %v3919 = vpack.c.b16 %v3907, %v3906
  %v3920 = vpack.c.b16 %v3909, %v3908
  %v3921 = vpack.c.b16 %v3911, %v3910
  %v3922 = vpack.c.b16 %v3913, %v3912
  %v3923 = vpack.c.b16 %v3915, %v3914
  %3932 = vmatpush.bf16.msra.mxu0 %v3923
  %3933 = vmatpush.bf16.msra.mxu0 %v3922
  %3934 = vmatpush.bf16.msra.mxu0 %v3921
  %3935 = vmatpush.bf16.msra.mxu0 %v3920
  %3936 = vmatpush.bf16.msra.mxu0 %v3919
  %3937 = vmatpush.bf16.msra.mxu0 %v3918
  %3938 = vmatpush.bf16.msra.mxu0 %v3917
  %3939 = vmatpush.bf16.msra.mxu0 %v3916
  %3940 = vmatmul.bf16.gmra.mxu0 %v3863
  %v3941 = vpop.f32.mrf.mxu0
  %v3942 = vadd.f32 %v3882, %v3941
  %v3943 = vpop.f32.mrf.mxu0
  %v3944 = vadd.f32 %v3882, %v3943
  %3945 = vdwg.mxu0
  %3946 = vst [vmem:[%s11] sm:$0xff] %v3942
  %3947 = vst [vmem:[%s11 + $0x8] sm:$0xff] %v3944
  // Predicated region
  $region46: #{convnet_forward.1} parent=0 // pred_check
    _
  $region47: #{convnet_forward.1} parent=0 // pred_check_branch
    %3949 = sbr.rel (0) target = $region49
  $region48: #{convnet_forward.1} parent=0 // pred_region
    _
  $region49: #{convnet_forward.1} parent=0 // pred_fallthru
    _
  // Predicated region
  $region50: #{convnet_forward.1} parent=0 // pred_check
    _
  $region51: #{convnet_forward.1} parent=0 // pred_check_branch
    %3951 = sbr.rel (0) target = $region53
  $region52: #{convnet_forward.1} parent=0 // pred_region
    _
  $region53: #{convnet_forward.1} parent=0 // pred_fallthru
    _

</llo_original>
